<compile_context>
chip_gen: v6e
topology: v6e:2x2x1
jax: 0.10.0
libtpu: 0.0.40
codegen_flags: <defaults>
</compile_context>

<pallas_src>
import functools

import jax
import jax.numpy as jnp
from jax import lax
from jax.experimental import pallas as pl
from jax.experimental.pallas import tpu as pltpu


# ----------------------------------------------------------------------------
# Kernel: one (batch element, layer) per grid step.
# ----------------------------------------------------------------------------
def gat_layer_kernel(lt_ref,                       # SMEM (L,) int32: 0=self, 1=cross
                     d0_ref, d1_ref,               # (1, F, N0), (1, F, N1)  f32
                     wcat_ref,                     # (1, F, H*F + SW) bf16 [heads | att]
                     bgat_ref,                     # (1, 1, F) f32
                     wmlpx_ref, wmlpm_ref,         # (1, F, F) bf16 (in, out)
                     bmlp_ref,                     # (1, 1, F) f32
                     out0_ref, out1_ref,           # (1, F, N0), (1, F, N1) f32
                     xstate,                       # VMEM (N, F)      f32  residual carry
                     hhead_ref,                    # VMEM (H, N, F)   bf16 per-head features
                     srow_ref,                     # VMEM (H, 1, N)   f32  src scores (rows)
                     scol_ref,                     # VMEM (2H, N, 1)  f32  [0:H)=dst col,
                                                   #                      [H:2H)=self-logit col
                     acc_ref,                      # VMEM (N, F)      f32  head-sum accumulator
                     *, num_heads, n0, n1):
    H = num_heads
    N = n0 + n1
    F = d0_ref.shape[1]
    HF = H * F
    l = pl.program_id(1)

    def _leaky(v):
        return jnp.where(v > 0, v, 0.2 * v)

    # --- first layer: build the residual stream from the (B, F, N) inputs ----
    @pl.when(l == 0)
    def _():
        xstate[:n0, :] = jnp.transpose(d0_ref[0], (1, 0)).astype(jnp.float32)
        xstate[n0:, :] = jnp.transpose(d1_ref[0], (1, 0)).astype(jnp.float32)

    x = xstate[...]                                   # (N, F) f32
    x_bf = x.astype(jnp.bfloat16)

    # --- ONE fused MXU matmul: all per-head features + attention scores ------
    hcat = jnp.dot(x_bf, wcat_ref[0], preferred_element_type=jnp.float32)  # (N, HF+SW)
    scores = hcat[:, HF:HF + 2 * H]                   # (N, 2H) f32: [:H]=src, [H:]=dst
    st = jnp.transpose(scores, (1, 0))                # (2H, N) — one tiny transpose/layer

    # distribute into per-head scratch views (static slices, cast once to bf16)
    for hh in range(H):
        hhead_ref[hh] = hcat[:, hh * F:(hh + 1) * F].astype(jnp.bfloat16)
        srow_ref[hh] = st[hh:hh + 1, :]               # src score, row form (1, N)
        dcol = scores[:, H + hh:H + hh + 1]           # dst score, column form (N, 1)
        scol_ref[hh] = dcol
        scol_ref[H + hh] = scores[:, hh:hh + 1] + dcol   # self-loop logit column

    is_self = lt_ref[l] == 0

    # --- "self" layers: block-diagonal attention (two independent softmaxes) --
    @pl.when(is_self)
    def _():
        def body(hh, carry):
            a0, a1 = carry
            h_h = hhead_ref[hh]                       # (N, F) bf16
            src = srow_ref[hh]                        # (1, N)
            dst = scol_ref[hh]                        # (N, 1)
            # group-0 block (includes diagonal self loop)
            e0 = _leaky(src[:, :n0] + dst[:n0])
            e0 = e0 - jnp.max(e0, axis=1, keepdims=True)
            p0 = jnp.exp(e0)
            inv0 = pl.reciprocal(jnp.sum(p0, axis=1, keepdims=True), approx=False)
            a0 = a0 + jnp.dot(p0.astype(jnp.bfloat16), h_h[:n0],
                              preferred_element_type=jnp.float32) * inv0
            # group-1 block
            e1 = _leaky(src[:, n0:] + dst[n0:])
            e1 = e1 - jnp.max(e1, axis=1, keepdims=True)
            p1 = jnp.exp(e1)
            inv1 = pl.reciprocal(jnp.sum(p1, axis=1, keepdims=True), approx=False)
            a1 = a1 + jnp.dot(p1.astype(jnp.bfloat16), h_h[n0:],
                              preferred_element_type=jnp.float32) * inv1
            return a0, a1

        a0, a1 = lax.fori_loop(0, H, body,
                               (jnp.zeros((n0, F), jnp.float32),
                                jnp.zeros((n1, F), jnp.float32)),
                               unroll=True)
        acc_ref[:n0] = a0
        acc_ref[n0:] = a1

    # --- "cross" layers: off-diagonal blocks + self-loop handled online -------
    @pl.when(jnp.logical_not(is_self))
    def _():
        def body(hh, carry):
            a0, a1 = carry
            h_h = hhead_ref[hh]                       # (N, F) bf16
            src = srow_ref[hh]                        # (1, N)
            dst = scol_ref[hh]                        # (N, 1)
            eself = _leaky(scol_ref[H + hh])          # (N, 1) self-loop logit
            # group-0 queries -> group-1 keys (+ own self loop)
            e01 = _leaky(src[:, n0:] + dst[:n0])      # (n0, n1)
            es0 = eself[:n0]                          # (n0, 1)
            m0 = jnp.maximum(jnp.max(e01, axis=1, keepdims=True), es0)
            p01 = jnp.exp(e01 - m0)
            ps0 = jnp.exp(es0 - m0)
            inv0 = pl.reciprocal(jnp.sum(p01, axis=1, keepdims=True) + ps0,
                                 approx=False)
            o0 = (jnp.dot(p01.astype(jnp.bfloat16), h_h[n0:],
                          preferred_element_type=jnp.float32)
                  + ps0 * h_h[:n0])
            a0 = a0 + o0 * inv0
            # group-1 queries -> group-0 keys (+ own self loop)
            e10 = _leaky(src[:, :n0] + dst[n0:])      # (n1, n0)
            es1 = eself[n0:]                          # (n1, 1)
            m1 = jnp.maximum(jnp.max(e10, axis=1, keepdims=True), es1)
            p10 = jnp.exp(e10 - m1)
            ps1 = jnp.exp(es1 - m1)
            inv1 = pl.reciprocal(jnp.sum(p10, axis=1, keepdims=True) + ps1,
                                 approx=False)
            o1 = (jnp.dot(p10.astype(jnp.bfloat16), h_h[:n0],
                          preferred_element_type=jnp.float32)
                  + ps1 * h_h[n0:])
            a1 = a1 + o1 * inv1
            return a0, a1

        a0, a1 = lax.fori_loop(0, H, body,
                               (jnp.zeros((n0, F), jnp.float32),
                                jnp.zeros((n1, F), jnp.float32)),
                               unroll=True)
        acc_ref[:n0] = a0
        acc_ref[n0:] = a1

    # --- head mean + GAT bias + relu, then MLP([2F, F]) and residual ----------
    msg1 = jnp.maximum(acc_ref[...] * (1.0 / H) + bgat_ref[0], 0.0)
    msg2 = (jnp.dot(x_bf, wmlpx_ref[0], preferred_element_type=jnp.float32)
            + jnp.dot(msg1.astype(jnp.bfloat16), wmlpm_ref[0],
                      preferred_element_type=jnp.float32)
            + bmlp_ref[0])
    x_new = x + msg2
    xstate[...] = x_new

    # --- last layer: emit outputs directly in (B, F, N0) / (B, F, N1) ---------
    @pl.when(l == pl.num_programs(1) - 1)
    def _():
        out0_ref[0] = jnp.transpose(x_new[:n0, :], (1, 0)).astype(out0_ref.dtype)
        out1_ref[0] = jnp.transpose(x_new[n0:, :], (1, 0)).astype(out1_ref.dtype)


# ----------------------------------------------------------------------------
# Wrapper
# ----------------------------------------------------------------------------
def my_whole_gat(desc0, desc1, params, layer_names, num_heads):
    B, F, N0 = desc0.shape
    N1 = desc1.shape[2]
    N = N0 + N1
    L = len(layer_names)
    H = num_heads
    HF = H * F
    SW = ((2 * H + 127) // 128) * 128                 # score lanes padded to 128

    desc0 = desc0.astype(jnp.float32)
    desc1 = desc1.astype(jnp.float32)

    # Host-side weight massaging (done once): fold attention vectors through W,
    # concatenate all head weights + score projection into one lane-dense matrix.
    Wr = params["W_lin"].reshape(L, H, F, F)                          # (l, h, out, in)
    W_heads = jnp.transpose(Wr, (0, 3, 1, 2)).reshape(L, F, HF)       # (l, in, h*out)
    proj_src = jnp.einsum("lhoi,lho->lih", Wr, params["att_src"])     # (L, F, H)
    proj_dst = jnp.einsum("lhoi,lho->lih", Wr, params["att_dst"])     # (L, F, H)
    att_proj = jnp.concatenate([proj_src, proj_dst], axis=-1)         # (L, F, 2H)
    att_proj = jnp.pad(att_proj, ((0, 0), (0, 0), (0, SW - 2 * H)))   # pad to 128 lanes
    W_cat = jnp.concatenate([W_heads, att_proj], axis=-1).astype(jnp.bfloat16)

    W_mlp_x = jnp.swapaxes(params["W_mlp"][:, :, :F], -1, -2).astype(jnp.bfloat16)
    W_mlp_m = jnp.swapaxes(params["W_mlp"][:, :, F:], -1, -2).astype(jnp.bfloat16)
    b_gat = params["b_gat"].reshape(L, 1, F).astype(jnp.float32)
    b_mlp = params["b_mlp"].reshape(L, 1, F).astype(jnp.float32)

    layer_types = jnp.asarray([0 if name == "self" else 1 for name in layer_names],
                              dtype=jnp.int32)

    # --- VMEM budget (scratches + double-buffered blocks + in-flight temps) ---
    f32b, bf16b = 4, 2
    nmax = max(N0, N1)
    blocks = 2 * (F * (HF + SW) * bf16b + 2 * F * F * bf16b + 2 * F * f32b
                  + 2 * (F * N0 + F * N1) * f32b)
    scratch = (2 * N * F * f32b + H * N * F * bf16b
               + H * 8 * N * f32b + 2 * H * N * 128 * f32b)
    temps = N * (HF + SW) * f32b + 4 * nmax * nmax * f32b + 6 * N * F * f32b
    need = blocks + scratch + temps
    try:
        kind = jax.devices()[0].device_kind.lower()
    except Exception:
        kind = ""
    cap = (48 << 20) if ("v7" in kind or "7x" in kind) else (100 << 20)
    vmem_limit = int(min(max(2 * need, 32 << 20), cap))

    kern = functools.partial(gat_layer_kernel, num_heads=H, n0=N0, n1=N1)

    out0, out1 = pl.pallas_call(
        kern,
        out_shape=(jax.ShapeDtypeStruct((B, F, N0), jnp.float32),
                   jax.ShapeDtypeStruct((B, F, N1), jnp.float32)),
        grid_spec=pltpu.PrefetchScalarGridSpec(
            num_scalar_prefetch=1,                       # layer_types -> SMEM
            grid=(B, L),                                 # batch parallel, layers carried
            in_specs=[
                pl.BlockSpec((1, F, N0), lambda b, l, lt: (b, 0, 0)),        # desc0
                pl.BlockSpec((1, F, N1), lambda b, l, lt: (b, 0, 0)),        # desc1
                pl.BlockSpec((1, F, HF + SW), lambda b, l, lt: (l, 0, 0)),   # fused W_cat
                pl.BlockSpec((1, 1, F), lambda b, l, lt: (l, 0, 0)),         # gat bias
                pl.BlockSpec((1, F, F), lambda b, l, lt: (l, 0, 0)),         # W_mlp (x half)
                pl.BlockSpec((1, F, F), lambda b, l, lt: (l, 0, 0)),         # W_mlp (msg half)
                pl.BlockSpec((1, 1, F), lambda b, l, lt: (l, 0, 0)),         # mlp bias
            ],
            out_specs=[
                pl.BlockSpec((1, F, N0), lambda b, l, lt: (b, 0, 0)),
                pl.BlockSpec((1, F, N1), lambda b, l, lt: (b, 0, 0)),
            ],
            scratch_shapes=[
                pltpu.VMEM((N, F), jnp.float32),            # residual carry
                pltpu.VMEM((H, N, F), jnp.bfloat16),        # per-head features
                pltpu.VMEM((H, 1, N), jnp.float32),         # src scores (row form)
                pltpu.VMEM((2 * H, N, 1), jnp.float32),     # dst / self-logit columns
                pltpu.VMEM((N, F), jnp.float32),            # head-sum accumulator
            ],
        ),
        compiler_params=pltpu.CompilerParams(
            dimension_semantics=("parallel", "arbitrary"),
            vmem_limit_bytes=vmem_limit),
    )(layer_types, desc0, desc1, W_cat, b_gat, W_mlp_x, W_mlp_m, b_mlp)

    return out0, out1


# ----------------------------------------------------------------------------
# Pure-JAX f32 reference (same math) for the correctness check.
# ----------------------------------------------------------------------------
def ref_forward(desc0, desc1, params, layer_names, num_heads):
    B, F, n0 = desc0.shape
    n1 = desc1.shape[2]
    N = n0 + n1
    H = num_heads
    x = jnp.transpose(jnp.concatenate([desc0, desc1], axis=2), (0, 2, 1)).astype(jnp.float32)
    group = jnp.concatenate([jnp.zeros((n0,), bool), jnp.ones((n1,), bool)])
    same = group[:, None] == group[None, :]
    eye = jnp.eye(N, dtype=bool)
    for l, name in enumerate(layer_names):
        mask = same if name == "self" else jnp.logical_or(jnp.logical_not(same), eye)
        W = params["W_lin"][l]                                            # (H*F, F)
        h = jnp.einsum("bnf,of->bno", x, W).reshape(B, N, H, F)
        a_s = jnp.einsum("bnhf,hf->bnh", h, params["att_src"][l])
        a_d = jnp.einsum("bnhf,hf->bnh", h, params["att_dst"][l])
        e = a_s[:, None, :, :] + a_d[:, :, None, :]                       # (B, i, j, h)
        e = jnp.where(e > 0, e, 0.2 * e)
        e = jnp.where(mask[None, :, :, None], e, -jnp.inf)
        p = jax.nn.softmax(e, axis=2)
        out = jnp.einsum("bijh,bjhf->bihf", p, h)
        msg1 = jnp.maximum(out.mean(axis=2) + params["b_gat"][l], 0.0)
        Wm = params["W_mlp"][l]                                           # (F, 2F)
        msg2 = (jnp.einsum("bnf,of->bno", x, Wm[:, :F])
                + jnp.einsum("bnf,of->bno", msg1, Wm[:, F:])
                + params["b_mlp"][l])
        x = x + msg2
    out = jnp.transpose(x, (0, 2, 1))
    return out[:, :, :n0], out[:, :, n0:]


# ----------------------------------------------------------------------------
if __name__ == "__main__":
    B, F, N0, N1 = 2, 32, 8, 8
    H = 4
    layer_names = ["self", "cross", "self", "cross"]
    L = len(layer_names)

    key = jax.random.PRNGKey(0)
    ks = jax.random.split(key, 8)

    # Deterministic synthetic parameters (shapes per GATConv / pyg MLP).
    params = {
        "W_lin":   jax.random.normal(ks[0], (L, H * F, F), jnp.float32) / jnp.sqrt(F),
        "att_src": jax.random.normal(ks[1], (L, H, F), jnp.float32) * 0.1,
        "att_dst": jax.random.normal(ks[2], (L, H, F), jnp.float32) * 0.1,
        "b_gat":   jax.random.normal(ks[3], (L, F), jnp.float32) * 0.05,
        "W_mlp":   jax.random.normal(ks[4], (L, F, 2 * F), jnp.float32) / jnp.sqrt(2 * F),
        "b_mlp":   jax.random.normal(ks[5], (L, F), jnp.float32) * 0.05,
    }

    desc0 = jax.random.normal(ks[6], (B, F, N0), jnp.float32)
    desc1 = jax.random.normal(ks[7], (B, F, N1), jnp.float32)

    out0, out1 = my_whole_gat(desc0, desc1, params, layer_names, H)
    jax.block_until_ready((out0, out1))

    # Correctness check vs. f32 reference (bf16 MXU inputs -> looser tolerance).
    ref0, ref1 = ref_forward(desc0, desc1, params, layer_names, H)
    assert jnp.allclose(out0, ref0, atol=5e-2, rtol=5e-2), float(jnp.max(jnp.abs(out0 - ref0)))
    assert jnp.allclose(out1, ref1, atol=5e-2, rtol=5e-2), float(jnp.max(jnp.abs(out1 - ref1)))

    print("KERNEL_OK")
</pallas_src>

<mosaic_0001>
module attributes {stable_mosaic.version = 11 : i64} {
  func.func @gat_layer_kernel(%arg0: i32, %arg1: i32, %arg2: memref<4xi32, #tpu.memory_space<smem>>, %arg3: memref<1x32x8xf32, #tpu.memory_space<vmem>>, %arg4: memref<1x32x8xf32, #tpu.memory_space<vmem>>, %arg5: memref<1x32x256xbf16, #tpu.memory_space<vmem>>, %arg6: memref<1x1x32xf32, #tpu.memory_space<vmem>>, %arg7: memref<1x32x32xbf16, #tpu.memory_space<vmem>>, %arg8: memref<1x32x32xbf16, #tpu.memory_space<vmem>>, %arg9: memref<1x1x32xf32, #tpu.memory_space<vmem>>, %arg10: memref<1x32x8xf32, #tpu.memory_space<vmem>>, %arg11: memref<1x32x8xf32, #tpu.memory_space<vmem>>, %arg12: memref<16x32xf32, #tpu.memory_space<vmem>>, %arg13: memref<4x16x32xbf16, #tpu.memory_space<vmem>>, %arg14: memref<4x1x16xf32, #tpu.memory_space<vmem>>, %arg15: memref<8x16x1xf32, #tpu.memory_space<vmem>>, %arg16: memref<16x32xf32, #tpu.memory_space<vmem>>) attributes {dimension_semantics = [#tpu.dimension_semantics<parallel>, #tpu.dimension_semantics<arbitrary>], iteration_bounds = array<i64: 2, 4>, scalar_prefetch = 1 : i64, scratch_operands = 5 : i64, tpu.core_type = #tpu.core_type<tc>, window_params = [{transform_indices = @transform_0, window_bounds = array<i64: 1, 32, 8>}, {transform_indices = @transform_1, window_bounds = array<i64: 1, 32, 8>}, {transform_indices = @transform_2, window_bounds = array<i64: 1, 32, 256>}, {transform_indices = @transform_3, window_bounds = array<i64: 1, 1, 32>}, {transform_indices = @transform_4, window_bounds = array<i64: 1, 32, 32>}, {transform_indices = @transform_5, window_bounds = array<i64: 1, 32, 32>}, {transform_indices = @transform_6, window_bounds = array<i64: 1, 1, 32>}, {transform_indices = @transform_7, window_bounds = array<i64: 1, 32, 8>}, {transform_indices = @transform_8, window_bounds = array<i64: 1, 32, 8>}]} {
    %c0_i32 = arith.constant 0 : i32
    %0 = arith.cmpi eq, %arg1, %c0_i32 : i32
    %1 = arith.extui %0 : i1 to i32
    %c0_i32_0 = arith.constant 0 : i32
    %2 = arith.cmpi ne, %1, %c0_i32_0 : i32
    scf.if %2 {
      %c0_70 = arith.constant 0 : index
      %c0_71 = arith.constant 0 : index
      %c0_72 = arith.constant 0 : index
      %116 = vector.load %arg3[%c0_70, %c0_71, %c0_72] : memref<1x32x8xf32, #tpu.memory_space<vmem>>, vector<1x32x8xf32>
      %117 = vector.shape_cast %116 : vector<1x32x8xf32> to vector<32x8xf32>
      %118 = tpu.transpose %117, [1, 0] : vector<32x8xf32> -> vector<8x32xf32>
      %c0_73 = arith.constant 0 : index
      %c0_74 = arith.constant 0 : index
      %119 = vector.load %arg12[%c0_73, %c0_74] : memref<16x32xf32, #tpu.memory_space<vmem>>, vector<8x32xf32>
      tpu.vector_store %arg12[%c0_73, %c0_74], %118 {strides = array<i32>} : memref<16x32xf32, #tpu.memory_space<vmem>>, vector<8x32xf32>,
      %c0_75 = arith.constant 0 : index
      %c0_76 = arith.constant 0 : index
      %c0_77 = arith.constant 0 : index
      %120 = vector.load %arg4[%c0_75, %c0_76, %c0_77] : memref<1x32x8xf32, #tpu.memory_space<vmem>>, vector<1x32x8xf32>
      %121 = vector.shape_cast %120 : vector<1x32x8xf32> to vector<32x8xf32>
      %122 = tpu.transpose %121, [1, 0] : vector<32x8xf32> -> vector<8x32xf32>
      %c8 = arith.constant 8 : index
      %c0_78 = arith.constant 0 : index
      %123 = vector.load %arg12[%c8, %c0_78] : memref<16x32xf32, #tpu.memory_space<vmem>>, vector<8x32xf32>
      tpu.vector_store %arg12[%c8, %c0_78], %122 {strides = array<i32>} : memref<16x32xf32, #tpu.memory_space<vmem>>, vector<8x32xf32>,
    } else {
    }
    %c0 = arith.constant 0 : index
    %c0_1 = arith.constant 0 : index
    %3 = vector.load %arg12[%c0, %c0_1] : memref<16x32xf32, #tpu.memory_space<vmem>>, vector<16x32xf32>
    %4 = arith.truncf %3 : vector<16x32xf32> to vector<16x32xbf16>
    %c0_2 = arith.constant 0 : index
    %c0_3 = arith.constant 0 : index
    %c0_4 = arith.constant 0 : index
    %5 = vector.load %arg5[%c0_2, %c0_3, %c0_4] : memref<1x32x256xbf16, #tpu.memory_space<vmem>>, vector<1x32x256xbf16>
    %6 = vector.shape_cast %5 : vector<1x32x256xbf16> to vector<32x256xbf16>
    %cst = arith.constant dense<0.000000e+00> : vector<16x256xf32>
    %7 = tpu.matmul %4, %6, %cst {dimension_numbers = #tpu.dot_dimension_numbers<[1], [0], [0], [1], [0, 0, 1, 1], [], []>} : vector<16x32xbf16>, vector<32x256xbf16>, vector<16x256xf32> -> vector<16x256xf32>
    %8 = vector.extract_strided_slice %7 {offsets = [0, 128], sizes = [16, 8], strides = [1, 1]} : vector<16x256xf32> to vector<16x8xf32>
    %9 = tpu.transpose %8, [1, 0] : vector<16x8xf32> -> vector<8x16xf32>
    %10 = vector.extract_strided_slice %7 {offsets = [0, 0], sizes = [16, 32], strides = [1, 1]} : vector<16x256xf32> to vector<16x32xf32>
    %11 = arith.truncf %10 : vector<16x32xf32> to vector<16x32xbf16>
    %c0_5 = arith.constant 0 : index
    %c0_6 = arith.constant 0 : index
    %c0_7 = arith.constant 0 : index
    %12 = vector.load %arg13[%c0_5, %c0_6, %c0_7] : memref<4x16x32xbf16, #tpu.memory_space<vmem>>, vector<1x16x32xbf16>
    %13 = vector.shape_cast %12 : vector<1x16x32xbf16> to vector<16x32xbf16>
    %14 = vector.shape_cast %11 : vector<16x32xbf16> to vector<1x16x32xbf16>
    tpu.vector_store %arg13[%c0_5, %c0_6, %c0_7], %14 {strides = array<i32>} : memref<4x16x32xbf16, #tpu.memory_space<vmem>>, vector<1x16x32xbf16>,
    %15 = vector.extract_strided_slice %9 {offsets = [0, 0], sizes = [1, 16], strides = [1, 1]} : vector<8x16xf32> to vector<1x16xf32>
    %c0_8 = arith.constant 0 : index
    %c0_9 = arith.constant 0 : index
    %c0_10 = arith.constant 0 : index
    %16 = vector.load %arg14[%c0_8, %c0_9, %c0_10] : memref<4x1x16xf32, #tpu.memory_space<vmem>>, vector<1x1x16xf32>
    %17 = vector.shape_cast %16 : vector<1x1x16xf32> to vector<1x16xf32>
    %18 = vector.shape_cast %15 : vector<1x16xf32> to vector<1x1x16xf32>
    tpu.vector_store %arg14[%c0_8, %c0_9, %c0_10], %18 {strides = array<i32>} : memref<4x1x16xf32, #tpu.memory_space<vmem>>, vector<1x1x16xf32>,
    %19 = vector.extract_strided_slice %8 {offsets = [0, 4], sizes = [16, 1], strides = [1, 1]} : vector<16x8xf32> to vector<16x1xf32>
    %c0_11 = arith.constant 0 : index
    %c0_12 = arith.constant 0 : index
    %c0_13 = arith.constant 0 : index
    %20 = vector.load %arg15[%c0_11, %c0_12, %c0_13] : memref<8x16x1xf32, #tpu.memory_space<vmem>>, vector<1x16x1xf32>
    %21 = vector.shape_cast %20 : vector<1x16x1xf32> to vector<16x1xf32>
    %22 = vector.shape_cast %19 : vector<16x1xf32> to vector<1x16x1xf32>
    tpu.vector_store %arg15[%c0_11, %c0_12, %c0_13], %22 {strides = array<i32>} : memref<8x16x1xf32, #tpu.memory_space<vmem>>, vector<1x16x1xf32>,
    %23 = vector.extract_strided_slice %8 {offsets = [0, 0], sizes = [16, 1], strides = [1, 1]} : vector<16x8xf32> to vector<16x1xf32>
    %24 = arith.addf %23, %19 : vector<16x1xf32>
    %c4 = arith.constant 4 : index
    %c0_14 = arith.constant 0 : index
    %c0_15 = arith.constant 0 : index
    %25 = vector.load %arg15[%c4, %c0_14, %c0_15] : memref<8x16x1xf32, #tpu.memory_space<vmem>>, vector<1x16x1xf32>
    %26 = vector.shape_cast %25 : vector<1x16x1xf32> to vector<16x1xf32>
    %27 = vector.shape_cast %24 : vector<16x1xf32> to vector<1x16x1xf32>
    tpu.vector_store %arg15[%c4, %c0_14, %c0_15], %27 {strides = array<i32>} : memref<8x16x1xf32, #tpu.memory_space<vmem>>, vector<1x16x1xf32>,
    %28 = vector.extract_strided_slice %7 {offsets = [0, 32], sizes = [16, 32], strides = [1, 1]} : vector<16x256xf32> to vector<16x32xf32>
    %29 = arith.truncf %28 : vector<16x32xf32> to vector<16x32xbf16>
    %c1 = arith.constant 1 : index
    %c0_16 = arith.constant 0 : index
    %c0_17 = arith.constant 0 : index
    %30 = vector.load %arg13[%c1, %c0_16, %c0_17] : memref<4x16x32xbf16, #tpu.memory_space<vmem>>, vector<1x16x32xbf16>
    %31 = vector.shape_cast %30 : vector<1x16x32xbf16> to vector<16x32xbf16>
    %32 = vector.shape_cast %29 : vector<16x32xbf16> to vector<1x16x32xbf16>
    tpu.vector_store %arg13[%c1, %c0_16, %c0_17], %32 {strides = array<i32>} : memref<4x16x32xbf16, #tpu.memory_space<vmem>>, vector<1x16x32xbf16>,
    %33 = vector.extract_strided_slice %9 {offsets = [1, 0], sizes = [1, 16], strides = [1, 1]} : vector<8x16xf32> to vector<1x16xf32>
    %c1_18 = arith.constant 1 : index
    %c0_19 = arith.constant 0 : index
    %c0_20 = arith.constant 0 : index
    %34 = vector.load %arg14[%c1_18, %c0_19, %c0_20] : memref<4x1x16xf32, #tpu.memory_space<vmem>>, vector<1x1x16xf32>
    %35 = vector.shape_cast %34 : vector<1x1x16xf32> to vector<1x16xf32>
    %36 = vector.shape_cast %33 : vector<1x16xf32> to vector<1x1x16xf32>
    tpu.vector_store %arg14[%c1_18, %c0_19, %c0_20], %36 {strides = array<i32>} : memref<4x1x16xf32, #tpu.memory_space<vmem>>, vector<1x1x16xf32>,
    %37 = vector.extract_strided_slice %8 {offsets = [0, 5], sizes = [16, 1], strides = [1, 1]} : vector<16x8xf32> to vector<16x1xf32>
    %c1_21 = arith.constant 1 : index
    %c0_22 = arith.constant 0 : index
    %c0_23 = arith.constant 0 : index
    %38 = vector.load %arg15[%c1_21, %c0_22, %c0_23] : memref<8x16x1xf32, #tpu.memory_space<vmem>>, vector<1x16x1xf32>
    %39 = vector.shape_cast %38 : vector<1x16x1xf32> to vector<16x1xf32>
    %40 = vector.shape_cast %37 : vector<16x1xf32> to vector<1x16x1xf32>
    tpu.vector_store %arg15[%c1_21, %c0_22, %c0_23], %40 {strides = array<i32>} : memref<8x16x1xf32, #tpu.memory_space<vmem>>, vector<1x16x1xf32>,
    %41 = vector.extract_strided_slice %8 {offsets = [0, 1], sizes = [16, 1], strides = [1, 1]} : vector<16x8xf32> to vector<16x1xf32>
    %42 = arith.addf %41, %37 : vector<16x1xf32>
    %c5 = arith.constant 5 : index
    %c0_24 = arith.constant 0 : index
    %c0_25 = arith.constant 0 : index
    %43 = vector.load %arg15[%c5, %c0_24, %c0_25] : memref<8x16x1xf32, #tpu.memory_space<vmem>>, vector<1x16x1xf32>
    %44 = vector.shape_cast %43 : vector<1x16x1xf32> to vector<16x1xf32>
    %45 = vector.shape_cast %42 : vector<16x1xf32> to vector<1x16x1xf32>
    tpu.vector_store %arg15[%c5, %c0_24, %c0_25], %45 {strides = array<i32>} : memref<8x16x1xf32, #tpu.memory_space<vmem>>, vector<1x16x1xf32>,
    %46 = vector.extract_strided_slice %7 {offsets = [0, 64], sizes = [16, 32], strides = [1, 1]} : vector<16x256xf32> to vector<16x32xf32>
    %47 = arith.truncf %46 : vector<16x32xf32> to vector<16x32xbf16>
    %c2 = arith.constant 2 : index
    %c0_26 = arith.constant 0 : index
    %c0_27 = arith.constant 0 : index
    %48 = vector.load %arg13[%c2, %c0_26, %c0_27] : memref<4x16x32xbf16, #tpu.memory_space<vmem>>, vector<1x16x32xbf16>
    %49 = vector.shape_cast %48 : vector<1x16x32xbf16> to vector<16x32xbf16>
    %50 = vector.shape_cast %47 : vector<16x32xbf16> to vector<1x16x32xbf16>
    tpu.vector_store %arg13[%c2, %c0_26, %c0_27], %50 {strides = array<i32>} : memref<4x16x32xbf16, #tpu.memory_space<vmem>>, vector<1x16x32xbf16>,
    %51 = vector.extract_strided_slice %9 {offsets = [2, 0], sizes = [1, 16], strides = [1, 1]} : vector<8x16xf32> to vector<1x16xf32>
    %c2_28 = arith.constant 2 : index
    %c0_29 = arith.constant 0 : index
    %c0_30 = arith.constant 0 : index
    %52 = vector.load %arg14[%c2_28, %c0_29, %c0_30] : memref<4x1x16xf32, #tpu.memory_space<vmem>>, vector<1x1x16xf32>
    %53 = vector.shape_cast %52 : vector<1x1x16xf32> to vector<1x16xf32>
    %54 = vector.shape_cast %51 : vector<1x16xf32> to vector<1x1x16xf32>
    tpu.vector_store %arg14[%c2_28, %c0_29, %c0_30], %54 {strides = array<i32>} : memref<4x1x16xf32, #tpu.memory_space<vmem>>, vector<1x1x16xf32>,
    %55 = vector.extract_strided_slice %8 {offsets = [0, 6], sizes = [16, 1], strides = [1, 1]} : vector<16x8xf32> to vector<16x1xf32>
    %c2_31 = arith.constant 2 : index
    %c0_32 = arith.constant 0 : index
    %c0_33 = arith.constant 0 : index
    %56 = vector.load %arg15[%c2_31, %c0_32, %c0_33] : memref<8x16x1xf32, #tpu.memory_space<vmem>>, vector<1x16x1xf32>
    %57 = vector.shape_cast %56 : vector<1x16x1xf32> to vector<16x1xf32>
    %58 = vector.shape_cast %55 : vector<16x1xf32> to vector<1x16x1xf32>
    tpu.vector_store %arg15[%c2_31, %c0_32, %c0_33], %58 {strides = array<i32>} : memref<8x16x1xf32, #tpu.memory_space<vmem>>, vector<1x16x1xf32>,
    %59 = vector.extract_strided_slice %8 {offsets = [0, 2], sizes = [16, 1], strides = [1, 1]} : vector<16x8xf32> to vector<16x1xf32>
    %60 = arith.addf %59, %55 : vector<16x1xf32>
    %c6 = arith.constant 6 : index
    %c0_34 = arith.constant 0 : index
    %c0_35 = arith.constant 0 : index
    %61 = vector.load %arg15[%c6, %c0_34, %c0_35] : memref<8x16x1xf32, #tpu.memory_space<vmem>>, vector<1x16x1xf32>
    %62 = vector.shape_cast %61 : vector<1x16x1xf32> to vector<16x1xf32>
    %63 = vector.shape_cast %60 : vector<16x1xf32> to vector<1x16x1xf32>
    tpu.vector_store %arg15[%c6, %c0_34, %c0_35], %63 {strides = array<i32>} : memref<8x16x1xf32, #tpu.memory_space<vmem>>, vector<1x16x1xf32>,
    %64 = vector.extract_strided_slice %7 {offsets = [0, 96], sizes = [16, 32], strides = [1, 1]} : vector<16x256xf32> to vector<16x32xf32>
    %65 = arith.truncf %64 : vector<16x32xf32> to vector<16x32xbf16>
    %c3 = arith.constant 3 : index
    %c0_36 = arith.constant 0 : index
    %c0_37 = arith.constant 0 : index
    %66 = vector.load %arg13[%c3, %c0_36, %c0_37] : memref<4x16x32xbf16, #tpu.memory_space<vmem>>, vector<1x16x32xbf16>
    %67 = vector.shape_cast %66 : vector<1x16x32xbf16> to vector<16x32xbf16>
    %68 = vector.shape_cast %65 : vector<16x32xbf16> to vector<1x16x32xbf16>
    tpu.vector_store %arg13[%c3, %c0_36, %c0_37], %68 {strides = array<i32>} : memref<4x16x32xbf16, #tpu.memory_space<vmem>>, vector<1x16x32xbf16>,
    %69 = vector.extract_strided_slice %9 {offsets = [3, 0], sizes = [1, 16], strides = [1, 1]} : vector<8x16xf32> to vector<1x16xf32>
    %c3_38 = arith.constant 3 : index
    %c0_39 = arith.constant 0 : index
    %c0_40 = arith.constant 0 : index
    %70 = vector.load %arg14[%c3_38, %c0_39, %c0_40] : memref<4x1x16xf32, #tpu.memory_space<vmem>>, vector<1x1x16xf32>
    %71 = vector.shape_cast %70 : vector<1x1x16xf32> to vector<1x16xf32>
    %72 = vector.shape_cast %69 : vector<1x16xf32> to vector<1x1x16xf32>
    tpu.vector_store %arg14[%c3_38, %c0_39, %c0_40], %72 {strides = array<i32>} : memref<4x1x16xf32, #tpu.memory_space<vmem>>, vector<1x1x16xf32>,
    %73 = vector.extract_strided_slice %8 {offsets = [0, 7], sizes = [16, 1], strides = [1, 1]} : vector<16x8xf32> to vector<16x1xf32>
    %c3_41 = arith.constant 3 : index
    %c0_42 = arith.constant 0 : index
    %c0_43 = arith.constant 0 : index
    %74 = vector.load %arg15[%c3_41, %c0_42, %c0_43] : memref<8x16x1xf32, #tpu.memory_space<vmem>>, vector<1x16x1xf32>
    %75 = vector.shape_cast %74 : vector<1x16x1xf32> to vector<16x1xf32>
    %76 = vector.shape_cast %73 : vector<16x1xf32> to vector<1x16x1xf32>
    tpu.vector_store %arg15[%c3_41, %c0_42, %c0_43], %76 {strides = array<i32>} : memref<8x16x1xf32, #tpu.memory_space<vmem>>, vector<1x16x1xf32>,
    %77 = vector.extract_strided_slice %8 {offsets = [0, 3], sizes = [16, 1], strides = [1, 1]} : vector<16x8xf32> to vector<16x1xf32>
    %78 = arith.addf %77, %73 : vector<16x1xf32>
    %c7 = arith.constant 7 : index
    %c0_44 = arith.constant 0 : index
    %c0_45 = arith.constant 0 : index
    %79 = vector.load %arg15[%c7, %c0_44, %c0_45] : memref<8x16x1xf32, #tpu.memory_space<vmem>>, vector<1x16x1xf32>
    %80 = vector.shape_cast %79 : vector<1x16x1xf32> to vector<16x1xf32>
    %81 = vector.shape_cast %78 : vector<16x1xf32> to vector<1x16x1xf32>
    tpu.vector_store %arg15[%c7, %c0_44, %c0_45], %81 {strides = array<i32>} : memref<8x16x1xf32, #tpu.memory_space<vmem>>, vector<1x16x1xf32>,
    %82 = arith.index_cast %arg1 : i32 to index
    %83 = memref.load %arg2[%82] : memref<4xi32, #tpu.memory_space<smem>>
    %c0_i32_46 = arith.constant 0 : i32
    %84 = arith.cmpi eq, %83, %c0_i32_46 : i32
    %85 = arith.extui %84 : i1 to i32
    %c0_i32_47 = arith.constant 0 : i32
    %86 = arith.cmpi ne, %85, %c0_i32_47 : i32
    scf.if %86 {
      %cst_70 = arith.constant 0.000000e+00 : f32
      %116 = vector.broadcast %cst_70 : f32 to vector<8x32xf32>
      %cst_71 = arith.constant 0.000000e+00 : f32
      %117 = vector.broadcast %cst_71 : f32 to vector<8x32xf32>
      %c0_i32_72 = arith.constant 0 : i32
      %118 = arith.index_cast %c0_i32_72 : i32 to index
      %c0_73 = arith.constant 0 : index
      %c0_74 = arith.constant 0 : index
      %119 = vector.load %arg13[%118, %c0_73, %c0_74] : memref<4x16x32xbf16, #tpu.memory_space<vmem>>, vector<1x16x32xbf16>
      %120 = vector.shape_cast %119 : vector<1x16x32xbf16> to vector<16x32xbf16>
      %121 = arith.index_cast %c0_i32_72 : i32 to index
      %c0_75 = arith.constant 0 : index
      %c0_76 = arith.constant 0 : index
      %122 = vector.load %arg14[%121, %c0_75, %c0_76] : memref<4x1x16xf32, #tpu.memory_space<vmem>>, vector<1x1x16xf32>
      %123 = vector.shape_cast %122 : vector<1x1x16xf32> to vector<1x16xf32>
      %124 = arith.index_cast %c0_i32_72 : i32 to index
      %c0_77 = arith.constant 0 : index
      %c0_78 = arith.constant 0 : index
      %125 = vector.load %arg15[%124, %c0_77, %c0_78] : memref<8x16x1xf32, #tpu.memory_space<vmem>>, vector<1x16x1xf32>
      %126 = vector.shape_cast %125 : vector<1x16x1xf32> to vector<16x1xf32>
      %127 = vector.extract_strided_slice %123 {offsets = [0, 0], sizes = [1, 8], strides = [1, 1]} : vector<1x16xf32> to vector<1x8xf32>
      %128 = vector.extract_strided_slice %126 {offsets = [0, 0], sizes = [8, 1], strides = [1, 1]} : vector<16x1xf32> to vector<8x1xf32>
      %129 = vector.broadcast %127 : vector<1x8xf32> to vector<8x8xf32>
      %130 = vector.broadcast %128 : vector<8x1xf32> to vector<8x8xf32>
      %131 = arith.addf %129, %130 : vector<8x8xf32>
      %cst_79 = arith.constant 0.000000e+00 : f32
      %132 = vector.broadcast %cst_79 : f32 to vector<8x8xf32>
      %133 = arith.cmpf ogt, %131, %132 : vector<8x8xf32>
      %cst_80 = arith.constant 2.000000e-01 : f32
      %134 = vector.broadcast %cst_80 : f32 to vector<8x8xf32>
      %135 = arith.mulf %134, %131 : vector<8x8xf32>
      %136 = arith.select %133, %131, %135 : vector<8x8xi1>, vector<8x8xf32>
      %cst_81 = arith.constant dense<0xFF800000> : vector<8xf32>
      %137 = vector.multi_reduction <maximumf>, %136, %cst_81 [1] : vector<8x8xf32> to vector<8xf32>
      %138 = vector.shape_cast %137 : vector<8xf32> to vector<8x1xf32>
      %139 = vector.broadcast %138 : vector<8x1xf32> to vector<8x8xf32>
      %140 = arith.subf %136, %139 : vector<8x8xf32>
      %141 = math.exp %140 : vector<8x8xf32>
      %cst_82 = arith.constant dense<0.000000e+00> : vector<8xf32>
      %142 = vector.multi_reduction <add>, %141, %cst_82 [1] : vector<8x8xf32> to vector<8xf32>
      %143 = vector.shape_cast %142 : vector<8xf32> to vector<8x1xf32>
      %144 = tpu.reciprocal %143 : vector<8x1xf32> -> vector<8x1xf32>
      %145 = arith.truncf %141 : vector<8x8xf32> to vector<8x8xbf16>
      %146 = vector.extract_strided_slice %120 {offsets = [0, 0], sizes = [8, 32], strides = [1, 1]} : vector<16x32xbf16> to vector<8x32xbf16>
      %cst_83 = arith.constant dense<0.000000e+00> : vector<8x32xf32>
      %147 = tpu.matmul %145, %146, %cst_83 {dimension_numbers = #tpu.dot_dimension_numbers<[1], [0], [0], [1], [0, 0, 1, 1], [], []>} : vector<8x8xbf16>, vector<8x32xbf16>, vector<8x32xf32> -> vector<8x32xf32>
      %148 = vector.broadcast %144 : vector<8x1xf32> to vector<8x32xf32>
      %149 = arith.mulf %147, %148 : vector<8x32xf32>
      %150 = arith.addf %116, %149 : vector<8x32xf32>
      %151 = vector.extract_strided_slice %123 {offsets = [0, 8], sizes = [1, 8], strides = [1, 1]} : vector<1x16xf32> to vector<1x8xf32>
      %152 = vector.extract_strided_slice %126 {offsets = [8, 0], sizes = [8, 1], strides = [1, 1]} : vector<16x1xf32> to vector<8x1xf32>
      %153 = vector.broadcast %151 : vector<1x8xf32> to vector<8x8xf32>
      %154 = vector.broadcast %152 : vector<8x1xf32> to vector<8x8xf32>
      %155 = arith.addf %153, %154 : vector<8x8xf32>
      %cst_84 = arith.constant 0.000000e+00 : f32
      %156 = vector.broadcast %cst_84 : f32 to vector<8x8xf32>
      %157 = arith.cmpf ogt, %155, %156 : vector<8x8xf32>
      %cst_85 = arith.constant 2.000000e-01 : f32
      %158 = vector.broadcast %cst_85 : f32 to vector<8x8xf32>
      %159 = arith.mulf %158, %155 : vector<8x8xf32>
      %160 = arith.select %157, %155, %159 : vector<8x8xi1>, vector<8x8xf32>
      %cst_86 = arith.constant dense<0xFF800000> : vector<8xf32>
      %161 = vector.multi_reduction <maximumf>, %160, %cst_86 [1] : vector<8x8xf32> to vector<8xf32>
      %162 = vector.shape_cast %161 : vector<8xf32> to vector<8x1xf32>
      %163 = vector.broadcast %162 : vector<8x1xf32> to vector<8x8xf32>
      %164 = arith.subf %160, %163 : vector<8x8xf32>
      %165 = math.exp %164 : vector<8x8xf32>
      %cst_87 = arith.constant dense<0.000000e+00> : vector<8xf32>
      %166 = vector.multi_reduction <add>, %165, %cst_87 [1] : vector<8x8xf32> to vector<8xf32>
      %167 = vector.shape_cast %166 : vector<8xf32> to vector<8x1xf32>
      %168 = tpu.reciprocal %167 : vector<8x1xf32> -> vector<8x1xf32>
      %169 = arith.truncf %165 : vector<8x8xf32> to vector<8x8xbf16>
      %170 = vector.extract_strided_slice %120 {offsets = [8, 0], sizes = [8, 32], strides = [1, 1]} : vector<16x32xbf16> to vector<8x32xbf16>
      %cst_88 = arith.constant dense<0.000000e+00> : vector<8x32xf32>
      %171 = tpu.matmul %169, %170, %cst_88 {dimension_numbers = #tpu.dot_dimension_numbers<[1], [0], [0], [1], [0, 0, 1, 1], [], []>} : vector<8x8xbf16>, vector<8x32xbf16>, vector<8x32xf32> -> vector<8x32xf32>
      %172 = vector.broadcast %168 : vector<8x1xf32> to vector<8x32xf32>
      %173 = arith.mulf %171, %172 : vector<8x32xf32>
      %174 = arith.addf %117, %173 : vector<8x32xf32>
      %c1_i32 = arith.constant 1 : i32
      %175 = arith.index_cast %c1_i32 : i32 to index
      %c0_89 = arith.constant 0 : index
      %c0_90 = arith.constant 0 : index
      %176 = vector.load %arg13[%175, %c0_89, %c0_90] : memref<4x16x32xbf16, #tpu.memory_space<vmem>>, vector<1x16x32xbf16>
      %177 = vector.shape_cast %176 : vector<1x16x32xbf16> to vector<16x32xbf16>
      %178 = arith.index_cast %c1_i32 : i32 to index
      %c0_91 = arith.constant 0 : index
      %c0_92 = arith.constant 0 : index
      %179 = vector.load %arg14[%178, %c0_91, %c0_92] : memref<4x1x16xf32, #tpu.memory_space<vmem>>, vector<1x1x16xf32>
      %180 = vector.shape_cast %179 : vector<1x1x16xf32> to vector<1x16xf32>
      %181 = arith.index_cast %c1_i32 : i32 to index
      %c0_93 = arith.constant 0 : index
      %c0_94 = arith.constant 0 : index
      %182 = vector.load %arg15[%181, %c0_93, %c0_94] : memref<8x16x1xf32, #tpu.memory_space<vmem>>, vector<1x16x1xf32>
      %183 = vector.shape_cast %182 : vector<1x16x1xf32> to vector<16x1xf32>
      %184 = vector.extract_strided_slice %180 {offsets = [0, 0], sizes = [1, 8], strides = [1, 1]} : vector<1x16xf32> to vector<1x8xf32>
      %185 = vector.extract_strided_slice %183 {offsets = [0, 0], sizes = [8, 1], strides = [1, 1]} : vector<16x1xf32> to vector<8x1xf32>
      %186 = vector.broadcast %184 : vector<1x8xf32> to vector<8x8xf32>
      %187 = vector.broadcast %185 : vector<8x1xf32> to vector<8x8xf32>
      %188 = arith.addf %186, %187 : vector<8x8xf32>
      %cst_95 = arith.constant 0.000000e+00 : f32
      %189 = vector.broadcast %cst_95 : f32 to vector<8x8xf32>
      %190 = arith.cmpf ogt, %188, %189 : vector<8x8xf32>
      %cst_96 = arith.constant 2.000000e-01 : f32
      %191 = vector.broadcast %cst_96 : f32 to vector<8x8xf32>
      %192 = arith.mulf %191, %188 : vector<8x8xf32>
      %193 = arith.select %190, %188, %192 : vector<8x8xi1>, vector<8x8xf32>
      %cst_97 = arith.constant dense<0xFF800000> : vector<8xf32>
      %194 = vector.multi_reduction <maximumf>, %193, %cst_97 [1] : vector<8x8xf32> to vector<8xf32>
      %195 = vector.shape_cast %194 : vector<8xf32> to vector<8x1xf32>
      %196 = vector.broadcast %195 : vector<8x1xf32> to vector<8x8xf32>
      %197 = arith.subf %193, %196 : vector<8x8xf32>
      %198 = math.exp %197 : vector<8x8xf32>
      %cst_98 = arith.constant dense<0.000000e+00> : vector<8xf32>
      %199 = vector.multi_reduction <add>, %198, %cst_98 [1] : vector<8x8xf32> to vector<8xf32>
      %200 = vector.shape_cast %199 : vector<8xf32> to vector<8x1xf32>
      %201 = tpu.reciprocal %200 : vector<8x1xf32> -> vector<8x1xf32>
      %202 = arith.truncf %198 : vector<8x8xf32> to vector<8x8xbf16>
      %203 = vector.extract_strided_slice %177 {offsets = [0, 0], sizes = [8, 32], strides = [1, 1]} : vector<16x32xbf16> to vector<8x32xbf16>
      %cst_99 = arith.constant dense<0.000000e+00> : vector<8x32xf32>
      %204 = tpu.matmul %202, %203, %cst_99 {dimension_numbers = #tpu.dot_dimension_numbers<[1], [0], [0], [1], [0, 0, 1, 1], [], []>} : vector<8x8xbf16>, vector<8x32xbf16>, vector<8x32xf32> -> vector<8x32xf32>
      %205 = vector.broadcast %201 : vector<8x1xf32> to vector<8x32xf32>
      %206 = arith.mulf %204, %205 : vector<8x32xf32>
      %207 = arith.addf %150, %206 : vector<8x32xf32>
      %208 = vector.extract_strided_slice %180 {offsets = [0, 8], sizes = [1, 8], strides = [1, 1]} : vector<1x16xf32> to vector<1x8xf32>
      %209 = vector.extract_strided_slice %183 {offsets = [8, 0], sizes = [8, 1], strides = [1, 1]} : vector<16x1xf32> to vector<8x1xf32>
      %210 = vector.broadcast %208 : vector<1x8xf32> to vector<8x8xf32>
      %211 = vector.broadcast %209 : vector<8x1xf32> to vector<8x8xf32>
      %212 = arith.addf %210, %211 : vector<8x8xf32>
      %cst_100 = arith.constant 0.000000e+00 : f32
      %213 = vector.broadcast %cst_100 : f32 to vector<8x8xf32>
      %214 = arith.cmpf ogt, %212, %213 : vector<8x8xf32>
      %cst_101 = arith.constant 2.000000e-01 : f32
      %215 = vector.broadcast %cst_101 : f32 to vector<8x8xf32>
      %216 = arith.mulf %215, %212 : vector<8x8xf32>
      %217 = arith.select %214, %212, %216 : vector<8x8xi1>, vector<8x8xf32>
      %cst_102 = arith.constant dense<0xFF800000> : vector<8xf32>
      %218 = vector.multi_reduction <maximumf>, %217, %cst_102 [1] : vector<8x8xf32> to vector<8xf32>
      %219 = vector.shape_cast %218 : vector<8xf32> to vector<8x1xf32>
      %220 = vector.broadcast %219 : vector<8x1xf32> to vector<8x8xf32>
      %221 = arith.subf %217, %220 : vector<8x8xf32>
      %222 = math.exp %221 : vector<8x8xf32>
      %cst_103 = arith.constant dense<0.000000e+00> : vector<8xf32>
      %223 = vector.multi_reduction <add>, %222, %cst_103 [1] : vector<8x8xf32> to vector<8xf32>
      %224 = vector.shape_cast %223 : vector<8xf32> to vector<8x1xf32>
      %225 = tpu.reciprocal %224 : vector<8x1xf32> -> vector<8x1xf32>
      %226 = arith.truncf %222 : vector<8x8xf32> to vector<8x8xbf16>
      %227 = vector.extract_strided_slice %177 {offsets = [8, 0], sizes = [8, 32], strides = [1, 1]} : vector<16x32xbf16> to vector<8x32xbf16>
      %cst_104 = arith.constant dense<0.000000e+00> : vector<8x32xf32>
      %228 = tpu.matmul %226, %227, %cst_104 {dimension_numbers = #tpu.dot_dimension_numbers<[1], [0], [0], [1], [0, 0, 1, 1], [], []>} : vector<8x8xbf16>, vector<8x32xbf16>, vector<8x32xf32> -> vector<8x32xf32>
      %229 = vector.broadcast %225 : vector<8x1xf32> to vector<8x32xf32>
      %230 = arith.mulf %228, %229 : vector<8x32xf32>
      %231 = arith.addf %174, %230 : vector<8x32xf32>
      %c2_i32 = arith.constant 2 : i32
      %232 = arith.index_cast %c2_i32 : i32 to index
      %c0_105 = arith.constant 0 : index
      %c0_106 = arith.constant 0 : index
      %233 = vector.load %arg13[%232, %c0_105, %c0_106] : memref<4x16x32xbf16, #tpu.memory_space<vmem>>, vector<1x16x32xbf16>
      %234 = vector.shape_cast %233 : vector<1x16x32xbf16> to vector<16x32xbf16>
      %235 = arith.index_cast %c2_i32 : i32 to index
      %c0_107 = arith.constant 0 : index
      %c0_108 = arith.constant 0 : index
      %236 = vector.load %arg14[%235, %c0_107, %c0_108] : memref<4x1x16xf32, #tpu.memory_space<vmem>>, vector<1x1x16xf32>
      %237 = vector.shape_cast %236 : vector<1x1x16xf32> to vector<1x16xf32>
      %238 = arith.index_cast %c2_i32 : i32 to index
      %c0_109 = arith.constant 0 : index
      %c0_110 = arith.constant 0 : index
      %239 = vector.load %arg15[%238, %c0_109, %c0_110] : memref<8x16x1xf32, #tpu.memory_space<vmem>>, vector<1x16x1xf32>
      %240 = vector.shape_cast %239 : vector<1x16x1xf32> to vector<16x1xf32>
      %241 = vector.extract_strided_slice %237 {offsets = [0, 0], sizes = [1, 8], strides = [1, 1]} : vector<1x16xf32> to vector<1x8xf32>
      %242 = vector.extract_strided_slice %240 {offsets = [0, 0], sizes = [8, 1], strides = [1, 1]} : vector<16x1xf32> to vector<8x1xf32>
      %243 = vector.broadcast %241 : vector<1x8xf32> to vector<8x8xf32>
      %244 = vector.broadcast %242 : vector<8x1xf32> to vector<8x8xf32>
      %245 = arith.addf %243, %244 : vector<8x8xf32>
      %cst_111 = arith.constant 0.000000e+00 : f32
      %246 = vector.broadcast %cst_111 : f32 to vector<8x8xf32>
      %247 = arith.cmpf ogt, %245, %246 : vector<8x8xf32>
      %cst_112 = arith.constant 2.000000e-01 : f32
      %248 = vector.broadcast %cst_112 : f32 to vector<8x8xf32>
      %249 = arith.mulf %248, %245 : vector<8x8xf32>
      %250 = arith.select %247, %245, %249 : vector<8x8xi1>, vector<8x8xf32>
      %cst_113 = arith.constant dense<0xFF800000> : vector<8xf32>
      %251 = vector.multi_reduction <maximumf>, %250, %cst_113 [1] : vector<8x8xf32> to vector<8xf32>
      %252 = vector.shape_cast %251 : vector<8xf32> to vector<8x1xf32>
      %253 = vector.broadcast %252 : vector<8x1xf32> to vector<8x8xf32>
      %254 = arith.subf %250, %253 : vector<8x8xf32>
      %255 = math.exp %254 : vector<8x8xf32>
      %cst_114 = arith.constant dense<0.000000e+00> : vector<8xf32>
      %256 = vector.multi_reduction <add>, %255, %cst_114 [1] : vector<8x8xf32> to vector<8xf32>
      %257 = vector.shape_cast %256 : vector<8xf32> to vector<8x1xf32>
      %258 = tpu.reciprocal %257 : vector<8x1xf32> -> vector<8x1xf32>
      %259 = arith.truncf %255 : vector<8x8xf32> to vector<8x8xbf16>
      %260 = vector.extract_strided_slice %234 {offsets = [0, 0], sizes = [8, 32], strides = [1, 1]} : vector<16x32xbf16> to vector<8x32xbf16>
      %cst_115 = arith.constant dense<0.000000e+00> : vector<8x32xf32>
      %261 = tpu.matmul %259, %260, %cst_115 {dimension_numbers = #tpu.dot_dimension_numbers<[1], [0], [0], [1], [0, 0, 1, 1], [], []>} : vector<8x8xbf16>, vector<8x32xbf16>, vector<8x32xf32> -> vector<8x32xf32>
      %262 = vector.broadcast %258 : vector<8x1xf32> to vector<8x32xf32>
      %263 = arith.mulf %261, %262 : vector<8x32xf32>
      %264 = arith.addf %207, %263 : vector<8x32xf32>
      %265 = vector.extract_strided_slice %237 {offsets = [0, 8], sizes = [1, 8], strides = [1, 1]} : vector<1x16xf32> to vector<1x8xf32>
      %266 = vector.extract_strided_slice %240 {offsets = [8, 0], sizes = [8, 1], strides = [1, 1]} : vector<16x1xf32> to vector<8x1xf32>
      %267 = vector.broadcast %265 : vector<1x8xf32> to vector<8x8xf32>
      %268 = vector.broadcast %266 : vector<8x1xf32> to vector<8x8xf32>
      %269 = arith.addf %267, %268 : vector<8x8xf32>
      %cst_116 = arith.constant 0.000000e+00 : f32
      %270 = vector.broadcast %cst_116 : f32 to vector<8x8xf32>
      %271 = arith.cmpf ogt, %269, %270 : vector<8x8xf32>
      %cst_117 = arith.constant 2.000000e-01 : f32
      %272 = vector.broadcast %cst_117 : f32 to vector<8x8xf32>
      %273 = arith.mulf %272, %269 : vector<8x8xf32>
      %274 = arith.select %271, %269, %273 : vector<8x8xi1>, vector<8x8xf32>
      %cst_118 = arith.constant dense<0xFF800000> : vector<8xf32>
      %275 = vector.multi_reduction <maximumf>, %274, %cst_118 [1] : vector<8x8xf32> to vector<8xf32>
      %276 = vector.shape_cast %275 : vector<8xf32> to vector<8x1xf32>
      %277 = vector.broadcast %276 : vector<8x1xf32> to vector<8x8xf32>
      %278 = arith.subf %274, %277 : vector<8x8xf32>
      %279 = math.exp %278 : vector<8x8xf32>
      %cst_119 = arith.constant dense<0.000000e+00> : vector<8xf32>
      %280 = vector.multi_reduction <add>, %279, %cst_119 [1] : vector<8x8xf32> to vector<8xf32>
      %281 = vector.shape_cast %280 : vector<8xf32> to vector<8x1xf32>
      %282 = tpu.reciprocal %281 : vector<8x1xf32> -> vector<8x1xf32>
      %283 = arith.truncf %279 : vector<8x8xf32> to vector<8x8xbf16>
      %284 = vector.extract_strided_slice %234 {offsets = [8, 0], sizes = [8, 32], strides = [1, 1]} : vector<16x32xbf16> to vector<8x32xbf16>
      %cst_120 = arith.constant dense<0.000000e+00> : vector<8x32xf32>
      %285 = tpu.matmul %283, %284, %cst_120 {dimension_numbers = #tpu.dot_dimension_numbers<[1], [0], [0], [1], [0, 0, 1, 1], [], []>} : vector<8x8xbf16>, vector<8x32xbf16>, vector<8x32xf32> -> vector<8x32xf32>
      %286 = vector.broadcast %282 : vector<8x1xf32> to vector<8x32xf32>
      %287 = arith.mulf %285, %286 : vector<8x32xf32>
      %288 = arith.addf %231, %287 : vector<8x32xf32>
      %c3_i32_121 = arith.constant 3 : i32
      %289 = arith.index_cast %c3_i32_121 : i32 to index
      %c0_122 = arith.constant 0 : index
      %c0_123 = arith.constant 0 : index
      %290 = vector.load %arg13[%289, %c0_122, %c0_123] : memref<4x16x32xbf16, #tpu.memory_space<vmem>>, vector<1x16x32xbf16>
      %291 = vector.shape_cast %290 : vector<1x16x32xbf16> to vector<16x32xbf16>
      %292 = arith.index_cast %c3_i32_121 : i32 to index
      %c0_124 = arith.constant 0 : index
      %c0_125 = arith.constant 0 : index
      %293 = vector.load %arg14[%292, %c0_124, %c0_125] : memref<4x1x16xf32, #tpu.memory_space<vmem>>, vector<1x1x16xf32>
      %294 = vector.shape_cast %293 : vector<1x1x16xf32> to vector<1x16xf32>
      %295 = arith.index_cast %c3_i32_121 : i32 to index
      %c0_126 = arith.constant 0 : index
      %c0_127 = arith.constant 0 : index
      %296 = vector.load %arg15[%295, %c0_126, %c0_127] : memref<8x16x1xf32, #tpu.memory_space<vmem>>, vector<1x16x1xf32>
      %297 = vector.shape_cast %296 : vector<1x16x1xf32> to vector<16x1xf32>
      %298 = vector.extract_strided_slice %294 {offsets = [0, 0], sizes = [1, 8], strides = [1, 1]} : vector<1x16xf32> to vector<1x8xf32>
      %299 = vector.extract_strided_slice %297 {offsets = [0, 0], sizes = [8, 1], strides = [1, 1]} : vector<16x1xf32> to vector<8x1xf32>
      %300 = vector.broadcast %298 : vector<1x8xf32> to vector<8x8xf32>
      %301 = vector.broadcast %299 : vector<8x1xf32> to vector<8x8xf32>
      %302 = arith.addf %300, %301 : vector<8x8xf32>
      %cst_128 = arith.constant 0.000000e+00 : f32
      %303 = vector.broadcast %cst_128 : f32 to vector<8x8xf32>
      %304 = arith.cmpf ogt, %302, %303 : vector<8x8xf32>
      %cst_129 = arith.constant 2.000000e-01 : f32
      %305 = vector.broadcast %cst_129 : f32 to vector<8x8xf32>
      %306 = arith.mulf %305, %302 : vector<8x8xf32>
      %307 = arith.select %304, %302, %306 : vector<8x8xi1>, vector<8x8xf32>
      %cst_130 = arith.constant dense<0xFF800000> : vector<8xf32>
      %308 = vector.multi_reduction <maximumf>, %307, %cst_130 [1] : vector<8x8xf32> to vector<8xf32>
      %309 = vector.shape_cast %308 : vector<8xf32> to vector<8x1xf32>
      %310 = vector.broadcast %309 : vector<8x1xf32> to vector<8x8xf32>
      %311 = arith.subf %307, %310 : vector<8x8xf32>
      %312 = math.exp %311 : vector<8x8xf32>
      %cst_131 = arith.constant dense<0.000000e+00> : vector<8xf32>
      %313 = vector.multi_reduction <add>, %312, %cst_131 [1] : vector<8x8xf32> to vector<8xf32>
      %314 = vector.shape_cast %313 : vector<8xf32> to vector<8x1xf32>
      %315 = tpu.reciprocal %314 : vector<8x1xf32> -> vector<8x1xf32>
      %316 = arith.truncf %312 : vector<8x8xf32> to vector<8x8xbf16>
      %317 = vector.extract_strided_slice %291 {offsets = [0, 0], sizes = [8, 32], strides = [1, 1]} : vector<16x32xbf16> to vector<8x32xbf16>
      %cst_132 = arith.constant dense<0.000000e+00> : vector<8x32xf32>
      %318 = tpu.matmul %316, %317, %cst_132 {dimension_numbers = #tpu.dot_dimension_numbers<[1], [0], [0], [1], [0, 0, 1, 1], [], []>} : vector<8x8xbf16>, vector<8x32xbf16>, vector<8x32xf32> -> vector<8x32xf32>
      %319 = vector.broadcast %315 : vector<8x1xf32> to vector<8x32xf32>
      %320 = arith.mulf %318, %319 : vector<8x32xf32>
      %321 = arith.addf %264, %320 : vector<8x32xf32>
      %322 = vector.extract_strided_slice %294 {offsets = [0, 8], sizes = [1, 8], strides = [1, 1]} : vector<1x16xf32> to vector<1x8xf32>
      %323 = vector.extract_strided_slice %297 {offsets = [8, 0], sizes = [8, 1], strides = [1, 1]} : vector<16x1xf32> to vector<8x1xf32>
      %324 = vector.broadcast %322 : vector<1x8xf32> to vector<8x8xf32>
      %325 = vector.broadcast %323 : vector<8x1xf32> to vector<8x8xf32>
      %326 = arith.addf %324, %325 : vector<8x8xf32>
      %cst_133 = arith.constant 0.000000e+00 : f32
      %327 = vector.broadcast %cst_133 : f32 to vector<8x8xf32>
      %328 = arith.cmpf ogt, %326, %327 : vector<8x8xf32>
      %cst_134 = arith.constant 2.000000e-01 : f32
      %329 = vector.broadcast %cst_134 : f32 to vector<8x8xf32>
      %330 = arith.mulf %329, %326 : vector<8x8xf32>
      %331 = arith.select %328, %326, %330 : vector<8x8xi1>, vector<8x8xf32>
      %cst_135 = arith.constant dense<0xFF800000> : vector<8xf32>
      %332 = vector.multi_reduction <maximumf>, %331, %cst_135 [1] : vector<8x8xf32> to vector<8xf32>
      %333 = vector.shape_cast %332 : vector<8xf32> to vector<8x1xf32>
      %334 = vector.broadcast %333 : vector<8x1xf32> to vector<8x8xf32>
      %335 = arith.subf %331, %334 : vector<8x8xf32>
      %336 = math.exp %335 : vector<8x8xf32>
      %cst_136 = arith.constant dense<0.000000e+00> : vector<8xf32>
      %337 = vector.multi_reduction <add>, %336, %cst_136 [1] : vector<8x8xf32> to vector<8xf32>
      %338 = vector.shape_cast %337 : vector<8xf32> to vector<8x1xf32>
      %339 = tpu.reciprocal %338 : vector<8x1xf32> -> vector<8x1xf32>
      %340 = arith.truncf %336 : vector<8x8xf32> to vector<8x8xbf16>
      %341 = vector.extract_strided_slice %291 {offsets = [8, 0], sizes = [8, 32], strides = [1, 1]} : vector<16x32xbf16> to vector<8x32xbf16>
      %cst_137 = arith.constant dense<0.000000e+00> : vector<8x32xf32>
      %342 = tpu.matmul %340, %341, %cst_137 {dimension_numbers = #tpu.dot_dimension_numbers<[1], [0], [0], [1], [0, 0, 1, 1], [], []>} : vector<8x8xbf16>, vector<8x32xbf16>, vector<8x32xf32> -> vector<8x32xf32>
      %343 = vector.broadcast %339 : vector<8x1xf32> to vector<8x32xf32>
      %344 = arith.mulf %342, %343 : vector<8x32xf32>
      %345 = arith.addf %288, %344 : vector<8x32xf32>
      %c4_i32 = arith.constant 4 : i32
      %c0_138 = arith.constant 0 : index
      %c0_139 = arith.constant 0 : index
      %346 = vector.load %arg16[%c0_138, %c0_139] : memref<16x32xf32, #tpu.memory_space<vmem>>, vector<8x32xf32>
      tpu.vector_store %arg16[%c0_138, %c0_139], %321 {strides = array<i32>} : memref<16x32xf32, #tpu.memory_space<vmem>>, vector<8x32xf32>,
      %c8 = arith.constant 8 : index
      %c0_140 = arith.constant 0 : index
      %347 = vector.load %arg16[%c8, %c0_140] : memref<16x32xf32, #tpu.memory_space<vmem>>, vector<8x32xf32>
      tpu.vector_store %arg16[%c8, %c0_140], %345 {strides = array<i32>} : memref<16x32xf32, #tpu.memory_space<vmem>>, vector<8x32xf32>,
    } else {
    }
    %true = arith.constant true
    %87 = arith.xori %84, %true : i1
    %88 = arith.extui %87 : i1 to i32
    %c0_i32_48 = arith.constant 0 : i32
    %89 = arith.cmpi ne, %88, %c0_i32_48 : i32
    scf.if %89 {
      %cst_70 = arith.constant 0.000000e+00 : f32
      %116 = vector.broadcast %cst_70 : f32 to vector<8x32xf32>
      %cst_71 = arith.constant 0.000000e+00 : f32
      %117 = vector.broadcast %cst_71 : f32 to vector<8x32xf32>
      %c0_i32_72 = arith.constant 0 : i32
      %118 = arith.index_cast %c0_i32_72 : i32 to index
      %c0_73 = arith.constant 0 : index
      %c0_74 = arith.constant 0 : index
      %119 = vector.load %arg13[%118, %c0_73, %c0_74] : memref<4x16x32xbf16, #tpu.memory_space<vmem>>, vector<1x16x32xbf16>
      %120 = vector.shape_cast %119 : vector<1x16x32xbf16> to vector<16x32xbf16>
      %121 = arith.index_cast %c0_i32_72 : i32 to index
      %c0_75 = arith.constant 0 : index
      %c0_76 = arith.constant 0 : index
      %122 = vector.load %arg14[%121, %c0_75, %c0_76] : memref<4x1x16xf32, #tpu.memory_space<vmem>>, vector<1x1x16xf32>
      %123 = vector.shape_cast %122 : vector<1x1x16xf32> to vector<1x16xf32>
      %124 = arith.index_cast %c0_i32_72 : i32 to index
      %c0_77 = arith.constant 0 : index
      %c0_78 = arith.constant 0 : index
      %125 = vector.load %arg15[%124, %c0_77, %c0_78] : memref<8x16x1xf32, #tpu.memory_space<vmem>>, vector<1x16x1xf32>
      %126 = vector.shape_cast %125 : vector<1x16x1xf32> to vector<16x1xf32>
      %c4_i32 = arith.constant 4 : i32
      %127 = arith.addi %c4_i32, %c0_i32_72 : i32
      %128 = arith.index_cast %127 : i32 to index
      %c0_79 = arith.constant 0 : index
      %c0_80 = arith.constant 0 : index
      %129 = vector.load %arg15[%128, %c0_79, %c0_80] : memref<8x16x1xf32, #tpu.memory_space<vmem>>, vector<1x16x1xf32>
      %130 = vector.shape_cast %129 : vector<1x16x1xf32> to vector<16x1xf32>
      %cst_81 = arith.constant 0.000000e+00 : f32
      %131 = vector.broadcast %cst_81 : f32 to vector<16x1xf32>
      %132 = arith.cmpf ogt, %130, %131 : vector<16x1xf32>
      %cst_82 = arith.constant 2.000000e-01 : f32
      %133 = vector.broadcast %cst_82 : f32 to vector<16x1xf32>
      %134 = arith.mulf %133, %130 : vector<16x1xf32>
      %135 = arith.select %132, %130, %134 : vector<16x1xi1>, vector<16x1xf32>
      %136 = vector.extract_strided_slice %123 {offsets = [0, 8], sizes = [1, 8], strides = [1, 1]} : vector<1x16xf32> to vector<1x8xf32>
      %137 = vector.extract_strided_slice %126 {offsets = [0, 0], sizes = [8, 1], strides = [1, 1]} : vector<16x1xf32> to vector<8x1xf32>
      %138 = vector.broadcast %136 : vector<1x8xf32> to vector<8x8xf32>
      %139 = vector.broadcast %137 : vector<8x1xf32> to vector<8x8xf32>
      %140 = arith.addf %138, %139 : vector<8x8xf32>
      %cst_83 = arith.constant 0.000000e+00 : f32
      %141 = vector.broadcast %cst_83 : f32 to vector<8x8xf32>
      %142 = arith.cmpf ogt, %140, %141 : vector<8x8xf32>
      %cst_84 = arith.constant 2.000000e-01 : f32
      %143 = vector.broadcast %cst_84 : f32 to vector<8x8xf32>
      %144 = arith.mulf %143, %140 : vector<8x8xf32>
      %145 = arith.select %142, %140, %144 : vector<8x8xi1>, vector<8x8xf32>
      %146 = vector.extract_strided_slice %135 {offsets = [0, 0], sizes = [8, 1], strides = [1, 1]} : vector<16x1xf32> to vector<8x1xf32>
      %cst_85 = arith.constant dense<0xFF800000> : vector<8xf32>
      %147 = vector.multi_reduction <maximumf>, %145, %cst_85 [1] : vector<8x8xf32> to vector<8xf32>
      %148 = vector.shape_cast %147 : vector<8xf32> to vector<8x1xf32>
      %149 = arith.maximumf %148, %146 : vector<8x1xf32>
      %150 = vector.broadcast %149 : vector<8x1xf32> to vector<8x8xf32>
      %151 = arith.subf %145, %150 : vector<8x8xf32>
      %152 = math.exp %151 : vector<8x8xf32>
      %153 = arith.subf %146, %149 : vector<8x1xf32>
      %154 = math.exp %153 : vector<8x1xf32>
      %cst_86 = arith.constant dense<0.000000e+00> : vector<8xf32>
      %155 = vector.multi_reduction <add>, %152, %cst_86 [1] : vector<8x8xf32> to vector<8xf32>
      %156 = vector.shape_cast %155 : vector<8xf32> to vector<8x1xf32>
      %157 = arith.addf %156, %154 : vector<8x1xf32>
      %158 = tpu.reciprocal %157 : vector<8x1xf32> -> vector<8x1xf32>
      %159 = arith.truncf %152 : vector<8x8xf32> to vector<8x8xbf16>
      %160 = vector.extract_strided_slice %120 {offsets = [8, 0], sizes = [8, 32], strides = [1, 1]} : vector<16x32xbf16> to vector<8x32xbf16>
      %cst_87 = arith.constant dense<0.000000e+00> : vector<8x32xf32>
      %161 = tpu.matmul %159, %160, %cst_87 {dimension_numbers = #tpu.dot_dimension_numbers<[1], [0], [0], [1], [0, 0, 1, 1], [], []>} : vector<8x8xbf16>, vector<8x32xbf16>, vector<8x32xf32> -> vector<8x32xf32>
      %162 = vector.extract_strided_slice %120 {offsets = [0, 0], sizes = [8, 32], strides = [1, 1]} : vector<16x32xbf16> to vector<8x32xbf16>
      %163 = arith.extf %162 : vector<8x32xbf16> to vector<8x32xf32>
      %164 = vector.broadcast %154 : vector<8x1xf32> to vector<8x32xf32>
      %165 = arith.mulf %164, %163 : vector<8x32xf32>
      %166 = arith.addf %161, %165 : vector<8x32xf32>
      %167 = vector.broadcast %158 : vector<8x1xf32> to vector<8x32xf32>
      %168 = arith.mulf %166, %167 : vector<8x32xf32>
      %169 = arith.addf %116, %168 : vector<8x32xf32>
      %170 = vector.extract_strided_slice %123 {offsets = [0, 0], sizes = [1, 8], strides = [1, 1]} : vector<1x16xf32> to vector<1x8xf32>
      %171 = vector.extract_strided_slice %126 {offsets = [8, 0], sizes = [8, 1], strides = [1, 1]} : vector<16x1xf32> to vector<8x1xf32>
      %172 = vector.broadcast %170 : vector<1x8xf32> to vector<8x8xf32>
      %173 = vector.broadcast %171 : vector<8x1xf32> to vector<8x8xf32>
      %174 = arith.addf %172, %173 : vector<8x8xf32>
      %cst_88 = arith.constant 0.000000e+00 : f32
      %175 = vector.broadcast %cst_88 : f32 to vector<8x8xf32>
      %176 = arith.cmpf ogt, %174, %175 : vector<8x8xf32>
      %cst_89 = arith.constant 2.000000e-01 : f32
      %177 = vector.broadcast %cst_89 : f32 to vector<8x8xf32>
      %178 = arith.mulf %177, %174 : vector<8x8xf32>
      %179 = arith.select %176, %174, %178 : vector<8x8xi1>, vector<8x8xf32>
      %180 = vector.extract_strided_slice %135 {offsets = [8, 0], sizes = [8, 1], strides = [1, 1]} : vector<16x1xf32> to vector<8x1xf32>
      %cst_90 = arith.constant dense<0xFF800000> : vector<8xf32>
      %181 = vector.multi_reduction <maximumf>, %179, %cst_90 [1] : vector<8x8xf32> to vector<8xf32>
      %182 = vector.shape_cast %181 : vector<8xf32> to vector<8x1xf32>
      %183 = arith.maximumf %182, %180 : vector<8x1xf32>
      %184 = vector.broadcast %183 : vector<8x1xf32> to vector<8x8xf32>
      %185 = arith.subf %179, %184 : vector<8x8xf32>
      %186 = math.exp %185 : vector<8x8xf32>
      %187 = arith.subf %180, %183 : vector<8x1xf32>
      %188 = math.exp %187 : vector<8x1xf32>
      %cst_91 = arith.constant dense<0.000000e+00> : vector<8xf32>
      %189 = vector.multi_reduction <add>, %186, %cst_91 [1] : vector<8x8xf32> to vector<8xf32>
      %190 = vector.shape_cast %189 : vector<8xf32> to vector<8x1xf32>
      %191 = arith.addf %190, %188 : vector<8x1xf32>
      %192 = tpu.reciprocal %191 : vector<8x1xf32> -> vector<8x1xf32>
      %193 = arith.truncf %186 : vector<8x8xf32> to vector<8x8xbf16>
      %194 = vector.extract_strided_slice %120 {offsets = [0, 0], sizes = [8, 32], strides = [1, 1]} : vector<16x32xbf16> to vector<8x32xbf16>
      %cst_92 = arith.constant dense<0.000000e+00> : vector<8x32xf32>
      %195 = tpu.matmul %193, %194, %cst_92 {dimension_numbers = #tpu.dot_dimension_numbers<[1], [0], [0], [1], [0, 0, 1, 1], [], []>} : vector<8x8xbf16>, vector<8x32xbf16>, vector<8x32xf32> -> vector<8x32xf32>
      %196 = vector.extract_strided_slice %120 {offsets = [8, 0], sizes = [8, 32], strides = [1, 1]} : vector<16x32xbf16> to vector<8x32xbf16>
      %197 = arith.extf %196 : vector<8x32xbf16> to vector<8x32xf32>
      %198 = vector.broadcast %188 : vector<8x1xf32> to vector<8x32xf32>
      %199 = arith.mulf %198, %197 : vector<8x32xf32>
      %200 = arith.addf %195, %199 : vector<8x32xf32>
      %201 = vector.broadcast %192 : vector<8x1xf32> to vector<8x32xf32>
      %202 = arith.mulf %200, %201 : vector<8x32xf32>
      %203 = arith.addf %117, %202 : vector<8x32xf32>
      %c1_i32 = arith.constant 1 : i32
      %204 = arith.index_cast %c1_i32 : i32 to index
      %c0_93 = arith.constant 0 : index
      %c0_94 = arith.constant 0 : index
      %205 = vector.load %arg13[%204, %c0_93, %c0_94] : memref<4x16x32xbf16, #tpu.memory_space<vmem>>, vector<1x16x32xbf16>
      %206 = vector.shape_cast %205 : vector<1x16x32xbf16> to vector<16x32xbf16>
      %207 = arith.index_cast %c1_i32 : i32 to index
      %c0_95 = arith.constant 0 : index
      %c0_96 = arith.constant 0 : index
      %208 = vector.load %arg14[%207, %c0_95, %c0_96] : memref<4x1x16xf32, #tpu.memory_space<vmem>>, vector<1x1x16xf32>
      %209 = vector.shape_cast %208 : vector<1x1x16xf32> to vector<1x16xf32>
      %210 = arith.index_cast %c1_i32 : i32 to index
      %c0_97 = arith.constant 0 : index
      %c0_98 = arith.constant 0 : index
      %211 = vector.load %arg15[%210, %c0_97, %c0_98] : memref<8x16x1xf32, #tpu.memory_space<vmem>>, vector<1x16x1xf32>
      %212 = vector.shape_cast %211 : vector<1x16x1xf32> to vector<16x1xf32>
      %c4_i32_99 = arith.constant 4 : i32
      %213 = arith.addi %c4_i32_99, %c1_i32 : i32
      %214 = arith.index_cast %213 : i32 to index
      %c0_100 = arith.constant 0 : index
      %c0_101 = arith.constant 0 : index
      %215 = vector.load %arg15[%214, %c0_100, %c0_101] : memref<8x16x1xf32, #tpu.memory_space<vmem>>, vector<1x16x1xf32>
      %216 = vector.shape_cast %215 : vector<1x16x1xf32> to vector<16x1xf32>
      %cst_102 = arith.constant 0.000000e+00 : f32
      %217 = vector.broadcast %cst_102 : f32 to vector<16x1xf32>
      %218 = arith.cmpf ogt, %216, %217 : vector<16x1xf32>
      %cst_103 = arith.constant 2.000000e-01 : f32
      %219 = vector.broadcast %cst_103 : f32 to vector<16x1xf32>
      %220 = arith.mulf %219, %216 : vector<16x1xf32>
      %221 = arith.select %218, %216, %220 : vector<16x1xi1>, vector<16x1xf32>
      %222 = vector.extract_strided_slice %209 {offsets = [0, 8], sizes = [1, 8], strides = [1, 1]} : vector<1x16xf32> to vector<1x8xf32>
      %223 = vector.extract_strided_slice %212 {offsets = [0, 0], sizes = [8, 1], strides = [1, 1]} : vector<16x1xf32> to vector<8x1xf32>
      %224 = vector.broadcast %222 : vector<1x8xf32> to vector<8x8xf32>
      %225 = vector.broadcast %223 : vector<8x1xf32> to vector<8x8xf32>
      %226 = arith.addf %224, %225 : vector<8x8xf32>
      %cst_104 = arith.constant 0.000000e+00 : f32
      %227 = vector.broadcast %cst_104 : f32 to vector<8x8xf32>
      %228 = arith.cmpf ogt, %226, %227 : vector<8x8xf32>
      %cst_105 = arith.constant 2.000000e-01 : f32
      %229 = vector.broadcast %cst_105 : f32 to vector<8x8xf32>
      %230 = arith.mulf %229, %226 : vector<8x8xf32>
      %231 = arith.select %228, %226, %230 : vector<8x8xi1>, vector<8x8xf32>
      %232 = vector.extract_strided_slice %221 {offsets = [0, 0], sizes = [8, 1], strides = [1, 1]} : vector<16x1xf32> to vector<8x1xf32>
      %cst_106 = arith.constant dense<0xFF800000> : vector<8xf32>
      %233 = vector.multi_reduction <maximumf>, %231, %cst_106 [1] : vector<8x8xf32> to vector<8xf32>
      %234 = vector.shape_cast %233 : vector<8xf32> to vector<8x1xf32>
      %235 = arith.maximumf %234, %232 : vector<8x1xf32>
      %236 = vector.broadcast %235 : vector<8x1xf32> to vector<8x8xf32>
      %237 = arith.subf %231, %236 : vector<8x8xf32>
      %238 = math.exp %237 : vector<8x8xf32>
      %239 = arith.subf %232, %235 : vector<8x1xf32>
      %240 = math.exp %239 : vector<8x1xf32>
      %cst_107 = arith.constant dense<0.000000e+00> : vector<8xf32>
      %241 = vector.multi_reduction <add>, %238, %cst_107 [1] : vector<8x8xf32> to vector<8xf32>
      %242 = vector.shape_cast %241 : vector<8xf32> to vector<8x1xf32>
      %243 = arith.addf %242, %240 : vector<8x1xf32>
      %244 = tpu.reciprocal %243 : vector<8x1xf32> -> vector<8x1xf32>
      %245 = arith.truncf %238 : vector<8x8xf32> to vector<8x8xbf16>
      %246 = vector.extract_strided_slice %206 {offsets = [8, 0], sizes = [8, 32], strides = [1, 1]} : vector<16x32xbf16> to vector<8x32xbf16>
      %cst_108 = arith.constant dense<0.000000e+00> : vector<8x32xf32>
      %247 = tpu.matmul %245, %246, %cst_108 {dimension_numbers = #tpu.dot_dimension_numbers<[1], [0], [0], [1], [0, 0, 1, 1], [], []>} : vector<8x8xbf16>, vector<8x32xbf16>, vector<8x32xf32> -> vector<8x32xf32>
      %248 = vector.extract_strided_slice %206 {offsets = [0, 0], sizes = [8, 32], strides = [1, 1]} : vector<16x32xbf16> to vector<8x32xbf16>
      %249 = arith.extf %248 : vector<8x32xbf16> to vector<8x32xf32>
      %250 = vector.broadcast %240 : vector<8x1xf32> to vector<8x32xf32>
      %251 = arith.mulf %250, %249 : vector<8x32xf32>
      %252 = arith.addf %247, %251 : vector<8x32xf32>
      %253 = vector.broadcast %244 : vector<8x1xf32> to vector<8x32xf32>
      %254 = arith.mulf %252, %253 : vector<8x32xf32>
      %255 = arith.addf %169, %254 : vector<8x32xf32>
      %256 = vector.extract_strided_slice %209 {offsets = [0, 0], sizes = [1, 8], strides = [1, 1]} : vector<1x16xf32> to vector<1x8xf32>
      %257 = vector.extract_strided_slice %212 {offsets = [8, 0], sizes = [8, 1], strides = [1, 1]} : vector<16x1xf32> to vector<8x1xf32>
      %258 = vector.broadcast %256 : vector<1x8xf32> to vector<8x8xf32>
      %259 = vector.broadcast %257 : vector<8x1xf32> to vector<8x8xf32>
      %260 = arith.addf %258, %259 : vector<8x8xf32>
      %cst_109 = arith.constant 0.000000e+00 : f32
      %261 = vector.broadcast %cst_109 : f32 to vector<8x8xf32>
      %262 = arith.cmpf ogt, %260, %261 : vector<8x8xf32>
      %cst_110 = arith.constant 2.000000e-01 : f32
      %263 = vector.broadcast %cst_110 : f32 to vector<8x8xf32>
      %264 = arith.mulf %263, %260 : vector<8x8xf32>
      %265 = arith.select %262, %260, %264 : vector<8x8xi1>, vector<8x8xf32>
      %266 = vector.extract_strided_slice %221 {offsets = [8, 0], sizes = [8, 1], strides = [1, 1]} : vector<16x1xf32> to vector<8x1xf32>
      %cst_111 = arith.constant dense<0xFF800000> : vector<8xf32>
      %267 = vector.multi_reduction <maximumf>, %265, %cst_111 [1] : vector<8x8xf32> to vector<8xf32>
      %268 = vector.shape_cast %267 : vector<8xf32> to vector<8x1xf32>
      %269 = arith.maximumf %268, %266 : vector<8x1xf32>
      %270 = vector.broadcast %269 : vector<8x1xf32> to vector<8x8xf32>
      %271 = arith.subf %265, %270 : vector<8x8xf32>
      %272 = math.exp %271 : vector<8x8xf32>
      %273 = arith.subf %266, %269 : vector<8x1xf32>
      %274 = math.exp %273 : vector<8x1xf32>
      %cst_112 = arith.constant dense<0.000000e+00> : vector<8xf32>
      %275 = vector.multi_reduction <add>, %272, %cst_112 [1] : vector<8x8xf32> to vector<8xf32>
      %276 = vector.shape_cast %275 : vector<8xf32> to vector<8x1xf32>
      %277 = arith.addf %276, %274 : vector<8x1xf32>
      %278 = tpu.reciprocal %277 : vector<8x1xf32> -> vector<8x1xf32>
      %279 = arith.truncf %272 : vector<8x8xf32> to vector<8x8xbf16>
      %280 = vector.extract_strided_slice %206 {offsets = [0, 0], sizes = [8, 32], strides = [1, 1]} : vector<16x32xbf16> to vector<8x32xbf16>
      %cst_113 = arith.constant dense<0.000000e+00> : vector<8x32xf32>
      %281 = tpu.matmul %279, %280, %cst_113 {dimension_numbers = #tpu.dot_dimension_numbers<[1], [0], [0], [1], [0, 0, 1, 1], [], []>} : vector<8x8xbf16>, vector<8x32xbf16>, vector<8x32xf32> -> vector<8x32xf32>
      %282 = vector.extract_strided_slice %206 {offsets = [8, 0], sizes = [8, 32], strides = [1, 1]} : vector<16x32xbf16> to vector<8x32xbf16>
      %283 = arith.extf %282 : vector<8x32xbf16> to vector<8x32xf32>
      %284 = vector.broadcast %274 : vector<8x1xf32> to vector<8x32xf32>
      %285 = arith.mulf %284, %283 : vector<8x32xf32>
      %286 = arith.addf %281, %285 : vector<8x32xf32>
      %287 = vector.broadcast %278 : vector<8x1xf32> to vector<8x32xf32>
      %288 = arith.mulf %286, %287 : vector<8x32xf32>
      %289 = arith.addf %203, %288 : vector<8x32xf32>
      %c2_i32 = arith.constant 2 : i32
      %290 = arith.index_cast %c2_i32 : i32 to index
      %c0_114 = arith.constant 0 : index
      %c0_115 = arith.constant 0 : index
      %291 = vector.load %arg13[%290, %c0_114, %c0_115] : memref<4x16x32xbf16, #tpu.memory_space<vmem>>, vector<1x16x32xbf16>
      %292 = vector.shape_cast %291 : vector<1x16x32xbf16> to vector<16x32xbf16>
      %293 = arith.index_cast %c2_i32 : i32 to index
      %c0_116 = arith.constant 0 : index
      %c0_117 = arith.constant 0 : index
      %294 = vector.load %arg14[%293, %c0_116, %c0_117] : memref<4x1x16xf32, #tpu.memory_space<vmem>>, vector<1x1x16xf32>
      %295 = vector.shape_cast %294 : vector<1x1x16xf32> to vector<1x16xf32>
      %296 = arith.index_cast %c2_i32 : i32 to index
      %c0_118 = arith.constant 0 : index
      %c0_119 = arith.constant 0 : index
      %297 = vector.load %arg15[%296, %c0_118, %c0_119] : memref<8x16x1xf32, #tpu.memory_space<vmem>>, vector<1x16x1xf32>
      %298 = vector.shape_cast %297 : vector<1x16x1xf32> to vector<16x1xf32>
      %c4_i32_120 = arith.constant 4 : i32
      %299 = arith.addi %c4_i32_120, %c2_i32 : i32
      %300 = arith.index_cast %299 : i32 to index
      %c0_121 = arith.constant 0 : index
      %c0_122 = arith.constant 0 : index
      %301 = vector.load %arg15[%300, %c0_121, %c0_122] : memref<8x16x1xf32, #tpu.memory_space<vmem>>, vector<1x16x1xf32>
      %302 = vector.shape_cast %301 : vector<1x16x1xf32> to vector<16x1xf32>
      %cst_123 = arith.constant 0.000000e+00 : f32
      %303 = vector.broadcast %cst_123 : f32 to vector<16x1xf32>
      %304 = arith.cmpf ogt, %302, %303 : vector<16x1xf32>
      %cst_124 = arith.constant 2.000000e-01 : f32
      %305 = vector.broadcast %cst_124 : f32 to vector<16x1xf32>
      %306 = arith.mulf %305, %302 : vector<16x1xf32>
      %307 = arith.select %304, %302, %306 : vector<16x1xi1>, vector<16x1xf32>
      %308 = vector.extract_strided_slice %295 {offsets = [0, 8], sizes = [1, 8], strides = [1, 1]} : vector<1x16xf32> to vector<1x8xf32>
      %309 = vector.extract_strided_slice %298 {offsets = [0, 0], sizes = [8, 1], strides = [1, 1]} : vector<16x1xf32> to vector<8x1xf32>
      %310 = vector.broadcast %308 : vector<1x8xf32> to vector<8x8xf32>
      %311 = vector.broadcast %309 : vector<8x1xf32> to vector<8x8xf32>
      %312 = arith.addf %310, %311 : vector<8x8xf32>
      %cst_125 = arith.constant 0.000000e+00 : f32
      %313 = vector.broadcast %cst_125 : f32 to vector<8x8xf32>
      %314 = arith.cmpf ogt, %312, %313 : vector<8x8xf32>
      %cst_126 = arith.constant 2.000000e-01 : f32
      %315 = vector.broadcast %cst_126 : f32 to vector<8x8xf32>
      %316 = arith.mulf %315, %312 : vector<8x8xf32>
      %317 = arith.select %314, %312, %316 : vector<8x8xi1>, vector<8x8xf32>
      %318 = vector.extract_strided_slice %307 {offsets = [0, 0], sizes = [8, 1], strides = [1, 1]} : vector<16x1xf32> to vector<8x1xf32>
      %cst_127 = arith.constant dense<0xFF800000> : vector<8xf32>
      %319 = vector.multi_reduction <maximumf>, %317, %cst_127 [1] : vector<8x8xf32> to vector<8xf32>
      %320 = vector.shape_cast %319 : vector<8xf32> to vector<8x1xf32>
      %321 = arith.maximumf %320, %318 : vector<8x1xf32>
      %322 = vector.broadcast %321 : vector<8x1xf32> to vector<8x8xf32>
      %323 = arith.subf %317, %322 : vector<8x8xf32>
      %324 = math.exp %323 : vector<8x8xf32>
      %325 = arith.subf %318, %321 : vector<8x1xf32>
      %326 = math.exp %325 : vector<8x1xf32>
      %cst_128 = arith.constant dense<0.000000e+00> : vector<8xf32>
      %327 = vector.multi_reduction <add>, %324, %cst_128 [1] : vector<8x8xf32> to vector<8xf32>
      %328 = vector.shape_cast %327 : vector<8xf32> to vector<8x1xf32>
      %329 = arith.addf %328, %326 : vector<8x1xf32>
      %330 = tpu.reciprocal %329 : vector<8x1xf32> -> vector<8x1xf32>
      %331 = arith.truncf %324 : vector<8x8xf32> to vector<8x8xbf16>
      %332 = vector.extract_strided_slice %292 {offsets = [8, 0], sizes = [8, 32], strides = [1, 1]} : vector<16x32xbf16> to vector<8x32xbf16>
      %cst_129 = arith.constant dense<0.000000e+00> : vector<8x32xf32>
      %333 = tpu.matmul %331, %332, %cst_129 {dimension_numbers = #tpu.dot_dimension_numbers<[1], [0], [0], [1], [0, 0, 1, 1], [], []>} : vector<8x8xbf16>, vector<8x32xbf16>, vector<8x32xf32> -> vector<8x32xf32>
      %334 = vector.extract_strided_slice %292 {offsets = [0, 0], sizes = [8, 32], strides = [1, 1]} : vector<16x32xbf16> to vector<8x32xbf16>
      %335 = arith.extf %334 : vector<8x32xbf16> to vector<8x32xf32>
      %336 = vector.broadcast %326 : vector<8x1xf32> to vector<8x32xf32>
      %337 = arith.mulf %336, %335 : vector<8x32xf32>
      %338 = arith.addf %333, %337 : vector<8x32xf32>
      %339 = vector.broadcast %330 : vector<8x1xf32> to vector<8x32xf32>
      %340 = arith.mulf %338, %339 : vector<8x32xf32>
      %341 = arith.addf %255, %340 : vector<8x32xf32>
      %342 = vector.extract_strided_slice %295 {offsets = [0, 0], sizes = [1, 8], strides = [1, 1]} : vector<1x16xf32> to vector<1x8xf32>
      %343 = vector.extract_strided_slice %298 {offsets = [8, 0], sizes = [8, 1], strides = [1, 1]} : vector<16x1xf32> to vector<8x1xf32>
      %344 = vector.broadcast %342 : vector<1x8xf32> to vector<8x8xf32>
      %345 = vector.broadcast %343 : vector<8x1xf32> to vector<8x8xf32>
      %346 = arith.addf %344, %345 : vector<8x8xf32>
      %cst_130 = arith.constant 0.000000e+00 : f32
      %347 = vector.broadcast %cst_130 : f32 to vector<8x8xf32>
      %348 = arith.cmpf ogt, %346, %347 : vector<8x8xf32>
      %cst_131 = arith.constant 2.000000e-01 : f32
      %349 = vector.broadcast %cst_131 : f32 to vector<8x8xf32>
      %350 = arith.mulf %349, %346 : vector<8x8xf32>
      %351 = arith.select %348, %346, %350 : vector<8x8xi1>, vector<8x8xf32>
      %352 = vector.extract_strided_slice %307 {offsets = [8, 0], sizes = [8, 1], strides = [1, 1]} : vector<16x1xf32> to vector<8x1xf32>
      %cst_132 = arith.constant dense<0xFF800000> : vector<8xf32>
      %353 = vector.multi_reduction <maximumf>, %351, %cst_132 [1] : vector<8x8xf32> to vector<8xf32>
      %354 = vector.shape_cast %353 : vector<8xf32> to vector<8x1xf32>
      %355 = arith.maximumf %354, %352 : vector<8x1xf32>
      %356 = vector.broadcast %355 : vector<8x1xf32> to vector<8x8xf32>
      %357 = arith.subf %351, %356 : vector<8x8xf32>
      %358 = math.exp %357 : vector<8x8xf32>
      %359 = arith.subf %352, %355 : vector<8x1xf32>
      %360 = math.exp %359 : vector<8x1xf32>
      %cst_133 = arith.constant dense<0.000000e+00> : vector<8xf32>
      %361 = vector.multi_reduction <add>, %358, %cst_133 [1] : vector<8x8xf32> to vector<8xf32>
      %362 = vector.shape_cast %361 : vector<8xf32> to vector<8x1xf32>
      %363 = arith.addf %362, %360 : vector<8x1xf32>
      %364 = tpu.reciprocal %363 : vector<8x1xf32> -> vector<8x1xf32>
      %365 = arith.truncf %358 : vector<8x8xf32> to vector<8x8xbf16>
      %366 = vector.extract_strided_slice %292 {offsets = [0, 0], sizes = [8, 32], strides = [1, 1]} : vector<16x32xbf16> to vector<8x32xbf16>
      %cst_134 = arith.constant dense<0.000000e+00> : vector<8x32xf32>
      %367 = tpu.matmul %365, %366, %cst_134 {dimension_numbers = #tpu.dot_dimension_numbers<[1], [0], [0], [1], [0, 0, 1, 1], [], []>} : vector<8x8xbf16>, vector<8x32xbf16>, vector<8x32xf32> -> vector<8x32xf32>
      %368 = vector.extract_strided_slice %292 {offsets = [8, 0], sizes = [8, 32], strides = [1, 1]} : vector<16x32xbf16> to vector<8x32xbf16>
      %369 = arith.extf %368 : vector<8x32xbf16> to vector<8x32xf32>
      %370 = vector.broadcast %360 : vector<8x1xf32> to vector<8x32xf32>
      %371 = arith.mulf %370, %369 : vector<8x32xf32>
      %372 = arith.addf %367, %371 : vector<8x32xf32>
      %373 = vector.broadcast %364 : vector<8x1xf32> to vector<8x32xf32>
      %374 = arith.mulf %372, %373 : vector<8x32xf32>
      %375 = arith.addf %289, %374 : vector<8x32xf32>
      %c3_i32_135 = arith.constant 3 : i32
      %376 = arith.index_cast %c3_i32_135 : i32 to index
      %c0_136 = arith.constant 0 : index
      %c0_137 = arith.constant 0 : index
      %377 = vector.load %arg13[%376, %c0_136, %c0_137] : memref<4x16x32xbf16, #tpu.memory_space<vmem>>, vector<1x16x32xbf16>
      %378 = vector.shape_cast %377 : vector<1x16x32xbf16> to vector<16x32xbf16>
      %379 = arith.index_cast %c3_i32_135 : i32 to index
      %c0_138 = arith.constant 0 : index
      %c0_139 = arith.constant 0 : index
      %380 = vector.load %arg14[%379, %c0_138, %c0_139] : memref<4x1x16xf32, #tpu.memory_space<vmem>>, vector<1x1x16xf32>
      %381 = vector.shape_cast %380 : vector<1x1x16xf32> to vector<1x16xf32>
      %382 = arith.index_cast %c3_i32_135 : i32 to index
      %c0_140 = arith.constant 0 : index
      %c0_141 = arith.constant 0 : index
      %383 = vector.load %arg15[%382, %c0_140, %c0_141] : memref<8x16x1xf32, #tpu.memory_space<vmem>>, vector<1x16x1xf32>
      %384 = vector.shape_cast %383 : vector<1x16x1xf32> to vector<16x1xf32>
      %c4_i32_142 = arith.constant 4 : i32
      %385 = arith.addi %c4_i32_142, %c3_i32_135 : i32
      %386 = arith.index_cast %385 : i32 to index
      %c0_143 = arith.constant 0 : index
      %c0_144 = arith.constant 0 : index
      %387 = vector.load %arg15[%386, %c0_143, %c0_144] : memref<8x16x1xf32, #tpu.memory_space<vmem>>, vector<1x16x1xf32>
      %388 = vector.shape_cast %387 : vector<1x16x1xf32> to vector<16x1xf32>
      %cst_145 = arith.constant 0.000000e+00 : f32
      %389 = vector.broadcast %cst_145 : f32 to vector<16x1xf32>
      %390 = arith.cmpf ogt, %388, %389 : vector<16x1xf32>
      %cst_146 = arith.constant 2.000000e-01 : f32
      %391 = vector.broadcast %cst_146 : f32 to vector<16x1xf32>
      %392 = arith.mulf %391, %388 : vector<16x1xf32>
      %393 = arith.select %390, %388, %392 : vector<16x1xi1>, vector<16x1xf32>
      %394 = vector.extract_strided_slice %381 {offsets = [0, 8], sizes = [1, 8], strides = [1, 1]} : vector<1x16xf32> to vector<1x8xf32>
      %395 = vector.extract_strided_slice %384 {offsets = [0, 0], sizes = [8, 1], strides = [1, 1]} : vector<16x1xf32> to vector<8x1xf32>
      %396 = vector.broadcast %394 : vector<1x8xf32> to vector<8x8xf32>
      %397 = vector.broadcast %395 : vector<8x1xf32> to vector<8x8xf32>
      %398 = arith.addf %396, %397 : vector<8x8xf32>
      %cst_147 = arith.constant 0.000000e+00 : f32
      %399 = vector.broadcast %cst_147 : f32 to vector<8x8xf32>
      %400 = arith.cmpf ogt, %398, %399 : vector<8x8xf32>
      %cst_148 = arith.constant 2.000000e-01 : f32
      %401 = vector.broadcast %cst_148 : f32 to vector<8x8xf32>
      %402 = arith.mulf %401, %398 : vector<8x8xf32>
      %403 = arith.select %400, %398, %402 : vector<8x8xi1>, vector<8x8xf32>
      %404 = vector.extract_strided_slice %393 {offsets = [0, 0], sizes = [8, 1], strides = [1, 1]} : vector<16x1xf32> to vector<8x1xf32>
      %cst_149 = arith.constant dense<0xFF800000> : vector<8xf32>
      %405 = vector.multi_reduction <maximumf>, %403, %cst_149 [1] : vector<8x8xf32> to vector<8xf32>
      %406 = vector.shape_cast %405 : vector<8xf32> to vector<8x1xf32>
      %407 = arith.maximumf %406, %404 : vector<8x1xf32>
      %408 = vector.broadcast %407 : vector<8x1xf32> to vector<8x8xf32>
      %409 = arith.subf %403, %408 : vector<8x8xf32>
      %410 = math.exp %409 : vector<8x8xf32>
      %411 = arith.subf %404, %407 : vector<8x1xf32>
      %412 = math.exp %411 : vector<8x1xf32>
      %cst_150 = arith.constant dense<0.000000e+00> : vector<8xf32>
      %413 = vector.multi_reduction <add>, %410, %cst_150 [1] : vector<8x8xf32> to vector<8xf32>
      %414 = vector.shape_cast %413 : vector<8xf32> to vector<8x1xf32>
      %415 = arith.addf %414, %412 : vector<8x1xf32>
      %416 = tpu.reciprocal %415 : vector<8x1xf32> -> vector<8x1xf32>
      %417 = arith.truncf %410 : vector<8x8xf32> to vector<8x8xbf16>
      %418 = vector.extract_strided_slice %378 {offsets = [8, 0], sizes = [8, 32], strides = [1, 1]} : vector<16x32xbf16> to vector<8x32xbf16>
      %cst_151 = arith.constant dense<0.000000e+00> : vector<8x32xf32>
      %419 = tpu.matmul %417, %418, %cst_151 {dimension_numbers = #tpu.dot_dimension_numbers<[1], [0], [0], [1], [0, 0, 1, 1], [], []>} : vector<8x8xbf16>, vector<8x32xbf16>, vector<8x32xf32> -> vector<8x32xf32>
      %420 = vector.extract_strided_slice %378 {offsets = [0, 0], sizes = [8, 32], strides = [1, 1]} : vector<16x32xbf16> to vector<8x32xbf16>
      %421 = arith.extf %420 : vector<8x32xbf16> to vector<8x32xf32>
      %422 = vector.broadcast %412 : vector<8x1xf32> to vector<8x32xf32>
      %423 = arith.mulf %422, %421 : vector<8x32xf32>
      %424 = arith.addf %419, %423 : vector<8x32xf32>
      %425 = vector.broadcast %416 : vector<8x1xf32> to vector<8x32xf32>
      %426 = arith.mulf %424, %425 : vector<8x32xf32>
      %427 = arith.addf %341, %426 : vector<8x32xf32>
      %428 = vector.extract_strided_slice %381 {offsets = [0, 0], sizes = [1, 8], strides = [1, 1]} : vector<1x16xf32> to vector<1x8xf32>
      %429 = vector.extract_strided_slice %384 {offsets = [8, 0], sizes = [8, 1], strides = [1, 1]} : vector<16x1xf32> to vector<8x1xf32>
      %430 = vector.broadcast %428 : vector<1x8xf32> to vector<8x8xf32>
      %431 = vector.broadcast %429 : vector<8x1xf32> to vector<8x8xf32>
      %432 = arith.addf %430, %431 : vector<8x8xf32>
      %cst_152 = arith.constant 0.000000e+00 : f32
      %433 = vector.broadcast %cst_152 : f32 to vector<8x8xf32>
      %434 = arith.cmpf ogt, %432, %433 : vector<8x8xf32>
      %cst_153 = arith.constant 2.000000e-01 : f32
      %435 = vector.broadcast %cst_153 : f32 to vector<8x8xf32>
      %436 = arith.mulf %435, %432 : vector<8x8xf32>
      %437 = arith.select %434, %432, %436 : vector<8x8xi1>, vector<8x8xf32>
      %438 = vector.extract_strided_slice %393 {offsets = [8, 0], sizes = [8, 1], strides = [1, 1]} : vector<16x1xf32> to vector<8x1xf32>
      %cst_154 = arith.constant dense<0xFF800000> : vector<8xf32>
      %439 = vector.multi_reduction <maximumf>, %437, %cst_154 [1] : vector<8x8xf32> to vector<8xf32>
      %440 = vector.shape_cast %439 : vector<8xf32> to vector<8x1xf32>
      %441 = arith.maximumf %440, %438 : vector<8x1xf32>
      %442 = vector.broadcast %441 : vector<8x1xf32> to vector<8x8xf32>
      %443 = arith.subf %437, %442 : vector<8x8xf32>
      %444 = math.exp %443 : vector<8x8xf32>
      %445 = arith.subf %438, %441 : vector<8x1xf32>
      %446 = math.exp %445 : vector<8x1xf32>
      %cst_155 = arith.constant dense<0.000000e+00> : vector<8xf32>
      %447 = vector.multi_reduction <add>, %444, %cst_155 [1] : vector<8x8xf32> to vector<8xf32>
      %448 = vector.shape_cast %447 : vector<8xf32> to vector<8x1xf32>
      %449 = arith.addf %448, %446 : vector<8x1xf32>
      %450 = tpu.reciprocal %449 : vector<8x1xf32> -> vector<8x1xf32>
      %451 = arith.truncf %444 : vector<8x8xf32> to vector<8x8xbf16>
      %452 = vector.extract_strided_slice %378 {offsets = [0, 0], sizes = [8, 32], strides = [1, 1]} : vector<16x32xbf16> to vector<8x32xbf16>
      %cst_156 = arith.constant dense<0.000000e+00> : vector<8x32xf32>
      %453 = tpu.matmul %451, %452, %cst_156 {dimension_numbers = #tpu.dot_dimension_numbers<[1], [0], [0], [1], [0, 0, 1, 1], [], []>} : vector<8x8xbf16>, vector<8x32xbf16>, vector<8x32xf32> -> vector<8x32xf32>
      %454 = vector.extract_strided_slice %378 {offsets = [8, 0], sizes = [8, 32], strides = [1, 1]} : vector<16x32xbf16> to vector<8x32xbf16>
      %455 = arith.extf %454 : vector<8x32xbf16> to vector<8x32xf32>
      %456 = vector.broadcast %446 : vector<8x1xf32> to vector<8x32xf32>
      %457 = arith.mulf %456, %455 : vector<8x32xf32>
      %458 = arith.addf %453, %457 : vector<8x32xf32>
      %459 = vector.broadcast %450 : vector<8x1xf32> to vector<8x32xf32>
      %460 = arith.mulf %458, %459 : vector<8x32xf32>
      %461 = arith.addf %375, %460 : vector<8x32xf32>
      %c4_i32_157 = arith.constant 4 : i32
      %c0_158 = arith.constant 0 : index
      %c0_159 = arith.constant 0 : index
      %462 = vector.load %arg16[%c0_158, %c0_159] : memref<16x32xf32, #tpu.memory_space<vmem>>, vector<8x32xf32>
      tpu.vector_store %arg16[%c0_158, %c0_159], %427 {strides = array<i32>} : memref<16x32xf32, #tpu.memory_space<vmem>>, vector<8x32xf32>,
      %c8 = arith.constant 8 : index
      %c0_160 = arith.constant 0 : index
      %463 = vector.load %arg16[%c8, %c0_160] : memref<16x32xf32, #tpu.memory_space<vmem>>, vector<8x32xf32>
      tpu.vector_store %arg16[%c8, %c0_160], %461 {strides = array<i32>} : memref<16x32xf32, #tpu.memory_space<vmem>>, vector<8x32xf32>,
    } else {
    }
    %c0_49 = arith.constant 0 : index
    %c0_50 = arith.constant 0 : index
    %90 = vector.load %arg16[%c0_49, %c0_50] : memref<16x32xf32, #tpu.memory_space<vmem>>, vector<16x32xf32>
    %cst_51 = arith.constant 2.500000e-01 : f32
    %91 = vector.broadcast %cst_51 : f32 to vector<16x32xf32>
    %92 = arith.mulf %90, %91 : vector<16x32xf32>
    %c0_52 = arith.constant 0 : index
    %c0_53 = arith.constant 0 : index
    %c0_54 = arith.constant 0 : index
    %93 = vector.load %arg6[%c0_52, %c0_53, %c0_54] : memref<1x1x32xf32, #tpu.memory_space<vmem>>, vector<1x1x32xf32>
    %94 = vector.shape_cast %93 : vector<1x1x32xf32> to vector<1x32xf32>
    %95 = vector.broadcast %94 : vector<1x32xf32> to vector<16x32xf32>
    %96 = arith.addf %92, %95 : vector<16x32xf32>
    %cst_55 = arith.constant 0.000000e+00 : f32
    %97 = vector.broadcast %cst_55 : f32 to vector<16x32xf32>
    %98 = arith.maximumf %96, %97 : vector<16x32xf32>
    %c0_56 = arith.constant 0 : index
    %c0_57 = arith.constant 0 : index
    %c0_58 = arith.constant 0 : index
    %99 = vector.load %arg7[%c0_56, %c0_57, %c0_58] : memref<1x32x32xbf16, #tpu.memory_space<vmem>>, vector<1x32x32xbf16>
    %100 = vector.shape_cast %99 : vector<1x32x32xbf16> to vector<32x32xbf16>
    %cst_59 = arith.constant dense<0.000000e+00> : vector<16x32xf32>
    %101 = tpu.matmul %4, %100, %cst_59 {dimension_numbers = #tpu.dot_dimension_numbers<[1], [0], [0], [1], [0, 0, 1, 1], [], []>} : vector<16x32xbf16>, vector<32x32xbf16>, vector<16x32xf32> -> vector<16x32xf32>
    %102 = arith.truncf %98 : vector<16x32xf32> to vector<16x32xbf16>
    %c0_60 = arith.constant 0 : index
    %c0_61 = arith.constant 0 : index
    %c0_62 = arith.constant 0 : index
    %103 = vector.load %arg8[%c0_60, %c0_61, %c0_62] : memref<1x32x32xbf16, #tpu.memory_space<vmem>>, vector<1x32x32xbf16>
    %104 = vector.shape_cast %103 : vector<1x32x32xbf16> to vector<32x32xbf16>
    %cst_63 = arith.constant dense<0.000000e+00> : vector<16x32xf32>
    %105 = tpu.matmul %102, %104, %cst_63 {dimension_numbers = #tpu.dot_dimension_numbers<[1], [0], [0], [1], [0, 0, 1, 1], [], []>} : vector<16x32xbf16>, vector<32x32xbf16>, vector<16x32xf32> -> vector<16x32xf32>
    %106 = arith.addf %101, %105 : vector<16x32xf32>
    %c0_64 = arith.constant 0 : index
    %c0_65 = arith.constant 0 : index
    %c0_66 = arith.constant 0 : index
    %107 = vector.load %arg9[%c0_64, %c0_65, %c0_66] : memref<1x1x32xf32, #tpu.memory_space<vmem>>, vector<1x1x32xf32>
    %108 = vector.shape_cast %107 : vector<1x1x32xf32> to vector<1x32xf32>
    %109 = vector.broadcast %108 : vector<1x32xf32> to vector<16x32xf32>
    %110 = arith.addf %106, %109 : vector<16x32xf32>
    %111 = arith.addf %3, %110 : vector<16x32xf32>
    %c0_67 = arith.constant 0 : index
    %c0_68 = arith.constant 0 : index
    %112 = vector.load %arg12[%c0_67, %c0_68] : memref<16x32xf32, #tpu.memory_space<vmem>>, vector<16x32xf32>
    tpu.vector_store %arg12[%c0_67, %c0_68], %111 {strides = array<i32>} : memref<16x32xf32, #tpu.memory_space<vmem>>, vector<16x32xf32>,
    %c3_i32 = arith.constant 3 : i32
    %113 = arith.cmpi eq, %arg1, %c3_i32 : i32
    %114 = arith.extui %113 : i1 to i32
    %c0_i32_69 = arith.constant 0 : i32
    %115 = arith.cmpi ne, %114, %c0_i32_69 : i32
    scf.if %115 {
      %116 = vector.extract_strided_slice %111 {offsets = [0, 0], sizes = [8, 32], strides = [1, 1]} : vector<16x32xf32> to vector<8x32xf32>
      %117 = tpu.transpose %116, [1, 0] : vector<8x32xf32> -> vector<32x8xf32>
      %c0_70 = arith.constant 0 : index
      %c0_71 = arith.constant 0 : index
      %c0_72 = arith.constant 0 : index
      %118 = vector.load %arg10[%c0_70, %c0_71, %c0_72] : memref<1x32x8xf32, #tpu.memory_space<vmem>>, vector<1x32x8xf32>
      %119 = vector.shape_cast %118 : vector<1x32x8xf32> to vector<32x8xf32>
      %120 = vector.shape_cast %117 : vector<32x8xf32> to vector<1x32x8xf32>
      tpu.vector_store %arg10[%c0_70, %c0_71, %c0_72], %120 {strides = array<i32>} : memref<1x32x8xf32, #tpu.memory_space<vmem>>, vector<1x32x8xf32>,
      %121 = vector.extract_strided_slice %111 {offsets = [8, 0], sizes = [8, 32], strides = [1, 1]} : vector<16x32xf32> to vector<8x32xf32>
      %122 = tpu.transpose %121, [1, 0] : vector<8x32xf32> -> vector<32x8xf32>
      %c0_73 = arith.constant 0 : index
      %c0_74 = arith.constant 0 : index
      %c0_75 = arith.constant 0 : index
      %123 = vector.load %arg11[%c0_73, %c0_74, %c0_75] : memref<1x32x8xf32, #tpu.memory_space<vmem>>, vector<1x32x8xf32>
      %124 = vector.shape_cast %123 : vector<1x32x8xf32> to vector<32x8xf32>
      %125 = vector.shape_cast %122 : vector<32x8xf32> to vector<1x32x8xf32>
      tpu.vector_store %arg11[%c0_73, %c0_74, %c0_75], %125 {strides = array<i32>} : memref<1x32x8xf32, #tpu.memory_space<vmem>>, vector<1x32x8xf32>,
    } else {
    }
    return
  }
  func.func @transform_0(%arg0: i32, %arg1: i32, %arg2: memref<4xi32, #tpu.memory_space<smem>>) -> (i32, i32, i32) {
    %c0_i32 = arith.constant 0 : i32
    %c0_i32_0 = arith.constant 0 : i32
    %c0_i32_1 = arith.constant 0 : i32
    return %arg0, %c0_i32, %c0_i32_0 : i32, i32, i32
  }
  func.func @transform_1(%arg0: i32, %arg1: i32, %arg2: memref<4xi32, #tpu.memory_space<smem>>) -> (i32, i32, i32) {
    %c0_i32 = arith.constant 0 : i32
    %c0_i32_0 = arith.constant 0 : i32
    %c0_i32_1 = arith.constant 0 : i32
    return %arg0, %c0_i32, %c0_i32_0 : i32, i32, i32
  }
  func.func @transform_2(%arg0: i32, %arg1: i32, %arg2: memref<4xi32, #tpu.memory_space<smem>>) -> (i32, i32, i32) {
    %c0_i32 = arith.constant 0 : i32
    %c0_i32_0 = arith.constant 0 : i32
    %c0_i32_1 = arith.constant 0 : i32
    return %arg1, %c0_i32, %c0_i32_0 : i32, i32, i32
  }
  func.func @transform_3(%arg0: i32, %arg1: i32, %arg2: memref<4xi32, #tpu.memory_space<smem>>) -> (i32, i32, i32) {
    %c0_i32 = arith.constant 0 : i32
    %c0_i32_0 = arith.constant 0 : i32
    %c0_i32_1 = arith.constant 0 : i32
    return %arg1, %c0_i32, %c0_i32_0 : i32, i32, i32
  }
  func.func @transform_4(%arg0: i32, %arg1: i32, %arg2: memref<4xi32, #tpu.memory_space<smem>>) -> (i32, i32, i32) {
    %c0_i32 = arith.constant 0 : i32
    %c0_i32_0 = arith.constant 0 : i32
    %c0_i32_1 = arith.constant 0 : i32
    return %arg1, %c0_i32, %c0_i32_0 : i32, i32, i32
  }
  func.func @transform_5(%arg0: i32, %arg1: i32, %arg2: memref<4xi32, #tpu.memory_space<smem>>) -> (i32, i32, i32) {
    %c0_i32 = arith.constant 0 : i32
    %c0_i32_0 = arith.constant 0 : i32
    %c0_i32_1 = arith.constant 0 : i32
    return %arg1, %c0_i32, %c0_i32_0 : i32, i32, i32
  }
  func.func @transform_6(%arg0: i32, %arg1: i32, %arg2: memref<4xi32, #tpu.memory_space<smem>>) -> (i32, i32, i32) {
    %c0_i32 = arith.constant 0 : i32
    %c0_i32_0 = arith.constant 0 : i32
    %c0_i32_1 = arith.constant 0 : i32
    return %arg1, %c0_i32, %c0_i32_0 : i32, i32, i32
  }
  func.func @transform_7(%arg0: i32, %arg1: i32, %arg2: memref<4xi32, #tpu.memory_space<smem>>) -> (i32, i32, i32) {
    %c0_i32 = arith.constant 0 : i32
    %c0_i32_0 = arith.constant 0 : i32
    %c0_i32_1 = arith.constant 0 : i32
    return %arg0, %c0_i32, %c0_i32_0 : i32, i32, i32
  }
  func.func @transform_8(%arg0: i32, %arg1: i32, %arg2: memref<4xi32, #tpu.memory_space<smem>>) -> (i32, i32, i32) {
    %c0_i32 = arith.constant 0 : i32
    %c0_i32_0 = arith.constant 0 : i32
    %c0_i32_1 = arith.constant 0 : i32
    return %arg0, %c0_i32, %c0_i32_0 : i32, i32, i32
  }
}

</mosaic_0001>

<llo_original>
// kernel: tpu_custom_call.1
$region0: #{tpu_custom_call.1}
  #allocation0 [shape = 'u32[]', space=smem, size = 0x4, offset = 0x4, fixed_abs, tag = 'smem constant byte address 0x4 - core index']
  #allocation1 [shape = 'u32[144,128]{1,0:T(1,128)}', space=vmem, size = 0x12000, scoped, tag = 'internal scratch']
  #allocation2 [shape = 'f32[16,32]{1,0:T(8,128)}', space=vmem, size = 0x2000, scoped, tag = 'scratch operand']
  #allocation3 [shape = 'bf16[4,16,32]{2,1,0:T(8,128)(2,1)}', space=vmem, size = 0x4000, scoped, tag = 'scratch operand']
  #allocation4 [shape = 'f32[4,1,16]{2,1,0:T(1,128)}', space=vmem, size = 0x800, scoped, tag = 'scratch operand']
  #allocation5 [shape = 'f32[8,16,1]{2,1,0:T(8,128)}', space=vmem, size = 0x10000, scoped, tag = 'scratch operand']
  #allocation6 [shape = 'f32[16,32]{1,0:T(8,128)}', space=vmem, size = 0x2000, scoped, tag = 'scratch operand']
  #allocation7 [shape = 's32[1]{0}', space=sflag, size = 0x4, scoped, tag = 'scoped memory for tpu_custom_call.1']
  #allocation8 [shape = 'u8[512]{0}', space=smem, size = 0x200, scoped, tag = 'prefetched SMEM operand 0']
  %s0 = inlined_call_operand.vmem [shape: s32[4], index: 0, kind: input, shape index: {}]
  %s1 = inlined_call_operand.vmem [shape: f32[2,32,8], index: 1, kind: input, shape index: {}]
  %s2 = inlined_call_operand.vmem [shape: f32[2,32,8], index: 2, kind: input, shape index: {}]
  %s3 = inlined_call_operand.vmem [shape: bf16[4,32,256], index: 3, kind: input, shape index: {}]
  %s4 = inlined_call_operand.vmem [shape: f32[4,1,32], index: 4, kind: input, shape index: {}]
  %s5 = inlined_call_operand.hbm [shape: bf16[4,32,32], index: 5, kind: input, shape index: {}]
  %s6 = inlined_call_operand.hbm [shape: bf16[4,32,32], index: 6, kind: input, shape index: {}]
  %s7 = inlined_call_operand.vmem [shape: f32[4,1,32], index: 7, kind: input, shape index: {}]
  %s8 = inlined_call_operand.vmem [shape: f32[2,32,8], index: 8, kind: output, shape index: {0}]
  %s9 = inlined_call_operand.vmem [shape: f32[2,32,8], index: 9, kind: output, shape index: {1}]
  %10 = xla_tuple %s8, %s9
  %s11 = sld [smem:[#allocation0]]
  $region93: #{tpu_custom_call.1} parent=0
    _
  %s13 = ssub.s32 1, %s11
  %s14 = scalar_select 0, %s13, %s11
  %s15 = sshll.u32 %s0, 4
  %s16 = int_to_ptr.vmem [resolvable:$true] %s15
  %18 = dma.vmem_to_smem %s16, 16, [#allocation8], [#allocation7]
  %19 = dma.done [#allocation7], 16
  %20 = sfence
  $region1: #{tpu_custom_call.1} parent=0
    #allocation9 [shape = 'u8[16384]{0}', space=vmem, size = 0x4000, scoped, tag = 'input window, operand 5']
    #allocation10 [shape = 's32[2]{0}', space=sflag, size = 0x8, scoped, tag = 'scoped memory for tpu_custom_call.1']
    #allocation11 [shape = 'u8[16384]{0}', space=vmem, size = 0x4000, scoped, tag = 'input window, operand 6']
    #allocation12 [shape = 's32[2]{0}', space=sflag, size = 0x8, scoped, tag = 'scoped memory for tpu_custom_call.1']
    %21 = vsyncpa [#allocation10], 0
    %s22 = scalar_lea.sflag [#allocation10], 1
    %23 = vsyncpa %s22, 0
    %24 = vsyncpa [#allocation12], 0
    %s25 = scalar_lea.sflag [#allocation12], 1
    %26 = vsyncpa %s25, 0
    loop: start=0, step=1, limit=10
    $region2: #{tpu_custom_call.1} parent=1 // loop_pre_header
      _
    $region3: #{tpu_custom_call.1} parent=1 // loop_header
      %s28 = sphi 0, %s32
      %p29 = scmp.ge.s32.totalorder %s28, 10
      %s35 = sphi 0, %s47
      %s36 = sphi 0, %s43
      %s37 = sphi 0, %s35
      %s38 = sphi 0, %s36
      %s39 = sphi 0, %s37
      %s40 = sphi 0, %s38
      %s50 = sphi 0, %s52
      %s53 = sphi 0, %s50
      %s54 = sphi 0, %s53
      %s70 = sphi 0, %s54
      %s76 = sphi 0, %s78
      %s79 = sphi 0, %s76
      %s80 = sphi 0, %s79
      %s96 = sphi 0, %s80
      %s102 = sphi 0, %s104
      %s105 = sphi 0, %s102
      %s106 = sphi 0, %s105
      %s122 = sphi 0, %s106
      %s128 = sphi 0, %s130
      %s131 = sphi 0, %s128
      %s132 = sphi 0, %s131
      %s148 = sphi 0, %s132
      %s154 = sphi 0, %s156
      %s157 = sphi 0, %s154
      %s158 = sphi 0, %s157
      %s174 = sphi 0, %s158
      %s180 = sphi 0, %s182
      %s183 = sphi 0, %s180
      %s184 = sphi 0, %s183
      %s200 = sphi 0, %s184
      %s206 = sphi 0, %s208
      %s209 = sphi 0, %s206
      %s210 = sphi 0, %s209
      %s226 = sphi 0, %s210
      %s232 = sphi 0, %s234
      %s235 = sphi 0, %s232
      %s236 = sphi 0, %s235
      %s252 = sphi 0, %s236
      %s258 = sphi 0, %s260
      %s261 = sphi 0, %s258
      %s262 = sphi 0, %s261
      %s278 = sphi 0, %s262
    $region4: #{tpu_custom_call.1} parent=1 // loop_header_branch
      %31 = sbr.rel (%p29) target = $region8
    $region5: #{tpu_custom_call.1} parent=1 // loop_body
      %s33 = ssub.s32 %s28, 1
      %s34 = ssub.s32 %s28, 2
      %s41 = sadd.s32 1, %s36
      %p42 = scmp.ge.s32.totalorder %s41, 4
      %s43 = scalar_select %p42, 0, %s41
      %s44 = sadd.s32 1, %s35
      %s45 = scalar_select %p42, %s44, %s35
      %p46 = scmp.ge.s32.totalorder %s45, 2
      %s47 = scalar_select %p46, 0, %s45
      %s48 = ssub.s32 %s35, %s47
      %p49 = scmp.eq.s32.totalorder %s48, 0
      %s51 = sadd.s32 %s50, 1
      %s52 = scalar_select %p49, %s50, %s51
      %p55 = pneg %p49
      %p56 = scmp.eq.s32.totalorder %s28, 7
      %p57 = por %p55, %p56
      %p58 = scmp.ne.s32.totalorder %s50, %s53
      %p59 = scmp.eq.s32.totalorder %s28, 0
      %p60 = por %p58, %p59
      %p61 = scmp.ne.s32.totalorder %s50, %s53
      %p62 = scmp.eq.s32.totalorder %s33, 7
      %p63 = por %p61, %p62
      %p64 = scmp.ne.s32.totalorder %s53, %s54
      %p65 = scmp.eq.s32.totalorder %s33, 0
      %p66 = por %p64, %p65
      %p67 = scmp.ne.s32.totalorder %s53, %s54
      %p68 = scmp.eq.s32.totalorder %s34, 7
      %p69 = por %p67, %p68
      %p71 = scmp.ne.s32.totalorder %s54, %s70
      %p72 = scmp.eq.s32.totalorder %s34, 0
      %p73 = por %p71, %p72
      %s74 = ssub.s32 %s35, %s47
      %p75 = scmp.eq.s32.totalorder %s74, 0
      %s77 = sadd.s32 %s76, 1
      %s78 = scalar_select %p75, %s76, %s77
      %p81 = pneg %p75
      %p82 = scmp.eq.s32.totalorder %s28, 7
      %p83 = por %p81, %p82
      %p84 = scmp.ne.s32.totalorder %s76, %s79
      %p85 = scmp.eq.s32.totalorder %s28, 0
      %p86 = por %p84, %p85
      %p87 = scmp.ne.s32.totalorder %s76, %s79
      %p88 = scmp.eq.s32.totalorder %s33, 7
      %p89 = por %p87, %p88
      %p90 = scmp.ne.s32.totalorder %s79, %s80
      %p91 = scmp.eq.s32.totalorder %s33, 0
      %p92 = por %p90, %p91
      %p93 = scmp.ne.s32.totalorder %s79, %s80
      %p94 = scmp.eq.s32.totalorder %s34, 7
      %p95 = por %p93, %p94
      %p97 = scmp.ne.s32.totalorder %s80, %s96
      %p98 = scmp.eq.s32.totalorder %s34, 0
      %p99 = por %p97, %p98
      %s100 = ssub.s32 %s36, %s43
      %p101 = scmp.eq.s32.totalorder %s100, 0
      %s103 = sadd.s32 %s102, 1
      %s104 = scalar_select %p101, %s102, %s103
      %p107 = pneg %p101
      %p108 = scmp.eq.s32.totalorder %s28, 7
      %p109 = por %p107, %p108
      %p110 = scmp.ne.s32.totalorder %s102, %s105
      %p111 = scmp.eq.s32.totalorder %s28, 0
      %p112 = por %p110, %p111
      %p113 = scmp.ne.s32.totalorder %s102, %s105
      %p114 = scmp.eq.s32.totalorder %s33, 7
      %p115 = por %p113, %p114
      %p116 = scmp.ne.s32.totalorder %s105, %s106
      %p117 = scmp.eq.s32.totalorder %s33, 0
      %p118 = por %p116, %p117
      %p119 = scmp.ne.s32.totalorder %s105, %s106
      %p120 = scmp.eq.s32.totalorder %s34, 7
      %p121 = por %p119, %p120
      %p123 = scmp.ne.s32.totalorder %s106, %s122
      %p124 = scmp.eq.s32.totalorder %s34, 0
      %p125 = por %p123, %p124
      %s126 = ssub.s32 %s36, %s43
      %p127 = scmp.eq.s32.totalorder %s126, 0
      %s129 = sadd.s32 %s128, 1
      %s130 = scalar_select %p127, %s128, %s129
      %p133 = pneg %p127
      %p134 = scmp.eq.s32.totalorder %s28, 7
      %p135 = por %p133, %p134
      %p136 = scmp.ne.s32.totalorder %s128, %s131
      %p137 = scmp.eq.s32.totalorder %s28, 0
      %p138 = por %p136, %p137
      %p139 = scmp.ne.s32.totalorder %s128, %s131
      %p140 = scmp.eq.s32.totalorder %s33, 7
      %p141 = por %p139, %p140
      %p142 = scmp.ne.s32.totalorder %s131, %s132
      %p143 = scmp.eq.s32.totalorder %s33, 0
      %p144 = por %p142, %p143
      %p145 = scmp.ne.s32.totalorder %s131, %s132
      %p146 = scmp.eq.s32.totalorder %s34, 7
      %p147 = por %p145, %p146
      %p149 = scmp.ne.s32.totalorder %s132, %s148
      %p150 = scmp.eq.s32.totalorder %s34, 0
      %p151 = por %p149, %p150
      %s152 = ssub.s32 %s36, %s43
      %p153 = scmp.eq.s32.totalorder %s152, 0
      %s155 = sadd.s32 %s154, 1
      %s156 = scalar_select %p153, %s154, %s155
      %p159 = pneg %p153
      %p160 = scmp.eq.s32.totalorder %s28, 7
      %p161 = por %p159, %p160
      %p162 = scmp.ne.s32.totalorder %s154, %s157
      %p163 = scmp.eq.s32.totalorder %s28, 0
      %p164 = por %p162, %p163
      %p165 = scmp.ne.s32.totalorder %s154, %s157
      %p166 = scmp.eq.s32.totalorder %s33, 7
      %p167 = por %p165, %p166
      %p168 = scmp.ne.s32.totalorder %s157, %s158
      %p169 = scmp.eq.s32.totalorder %s33, 0
      %p170 = por %p168, %p169
      %p171 = scmp.ne.s32.totalorder %s157, %s158
      %p172 = scmp.eq.s32.totalorder %s34, 7
      %p173 = por %p171, %p172
      %p175 = scmp.ne.s32.totalorder %s158, %s174
      %p176 = scmp.eq.s32.totalorder %s34, 0
      %p177 = por %p175, %p176
      %s178 = ssub.s32 %s36, %s43
      %p179 = scmp.eq.s32.totalorder %s178, 0
      %s181 = sadd.s32 %s180, 1
      %s182 = scalar_select %p179, %s180, %s181
      %p185 = pneg %p179
      %p186 = scmp.eq.s32.totalorder %s28, 7
      %p187 = por %p185, %p186
      %p188 = scmp.ne.s32.totalorder %s180, %s183
      %p189 = scmp.eq.s32.totalorder %s28, 0
      %p190 = por %p188, %p189
      %p191 = scmp.ne.s32.totalorder %s180, %s183
      %p192 = scmp.eq.s32.totalorder %s33, 7
      %p193 = por %p191, %p192
      %p194 = scmp.ne.s32.totalorder %s183, %s184
      %p195 = scmp.eq.s32.totalorder %s33, 0
      %p196 = por %p194, %p195
      %p197 = scmp.ne.s32.totalorder %s183, %s184
      %p198 = scmp.eq.s32.totalorder %s34, 7
      %p199 = por %p197, %p198
      %p201 = scmp.ne.s32.totalorder %s184, %s200
      %p202 = scmp.eq.s32.totalorder %s34, 0
      %p203 = por %p201, %p202
      %s204 = ssub.s32 %s36, %s43
      %p205 = scmp.eq.s32.totalorder %s204, 0
      %s207 = sadd.s32 %s206, 1
      %s208 = scalar_select %p205, %s206, %s207
      %p211 = pneg %p205
      %p212 = scmp.eq.s32.totalorder %s28, 7
      %p213 = por %p211, %p212
      %p214 = scmp.ne.s32.totalorder %s206, %s209
      %p215 = scmp.eq.s32.totalorder %s28, 0
      %p216 = por %p214, %p215
      %p217 = scmp.ne.s32.totalorder %s206, %s209
      %p218 = scmp.eq.s32.totalorder %s33, 7
      %p219 = por %p217, %p218
      %p220 = scmp.ne.s32.totalorder %s209, %s210
      %p221 = scmp.eq.s32.totalorder %s33, 0
      %p222 = por %p220, %p221
      %p223 = scmp.ne.s32.totalorder %s209, %s210
      %p224 = scmp.eq.s32.totalorder %s34, 7
      %p225 = por %p223, %p224
      %p227 = scmp.ne.s32.totalorder %s210, %s226
      %p228 = scmp.eq.s32.totalorder %s34, 0
      %p229 = por %p227, %p228
      %s230 = ssub.s32 %s35, %s47
      %p231 = scmp.eq.s32.totalorder %s230, 0
      %s233 = sadd.s32 %s232, 1
      %s234 = scalar_select %p231, %s232, %s233
      %p237 = pneg %p231
      %p238 = scmp.eq.s32.totalorder %s28, 7
      %p239 = por %p237, %p238
      %p240 = scmp.ne.s32.totalorder %s232, %s235
      %p241 = scmp.eq.s32.totalorder %s28, 0
      %p242 = por %p240, %p241
      %p243 = scmp.ne.s32.totalorder %s232, %s235
      %p244 = scmp.eq.s32.totalorder %s33, 7
      %p245 = por %p243, %p244
      %p246 = scmp.ne.s32.totalorder %s235, %s236
      %p247 = scmp.eq.s32.totalorder %s33, 0
      %p248 = por %p246, %p247
      %p249 = scmp.ne.s32.totalorder %s235, %s236
      %p250 = scmp.eq.s32.totalorder %s34, 7
      %p251 = por %p249, %p250
      %p253 = scmp.ne.s32.totalorder %s236, %s252
      %p254 = scmp.eq.s32.totalorder %s34, 0
      %p255 = por %p253, %p254
      %s256 = ssub.s32 %s35, %s47
      %p257 = scmp.eq.s32.totalorder %s256, 0
      %s259 = sadd.s32 %s258, 1
      %s260 = scalar_select %p257, %s258, %s259
      %p263 = pneg %p257
      %p264 = scmp.eq.s32.totalorder %s28, 7
      %p265 = por %p263, %p264
      %p266 = scmp.ne.s32.totalorder %s258, %s261
      %p267 = scmp.eq.s32.totalorder %s28, 0
      %p268 = por %p266, %p267
      %p269 = scmp.ne.s32.totalorder %s258, %s261
      %p270 = scmp.eq.s32.totalorder %s33, 7
      %p271 = por %p269, %p270
      %p272 = scmp.ne.s32.totalorder %s261, %s262
      %p273 = scmp.eq.s32.totalorder %s33, 0
      %p274 = por %p272, %p273
      %p275 = scmp.ne.s32.totalorder %s261, %s262
      %p276 = scmp.eq.s32.totalorder %s34, 7
      %p277 = por %p275, %p276
      %p279 = scmp.ne.s32.totalorder %s262, %s278
      %p280 = scmp.eq.s32.totalorder %s34, 0
      %p281 = por %p279, %p280
      %p282 = scmp.le.s32.totalorder 1, %s28
      %p283 = scmp.lt.s32.totalorder %s28, 9
      %p284 = pnand %p282, %p283
      %p285 = pneg %p284
      // Predicated region
      $region9: #{tpu_custom_call.1} parent=5 // pred_check
        _
      $region10: #{tpu_custom_call.1} parent=5 // pred_check_branch
        %287 = sbr.rel (%p284) target = $region12
      $region11: #{tpu_custom_call.1} parent=5 // pred_region
        %s288 = ssub.s32 %s28, 1
      $region12: #{tpu_custom_call.1} parent=5 // pred_fallthru
        _
      %p289 = scmp.lt.s32.totalorder %s28, 8
      // Predicated region
      $region13: #{tpu_custom_call.1} parent=5 // pred_check
        %p290 = pneg %p289
      $region14: #{tpu_custom_call.1} parent=5 // pred_check_branch
        %292 = sbr.rel (%p290) target = $region16
      $region15: #{tpu_custom_call.1} parent=5 // pred_region
        // Predicated region
        $region17: #{tpu_custom_call.1} parent=15 // pred_check
          %p293 = pneg %p60
        $region18: #{tpu_custom_call.1} parent=15 // pred_check_branch
          %295 = sbr.rel (%p293) target = $region20
        $region19: #{tpu_custom_call.1} parent=15 // pred_region
          %p296 = scmp.lt.s32.totalorder %s35, 1
          %s297 = scalar_select %p296, %s35, 1
          %s298 = smul.addr %s297, 4
          %s299 = smul.addr %s298, 8
          %s300 = scalar_lea.vmem %s1, %s299
        $region20: #{tpu_custom_call.1} parent=15 // pred_fallthru
          _
        // Predicated region
        $region21: #{tpu_custom_call.1} parent=15 // pred_check
          %p301 = pneg %p86
        $region22: #{tpu_custom_call.1} parent=15 // pred_check_branch
          %303 = sbr.rel (%p301) target = $region24
        $region23: #{tpu_custom_call.1} parent=15 // pred_region
          %p304 = scmp.lt.s32.totalorder %s35, 1
          %s305 = scalar_select %p304, %s35, 1
          %s306 = smul.addr %s305, 4
          %s307 = smul.addr %s306, 8
          %s308 = scalar_lea.vmem %s2, %s307
        $region24: #{tpu_custom_call.1} parent=15 // pred_fallthru
          _
        // Predicated region
        $region25: #{tpu_custom_call.1} parent=15 // pred_check
          %p309 = pneg %p112
        $region26: #{tpu_custom_call.1} parent=15 // pred_check_branch
          %311 = sbr.rel (%p309) target = $region28
        $region27: #{tpu_custom_call.1} parent=15 // pred_region
          %p312 = scmp.lt.s32.totalorder %s36, 3
          %s313 = scalar_select %p312, %s36, 3
          %s314 = smul.addr %s313, 8
          %s315 = smul.addr %s314, 4
          %s316 = scalar_lea.vmem %s3, %s315
        $region28: #{tpu_custom_call.1} parent=15 // pred_fallthru
          _
        // Predicated region
        $region29: #{tpu_custom_call.1} parent=15 // pred_check
          %p317 = pneg %p138
        $region30: #{tpu_custom_call.1} parent=15 // pred_check_branch
          %319 = sbr.rel (%p317) target = $region32
        $region31: #{tpu_custom_call.1} parent=15 // pred_region
          %p320 = scmp.lt.s32.totalorder %s36, 3
          %s321 = scalar_select %p320, %s36, 3
          %s322 = scalar_lea.vmem %s4, %s321
        $region32: #{tpu_custom_call.1} parent=15 // pred_fallthru
          _
        // Predicated region
        $region33: #{tpu_custom_call.1} parent=15 // pred_check
          %p323 = pneg %p164
        $region34: #{tpu_custom_call.1} parent=15 // pred_check_branch
          %325 = sbr.rel (%p323) target = $region36
        $region35: #{tpu_custom_call.1} parent=15 // pred_region
          %s326 = sand.u32 %s154, 1
          %s327 = scalar_lea.sflag [#allocation10], %s326
          %s328 = sand.u32 %s154, 1
          %s329 = smul.addr %s328, 16
          %s330 = scalar_lea.vmem [#allocation9], %s329
          %s332 = ssub.s32 256, 256
          %333 = vsyncadd %s327, %s332
          %s334 = smul.addr %s36, 4
          %s335 = smul.addr %s334, 64
          %s336 = scalar_lea.hbm %s5, %s335
          %s337 = sshll.u32 %s330, 4
          %s338 = int_to_ptr.vmem [resolvable:$true] %s337
          %343 = dma.hbm_to_vmem [thread:$0]  %s336, 256, %s338, %s327, 64, 64, 4
        $region36: #{tpu_custom_call.1} parent=15 // pred_fallthru
          _
        // Predicated region
        $region37: #{tpu_custom_call.1} parent=15 // pred_check
          %p344 = pneg %p190
        $region38: #{tpu_custom_call.1} parent=15 // pred_check_branch
          %346 = sbr.rel (%p344) target = $region40
        $region39: #{tpu_custom_call.1} parent=15 // pred_region
          %s347 = sand.u32 %s180, 1
          %s348 = scalar_lea.sflag [#allocation12], %s347
          %s349 = sand.u32 %s180, 1
          %s350 = smul.addr %s349, 16
          %s351 = scalar_lea.vmem [#allocation11], %s350
          %s353 = ssub.s32 256, 256
          %354 = vsyncadd %s348, %s353
          %s355 = smul.addr %s36, 4
          %s356 = smul.addr %s355, 64
          %s357 = scalar_lea.hbm %s6, %s356
          %s358 = sshll.u32 %s351, 4
          %s359 = int_to_ptr.vmem [resolvable:$true] %s358
          %364 = dma.hbm_to_vmem [thread:$0]  %s357, 256, %s359, %s348, 64, 64, 4
        $region40: #{tpu_custom_call.1} parent=15 // pred_fallthru
          _
        // Predicated region
        $region41: #{tpu_custom_call.1} parent=15 // pred_check
          %p365 = pneg %p216
        $region42: #{tpu_custom_call.1} parent=15 // pred_check_branch
          %367 = sbr.rel (%p365) target = $region44
        $region43: #{tpu_custom_call.1} parent=15 // pred_region
          %p368 = scmp.lt.s32.totalorder %s36, 3
          %s369 = scalar_select %p368, %s36, 3
          %s370 = scalar_lea.vmem %s7, %s369
        $region44: #{tpu_custom_call.1} parent=15 // pred_fallthru
          _
      $region16: #{tpu_custom_call.1} parent=5 // pred_fallthru
        _
      %p371 = scmp.le.s32.totalorder 1, %s28
      %p372 = scmp.lt.s32.totalorder %s28, 9
      %p373 = pnand %p371, %p372
      %p374 = pneg %p373
      // Predicated region
      $region45: #{tpu_custom_call.1} parent=5 // pred_check
        _
      $region46: #{tpu_custom_call.1} parent=5 // pred_check_branch
        %376 = sbr.rel (%p373) target = $region48
      $region47: #{tpu_custom_call.1} parent=5 // pred_region
        %s377 = ssub.s32 %s28, 1
        %s378 = sand.u32 %s157, 1
        %s379 = scalar_lea.sflag [#allocation10], %s378
        %s380 = sand.u32 %s157, 1
        %s381 = smul.addr %s380, 16
        %s382 = scalar_lea.vmem [#allocation9], %s381
        // Predicated region
        $region49: #{tpu_custom_call.1} parent=47 // pred_check
          %p383 = pneg %p170
        $region50: #{tpu_custom_call.1} parent=47 // pred_check_branch
          %385 = sbr.rel (%p383) target = $region52
        $region51: #{tpu_custom_call.1} parent=47 // pred_region
          %386 = dma.done %s379, 256
        $region52: #{tpu_custom_call.1} parent=47 // pred_fallthru
          _
        %s387 = sand.u32 %s183, 1
        %s388 = scalar_lea.sflag [#allocation12], %s387
        %s389 = sand.u32 %s183, 1
        %s390 = smul.addr %s389, 16
        %s391 = scalar_lea.vmem [#allocation11], %s390
        // Predicated region
        $region53: #{tpu_custom_call.1} parent=47 // pred_check
          %p392 = pneg %p196
        $region54: #{tpu_custom_call.1} parent=47 // pred_check_branch
          %394 = sbr.rel (%p392) target = $region56
        $region55: #{tpu_custom_call.1} parent=47 // pred_region
          %395 = dma.done %s388, 256
        $region56: #{tpu_custom_call.1} parent=47 // pred_fallthru
          _
        %p396 = scmp.lt.s32.totalorder %s37, 1
        %s397 = scalar_select %p396, %s37, 1
        %s398 = smul.addr %s397, 4
        %s399 = smul.addr %s398, 8
        %s400 = scalar_lea.vmem %s1, %s399
        %p401 = pneg %p66
        %p402 = pneg %p63
        %p403 = scmp.lt.s32.totalorder %s37, 1
        %s404 = scalar_select %p403, %s37, 1
        %s405 = smul.addr %s404, 4
        %s406 = smul.addr %s405, 8
        %s407 = scalar_lea.vmem %s2, %s406
        %p408 = pneg %p92
        %p409 = pneg %p89
        %p410 = scmp.lt.s32.totalorder %s38, 3
        %s411 = scalar_select %p410, %s38, 3
        %s412 = smul.addr %s411, 8
        %s413 = smul.addr %s412, 4
        %s414 = scalar_lea.vmem %s3, %s413
        %p415 = pneg %p118
        %p416 = pneg %p115
        %p417 = scmp.lt.s32.totalorder %s38, 3
        %s418 = scalar_select %p417, %s38, 3
        %s419 = scalar_lea.vmem %s4, %s418
        %p420 = pneg %p144
        %p421 = pneg %p141
        %s422 = sand.u32 %s157, 1
        %s423 = scalar_lea.sflag [#allocation10], %s422
        %s424 = sand.u32 %s157, 1
        %s425 = smul.addr %s424, 16
        %s426 = scalar_lea.vmem [#allocation9], %s425
        %p427 = pneg %p170
        %p428 = pneg %p167
        %s429 = sand.u32 %s183, 1
        %s430 = scalar_lea.sflag [#allocation12], %s429
        %s431 = sand.u32 %s183, 1
        %s432 = smul.addr %s431, 16
        %s433 = scalar_lea.vmem [#allocation11], %s432
        %p434 = pneg %p196
        %p435 = pneg %p193
        %p436 = scmp.lt.s32.totalorder %s38, 3
        %s437 = scalar_select %p436, %s38, 3
        %s438 = scalar_lea.vmem %s7, %s437
        %p439 = pneg %p222
        %p440 = pneg %p219
        %p441 = pneg %p248
        %p442 = pneg %p245
        %p443 = scmp.lt.s32.totalorder %s37, 1
        %s444 = scalar_select %p443, %s37, 1
        %s445 = smul.addr %s444, 4
        %s446 = smul.addr %s445, 8
        %s447 = scalar_lea.vmem %s8, %s446
        %p448 = pneg %p274
        %p449 = pneg %p271
        %p450 = scmp.lt.s32.totalorder %s37, 1
        %s451 = scalar_select %p450, %s37, 1
        %s452 = smul.addr %s451, 4
        %s453 = smul.addr %s452, 8
        %s454 = scalar_lea.vmem %s9, %s453
        %p455 = scmp.lt.s32.totalorder %s37, 1
        %s456 = scalar_select %p455, %s37, 1
        %s457 = smul.addr %s456, 4
        %s458 = smul.addr %s457, 8
        %s459 = scalar_lea.vmem %s1, %s458
        %p460 = scmp.lt.s32.totalorder %s37, 1
        %s461 = scalar_select %p460, %s37, 1
        %s462 = smul.addr %s461, 4
        %s463 = smul.addr %s462, 8
        %s464 = scalar_lea.vmem %s2, %s463
        %p465 = scmp.lt.s32.totalorder %s38, 3
        %s466 = scalar_select %p465, %s38, 3
        %s467 = smul.addr %s466, 8
        %s468 = smul.addr %s467, 4
        %s469 = scalar_lea.vmem %s3, %s468
        %p470 = scmp.lt.s32.totalorder %s38, 3
        %s471 = scalar_select %p470, %s38, 3
        %s472 = scalar_lea.vmem %s4, %s471
        %p473 = scmp.lt.s32.totalorder %s38, 3
        %s474 = scalar_select %p473, %s38, 3
        %s475 = scalar_lea.vmem %s7, %s474
        %p476 = scmp.lt.s32.totalorder %s37, 1
        %s477 = scalar_select %p476, %s37, 1
        %s478 = smul.addr %s477, 4
        %s479 = smul.addr %s478, 8
        %s480 = scalar_lea.vmem %s8, %s479
        %p481 = scmp.lt.s32.totalorder %s37, 1
        %s482 = scalar_select %p481, %s37, 1
        %s483 = smul.addr %s482, 4
        %s484 = smul.addr %s483, 8
        %s485 = scalar_lea.vmem %s9, %s484
        %p487 = scmp.eq.s32.totalorder %s38, 0
        // Predicated region
        $region57: #{tpu_custom_call.1} parent=47 // pred_check
          %p488 = pneg %p487
        $region58: #{tpu_custom_call.1} parent=47 // pred_check_branch
          %490 = sbr.rel (%p488) target = $region60
        $region59: #{tpu_custom_call.1} parent=47 // pred_region
          %v491 = vld [vmem:[%s459] sm:$0xff]
          %v492 = vld [vmem:[%s459 + $0x8] sm:$0xff]
          %v493 = vld [vmem:[%s459 + $0x10] sm:$0xff]
          %v494 = vld [vmem:[%s459 + $0x18] sm:$0xff]
          %495 = vxpose.xlu0.b32.start [1/16] %v491, 128
          %496 = vxpose.xlu0.b32.cont [2/16] %v492, 128
          %497 = vxpose.xlu0.b32.cont [3/16] %v493, 128
          %498 = vxpose.xlu0.b32.cont [4/16] %v494, 128
          %499 = vxpose.xlu0.b32.cont [5/16] 0.0, 128
          %500 = vxpose.xlu0.b32.cont [6/16] 0.0, 128
          %501 = vxpose.xlu0.b32.cont [7/16] 0.0, 128
          %502 = vxpose.xlu0.b32.cont [8/16] 0.0, 128
          %503 = vxpose.xlu0.b32.cont [9/16] 0.0, 128
          %504 = vxpose.xlu0.b32.cont [10/16] 0.0, 128
          %505 = vxpose.xlu0.b32.cont [11/16] 0.0, 128
          %506 = vxpose.xlu0.b32.cont [12/16] 0.0, 128
          %507 = vxpose.xlu0.b32.cont [13/16] 0.0, 128
          %508 = vxpose.xlu0.b32.cont [14/16] 0.0, 128
          %509 = vxpose.xlu0.b32.cont [15/16] 0.0, 128
          %510 = vxpose.xlu0.b32.end [16/16] 0.0, 128
          %v511 = vpop.trf.xlu0
          %v512 = vpop.trf.xlu0
          %v513 = vpop.trf.xlu0
          %v514 = vpop.trf.xlu0
          %v515 = vpop.trf.xlu0
          %v516 = vpop.trf.xlu0
          %v517 = vpop.trf.xlu0
          %v518 = vpop.trf.xlu0
          %v519 = vpop.trf.xlu0
          %v520 = vpop.trf.xlu0
          %v521 = vpop.trf.xlu0
          %v522 = vpop.trf.xlu0
          %v523 = vpop.trf.xlu0
          %v524 = vpop.trf.xlu0
          %v525 = vpop.trf.xlu0
          %v526 = vpop.trf.xlu0
          %vm527 = vcmask 261120
          %528 = vst.msk [vmem:[#allocation2] sm:$0xff] %vm527, %v511
          %v529 = vld [vmem:[%s464] sm:$0xff]
          %v530 = vld [vmem:[%s464 + $0x8] sm:$0xff]
          %v531 = vld [vmem:[%s464 + $0x10] sm:$0xff]
          %v532 = vld [vmem:[%s464 + $0x18] sm:$0xff]
          %533 = vxpose.xlu0.b32.start [1/16] %v529, 128
          %534 = vxpose.xlu0.b32.cont [2/16] %v530, 128
          %535 = vxpose.xlu0.b32.cont [3/16] %v531, 128
          %536 = vxpose.xlu0.b32.cont [4/16] %v532, 128
          %537 = vxpose.xlu0.b32.cont [5/16] 0.0, 128
          %538 = vxpose.xlu0.b32.cont [6/16] 0.0, 128
          %539 = vxpose.xlu0.b32.cont [7/16] 0.0, 128
          %540 = vxpose.xlu0.b32.cont [8/16] 0.0, 128
          %541 = vxpose.xlu0.b32.cont [9/16] 0.0, 128
          %542 = vxpose.xlu0.b32.cont [10/16] 0.0, 128
          %543 = vxpose.xlu0.b32.cont [11/16] 0.0, 128
          %544 = vxpose.xlu0.b32.cont [12/16] 0.0, 128
          %545 = vxpose.xlu0.b32.cont [13/16] 0.0, 128
          %546 = vxpose.xlu0.b32.cont [14/16] 0.0, 128
          %547 = vxpose.xlu0.b32.cont [15/16] 0.0, 128
          %548 = vxpose.xlu0.b32.end [16/16] 0.0, 128
          %v549 = vpop.trf.xlu0
          %v550 = vpop.trf.xlu0
          %v551 = vpop.trf.xlu0
          %v552 = vpop.trf.xlu0
          %v553 = vpop.trf.xlu0
          %v554 = vpop.trf.xlu0
          %v555 = vpop.trf.xlu0
          %v556 = vpop.trf.xlu0
          %v557 = vpop.trf.xlu0
          %v558 = vpop.trf.xlu0
          %v559 = vpop.trf.xlu0
          %v560 = vpop.trf.xlu0
          %v561 = vpop.trf.xlu0
          %v562 = vpop.trf.xlu0
          %v563 = vpop.trf.xlu0
          %v564 = vpop.trf.xlu0
          %565 = vst.msk [vmem:[#allocation2 + $0x8] sm:$0xff] %vm527, %v549
        $region60: #{tpu_custom_call.1} parent=47 // pred_fallthru
          _
        %v566 = vld [vmem:[#allocation2] sm:$0xff]
        %v567 = vld [vmem:[#allocation2 + $0x8] sm:$0xff]
        %v568 = vpack.c.bf16 %v567, %v566
        %v569 = vld [vmem:[%s469] sm:$0xff]
        %v570 = vld [vmem:[%s469 + $0x8] sm:$0xff]
        %v571 = vld [vmem:[%s469 + $0x10] sm:$0xff]
        %v572 = vld [vmem:[%s469 + $0x18] sm:$0xff]
        %v577 = vunpack.c.l.b16 %v569
        %v578 = vunpack.c.h.b16 %v569
        %v579 = vunpack.c.l.b16 %v570
        %v580 = vunpack.c.h.b16 %v570
        %v581 = vunpack.c.l.b16 %v571
        %v582 = vunpack.c.h.b16 %v571
        %v583 = vunpack.c.l.b16 %v572
        %v584 = vunpack.c.h.b16 %v572
        %v585 = vpack.c.b16 %v579, %v577
        %v586 = vpack.c.b16 %v580, %v578
        %v587 = vpack.c.b16 %v583, %v581
        %v588 = vpack.c.b16 %v584, %v582
        %vm593 = vcmask 261120
        %v595 = vsel %vm593, %v568, 0
        %597 = vmatprep.subr.bf16.mxu0 0
        %598 = vmatpush1.bf16.msra.mxu0 0
        %599 = vmatprep.subr.bf16.mxu0 0
        %600 = vmatpush1.bf16.msra.mxu0 0
        %601 = vmatprep.subr.bf16.mxu0 0
        %602 = vmatpush1.bf16.msra.mxu0 0
        %603 = vmatprep.subr.bf16.mxu0 0
        %604 = vmatpush1.bf16.msra.mxu0 0
        %605 = vmatprep.subr.bf16.mxu0 0
        %606 = vmatpush1.bf16.msra.mxu0 0
        %607 = vmatprep.subr.bf16.mxu0 0
        %608 = vmatpush1.bf16.msra.mxu0 0
        %609 = vmatprep.subr.bf16.mxu0 %v588
        %610 = vmatpush1.bf16.msra.mxu0 %v587
        %611 = vmatprep.subr.bf16.mxu0 %v586
        %612 = vmatpush1.bf16.msra.mxu0 %v585
        %613 = vmatprep.subr.bf16.mxu0 0
        %614 = vmatpush2.bf16.msra.mxu0 0
        %615 = vmatprep.subr.bf16.mxu0 0
        %616 = vmatpush2.bf16.msra.mxu0 0
        %617 = vmatprep.subr.bf16.mxu0 0
        %618 = vmatpush2.bf16.msra.mxu0 0
        %619 = vmatprep.subr.bf16.mxu0 0
        %620 = vmatpush2.bf16.msra.mxu0 0
        %621 = vmatprep.subr.bf16.mxu0 0
        %622 = vmatpush2.bf16.msra.mxu0 0
        %623 = vmatprep.subr.bf16.mxu0 0
        %624 = vmatpush2.bf16.msra.mxu0 0
        %625 = vmatprep.subr.bf16.mxu0 0
        %626 = vmatpush2.bf16.msra.mxu0 0
        %627 = vmatprep.subr.bf16.mxu0 0
        %628 = vmatpush2.bf16.msra.mxu0 0
        %629 = vmatprep.mubr.bf16.mxu0 0
        %630 = vmatmul.mubr.bf16.gmra.mxu0 %v595
        %v631 = vpop.f32.mrf.mxu0
        %v632 = vadd.f32 0.0, %v631
        %v633 = vpop.f32.mrf.mxu0
        %v634 = vadd.f32 0.0, %v633
        %v635 = vpop.f32.mrf.mxu0
        %v636 = vadd.f32 0.0, %v635
        %v637 = vpop.f32.mrf.mxu0
        %v638 = vadd.f32 0.0, %v637
        %639 = vdwg.mxu0
        %640 = vxpose.xlu0.b32.start [1/16] %v634, 128
        %641 = vxpose.xlu0.b32.cont [2/16] %v638, 128
        %642 = vxpose.xlu0.b32.cont [3/16] 0.0, 128
        %643 = vxpose.xlu0.b32.cont [4/16] 0.0, 128
        %644 = vxpose.xlu0.b32.cont [5/16] 0.0, 128
        %645 = vxpose.xlu0.b32.cont [6/16] 0.0, 128
        %646 = vxpose.xlu0.b32.cont [7/16] 0.0, 128
        %647 = vxpose.xlu0.b32.cont [8/16] 0.0, 128
        %648 = vxpose.xlu0.b32.cont [9/16] 0.0, 128
        %649 = vxpose.xlu0.b32.cont [10/16] 0.0, 128
        %650 = vxpose.xlu0.b32.cont [11/16] 0.0, 128
        %651 = vxpose.xlu0.b32.cont [12/16] 0.0, 128
        %652 = vxpose.xlu0.b32.cont [13/16] 0.0, 128
        %653 = vxpose.xlu0.b32.cont [14/16] 0.0, 128
        %654 = vxpose.xlu0.b32.cont [15/16] 0.0, 128
        %655 = vxpose.xlu0.b32.end [16/16] 0.0, 128
        %v656 = vpop.trf.xlu0
        %v657 = vpop.trf.xlu0
        %v658 = vpop.trf.xlu0
        %v659 = vpop.trf.xlu0
        %v660 = vpop.trf.xlu0
        %v661 = vpop.trf.xlu0
        %v662 = vpop.trf.xlu0
        %v663 = vpop.trf.xlu0
        %v664 = vpop.trf.xlu0
        %v665 = vpop.trf.xlu0
        %v666 = vpop.trf.xlu0
        %v667 = vpop.trf.xlu0
        %v668 = vpop.trf.xlu0
        %v669 = vpop.trf.xlu0
        %v670 = vpop.trf.xlu0
        %v671 = vpop.trf.xlu0
        %v672 = vpack.c.bf16 %v636, %v632
        %v674 = vunpack.c.l.b16 %v672
        %v675 = vunpack.c.h.b16 %v672
        %v676 = vpack.c.b16 %v674, %v674
        %v677 = vpack.c.b16 %v675, %v675
        %vm680 = vcmask 257024
        %681 = vst.msk [vmem:[#allocation3] sm:$0xf] %vm680, %v676
        %682 = vst.msk [vmem:[#allocation3 + $0x4] sm:$0xf] %vm680, %v677
        %vm683 = vcmask 122880
        %684 = vst.msk [vmem:[#allocation4] sm:$0x1] %vm683, %v656
        %687 = vrot.lane.b32.xlu0 %v634, 124
        %v688 = vpop.permute.xlu0 %687
        %689 = vrot.lane.b32.xlu0 %v638, 124
        %v690 = vpop.permute.xlu0 %689
        %vm693 = vcmask 7168
        %694 = vst.msk [vmem:[#allocation5] sm:$0xff] %vm693, %v688
        %695 = vst.msk [vmem:[#allocation5 + $0x8] sm:$0xff] %vm693, %v690
        %v696 = vadd.f32 %v634, %v688
        %v697 = vadd.f32 %v638, %v690
        %s698 = scalar_lea.vmem [#allocation5], 64
        %699 = vst.msk [vmem:[%s698] sm:$0xff] %vm693, %v696
        %700 = vst.msk [vmem:[%s698 + $0x8] sm:$0xff] %vm693, %v697
        %701 = vrot.lane.b32.xlu0 %v676, 96
        %v702 = vpop.permute.xlu0 %701
        %703 = vrot.lane.b32.xlu0 %v677, 96
        %v704 = vpop.permute.xlu0 %703
        %s707 = scalar_lea.vmem [#allocation3], 8
        %708 = vst.msk [vmem:[%s707] sm:$0xf] %vm680, %v702
        %709 = vst.msk [vmem:[%s707 + $0x4] sm:$0xf] %vm680, %v704
        %s710 = scalar_lea.vmem [#allocation4], 1
        %vm711 = vcmask 123905
        %712 = vst.msk [vmem:[%s710 - $0x1] sm:$0x2] %vm711, %v656
        %713 = vrot.lane.b32.xlu0 %v634, 123
        %v714 = vpop.permute.xlu0 %713
        %715 = vrot.lane.b32.xlu0 %v638, 123
        %v716 = vpop.permute.xlu0 %715
        %s719 = scalar_lea.vmem [#allocation5], 16
        %720 = vst.msk [vmem:[%s719] sm:$0xff] %vm693, %v714
        %721 = vst.msk [vmem:[%s719 + $0x8] sm:$0xff] %vm693, %v716
        %724 = vrot.lane.b32.xlu0 %v696, 127
        %v725 = vpop.permute.xlu0 %724
        %726 = vrot.lane.b32.xlu0 %v697, 127
        %v727 = vpop.permute.xlu0 %726
        %s730 = scalar_lea.vmem [#allocation5], 80
        %731 = vst.msk [vmem:[%s730] sm:$0xff] %vm693, %v725
        %732 = vst.msk [vmem:[%s730 + $0x8] sm:$0xff] %vm693, %v727
        %733 = vrot.lane.b32.xlu0 %v676, 64
        %v734 = vpop.permute.xlu0 %733
        %735 = vrot.lane.b32.xlu0 %v677, 64
        %v736 = vpop.permute.xlu0 %735
        %s739 = scalar_lea.vmem [#allocation3], 16
        %740 = vst.msk [vmem:[%s739] sm:$0xf] %vm680, %v734
        %741 = vst.msk [vmem:[%s739 + $0x4] sm:$0xf] %vm680, %v736
        %s742 = scalar_lea.vmem [#allocation4], 2
        %vm743 = vcmask 124930
        %744 = vst.msk [vmem:[%s742 - $0x2] sm:$0x4] %vm743, %v656
        %745 = vrot.lane.b32.xlu0 %v634, 122
        %v746 = vpop.permute.xlu0 %745
        %747 = vrot.lane.b32.xlu0 %v638, 122
        %v748 = vpop.permute.xlu0 %747
        %s751 = scalar_lea.vmem [#allocation5], 32
        %752 = vst.msk [vmem:[%s751] sm:$0xff] %vm693, %v746
        %753 = vst.msk [vmem:[%s751 + $0x8] sm:$0xff] %vm693, %v748
        %754 = vrot.lane.b32.xlu0 %v696, 126
        %v755 = vpop.permute.xlu0 %754
        %756 = vrot.lane.b32.xlu0 %v697, 126
        %v757 = vpop.permute.xlu0 %756
        %s760 = scalar_lea.vmem [#allocation5], 96
        %761 = vst.msk [vmem:[%s760] sm:$0xff] %vm693, %v755
        %762 = vst.msk [vmem:[%s760 + $0x8] sm:$0xff] %vm693, %v757
        %763 = vrot.lane.b32.xlu0 %v676, 32
        %v764 = vpop.permute.xlu0 %763
        %765 = vrot.lane.b32.xlu0 %v677, 32
        %v766 = vpop.permute.xlu0 %765
        %s769 = scalar_lea.vmem [#allocation3], 24
        %770 = vst.msk [vmem:[%s769] sm:$0xf] %vm680, %v764
        %771 = vst.msk [vmem:[%s769 + $0x4] sm:$0xf] %vm680, %v766
        %s772 = scalar_lea.vmem [#allocation4], 3
        %vm773 = vcmask 125955
        %774 = vst.msk [vmem:[%s772 - $0x3] sm:$0x8] %vm773, %v656
        %775 = vrot.lane.b32.xlu0 %v634, 121
        %v776 = vpop.permute.xlu0 %775
        %777 = vrot.lane.b32.xlu0 %v638, 121
        %v778 = vpop.permute.xlu0 %777
        %s781 = scalar_lea.vmem [#allocation5], 48
        %782 = vst.msk [vmem:[%s781] sm:$0xff] %vm693, %v776
        %783 = vst.msk [vmem:[%s781 + $0x8] sm:$0xff] %vm693, %v778
        %784 = vrot.lane.b32.xlu0 %v696, 125
        %v785 = vpop.permute.xlu0 %784
        %786 = vrot.lane.b32.xlu0 %v697, 125
        %v787 = vpop.permute.xlu0 %786
        %s790 = scalar_lea.vmem [#allocation5], 112
        %791 = vst.msk [vmem:[%s790] sm:$0xff] %vm693, %v785
        %792 = vst.msk [vmem:[%s790 + $0x8] sm:$0xff] %vm693, %v787
        %s793 = sld [smem:[#allocation8 + %s38]]
        %p794 = scmp.eq.s32.totalorder %s793, 0
        // Predicated region
        $region61: #{tpu_custom_call.1} parent=47 // pred_check
          %p795 = pneg %p794
        $region62: #{tpu_custom_call.1} parent=47 // pred_check_branch
          %797 = sbr.rel (%p795) target = $region64
        $region63: #{tpu_custom_call.1} parent=47 // pred_region
          %v798 = vld [vmem:[#allocation3] sm:$0xf]
          %v799 = vld [vmem:[#allocation3 + $0x4] sm:$0xf]
          %v800 = vld [vmem:[#allocation4] sm:$0x1]
          %v801 = vld [vmem:[#allocation5] sm:$0xff]
          %v802 = vld [vmem:[#allocation5 + $0x8] sm:$0xff]
          %v804 = vlaneseq
          %v805 = vshrl.u32 %v804, 7
          %v806 = vsub.s32 0, %v805
          %v807 = vrot.slane %v800, %v806
          %810 = vset.pattern.permute.xlu0 0
          %811 = vperm.xlu0 %810, %v801
          %v812 = vpop.permute.xlu0 %811
          %v814 = vadd.f32 %v807, %v812
          %vm815 = vcmp.gt.f32.partialorder %v814, 0.0
          %v816 = vmul.f32 %v814, 0.2
          %v817 = vsel %vm815, %v814, %v816
          %vm818 = vcmask 64512
          %v819 = vsel %vm818, %v817, -inf
          %820 = vmax.xlane.f32.xlu0 %v819
          %v821 = vpop.xlane.xlu0 %820
          %v822 = vsub.f32 %v817, %v821
          %v823 = vmul.f32 %v822, 1.442695
          %v824 = vpow.pop %v823
          %v825 = vsel %vm818, %v824, 0.0
          %826 = vadd.xlane.f32.xlu0 %v825
          %v827 = vpop.xlane.xlu0 %826
          %v828 = vrcp.pop %v827
          %v829 = vpack.c.bf16 %v824, %v824
          %v831 = vsel %vm818, %v829, 0
          %vm833 = vcmask 1043456
          %v835 = vsel %vm833, %v798, 0
          %837 = vmatprep.subr.bf16.mxu0 0
          %838 = vmatpush1.bf16.msra.mxu0 0
          %839 = vmatprep.subr.bf16.mxu0 0
          %840 = vmatpush1.bf16.msra.mxu0 0
          %841 = vmatprep.subr.bf16.mxu0 0
          %842 = vmatpush1.bf16.msra.mxu0 0
          %843 = vmatprep.subr.bf16.mxu0 0
          %844 = vmatpush1.bf16.msra.mxu0 0
          %845 = vmatprep.subr.bf16.mxu0 0
          %846 = vmatpush1.bf16.msra.mxu0 0
          %847 = vmatprep.subr.bf16.mxu0 0
          %848 = vmatpush1.bf16.msra.mxu0 0
          %849 = vmatprep.subr.bf16.mxu0 0
          %850 = vmatpush1.bf16.msra.mxu0 0
          %851 = vmatprep.subr.bf16.mxu0 0
          %852 = vmatpush1.bf16.msra.mxu0 %v835
          %853 = vmatprep.subr.bf16.mxu0 0
          %854 = vmatpush2.bf16.msra.mxu0 0
          %855 = vmatprep.subr.bf16.mxu0 0
          %856 = vmatpush2.bf16.msra.mxu0 0
          %857 = vmatprep.subr.bf16.mxu0 0
          %858 = vmatpush2.bf16.msra.mxu0 0
          %859 = vmatprep.subr.bf16.mxu0 0
          %860 = vmatpush2.bf16.msra.mxu0 0
          %861 = vmatprep.subr.bf16.mxu0 0
          %862 = vmatpush2.bf16.msra.mxu0 0
          %863 = vmatprep.subr.bf16.mxu0 0
          %864 = vmatpush2.bf16.msra.mxu0 0
          %865 = vmatprep.subr.bf16.mxu0 0
          %866 = vmatpush2.bf16.msra.mxu0 0
          %867 = vmatprep.subr.bf16.mxu0 0
          %868 = vmatpush2.bf16.msra.mxu0 0
          %869 = vmatprep.mubr.bf16.mxu0 0
          %870 = vmatmul.mubr.bf16.gmra.mxu0 %v831
          %v871 = vpop.f32.mrf.mxu0
          %v872 = vadd.f32 0.0, %v871
          %v873 = vpop.f32.mrf.mxu0
          %v874 = vpop.f32.mrf.mxu0
          %v875 = vpop.f32.mrf.mxu0
          %876 = vdwg.mxu0
          %v877 = vmul.f32 %v872, %v828
          %v878 = vadd.f32 %v877, 0.0
          %880 = vset.pattern.permute.xlu0 0
          %881 = vperm.xlu0 %880, %v802
          %v882 = vpop.permute.xlu0 %881
          %v884 = vadd.f32 %v807, %v882
          %vm885 = vcmp.gt.f32.partialorder %v884, 0.0
          %v886 = vmul.f32 %v884, 0.2
          %v887 = vsel %vm885, %v884, %v886
          %vm888 = vcmask 130112
          %v889 = vsel %vm888, %v887, -inf
          %890 = vmax.xlane.f32.xlu0 %v889
          %v891 = vpop.xlane.xlu0 %890
          %v892 = vsub.f32 %v887, %v891
          %v893 = vmul.f32 %v892, 1.442695
          %v894 = vpow.pop %v893
          %896 = vrot.lane.b32.xlu0 %v894, 120
          %v897 = vpop.permute.xlu0 %896
          %v899 = vsel %vm818, %v897, 0.0
          %900 = vadd.xlane.f32.xlu0 %v899
          %v901 = vpop.xlane.xlu0 %900
          %v902 = vrcp.pop %v901
          %v903 = vpack.c.bf16 %v894, %v894
          %905 = vrot.lane.b32.xlu0 %v903, 120
          %v906 = vpop.permute.xlu0 %905
          %v908 = vsel %vm818, %v906, 0
          %v911 = vsel %vm833, %v799, 0
          %913 = vmatprep.subr.bf16.mxu0 0
          %914 = vmatpush1.bf16.msra.mxu0 0
          %915 = vmatprep.subr.bf16.mxu0 0
          %916 = vmatpush1.bf16.msra.mxu0 0
          %917 = vmatprep.subr.bf16.mxu0 0
          %918 = vmatpush1.bf16.msra.mxu0 0
          %919 = vmatprep.subr.bf16.mxu0 0
          %920 = vmatpush1.bf16.msra.mxu0 0
          %921 = vmatprep.subr.bf16.mxu0 0
          %922 = vmatpush1.bf16.msra.mxu0 0
          %923 = vmatprep.subr.bf16.mxu0 0
          %924 = vmatpush1.bf16.msra.mxu0 0
          %925 = vmatprep.subr.bf16.mxu0 0
          %926 = vmatpush1.bf16.msra.mxu0 0
          %927 = vmatprep.subr.bf16.mxu0 0
          %928 = vmatpush1.bf16.msra.mxu0 %v911
          %929 = vmatprep.subr.bf16.mxu0 0
          %930 = vmatpush2.bf16.msra.mxu0 0
          %931 = vmatprep.subr.bf16.mxu0 0
          %932 = vmatpush2.bf16.msra.mxu0 0
          %933 = vmatprep.subr.bf16.mxu0 0
          %934 = vmatpush2.bf16.msra.mxu0 0
          %935 = vmatprep.subr.bf16.mxu0 0
          %936 = vmatpush2.bf16.msra.mxu0 0
          %937 = vmatprep.subr.bf16.mxu0 0
          %938 = vmatpush2.bf16.msra.mxu0 0
          %939 = vmatprep.subr.bf16.mxu0 0
          %940 = vmatpush2.bf16.msra.mxu0 0
          %941 = vmatprep.subr.bf16.mxu0 0
          %942 = vmatpush2.bf16.msra.mxu0 0
          %943 = vmatprep.subr.bf16.mxu0 0
          %944 = vmatpush2.bf16.msra.mxu0 0
          %945 = vmatprep.mubr.bf16.mxu0 0
          %946 = vmatmul.mubr.bf16.gmra.mxu0 %v908
          %v947 = vpop.f32.mrf.mxu0
          %v948 = vadd.f32 0.0, %v947
          %v949 = vpop.f32.mrf.mxu0
          %v950 = vpop.f32.mrf.mxu0
          %v951 = vpop.f32.mrf.mxu0
          %952 = vdwg.mxu0
          %v953 = vmul.f32 %v948, %v902
          %v954 = vadd.f32 %v953, 0.0
          %v955 = vld [vmem:[%s707] sm:$0xf]
          %v956 = vld [vmem:[%s707 + $0x4] sm:$0xf]
          %v957 = vld [vmem:[%s710] sm:$0x1]
          %v958 = vld [vmem:[%s719] sm:$0xff]
          %v959 = vld [vmem:[%s719 + $0x8] sm:$0xff]
          %v961 = vlaneseq
          %v962 = vshrl.u32 %v961, 7
          %v963 = vsub.s32 0, %v962
          %v964 = vrot.slane %v957, %v963
          %967 = vset.pattern.permute.xlu0 0
          %968 = vperm.xlu0 %967, %v958
          %v969 = vpop.permute.xlu0 %968
          %v971 = vadd.f32 %v964, %v969
          %vm972 = vcmp.gt.f32.partialorder %v971, 0.0
          %v973 = vmul.f32 %v971, 0.2
          %v974 = vsel %vm972, %v971, %v973
          %v975 = vsel %vm818, %v974, -inf
          %976 = vmax.xlane.f32.xlu0 %v975
          %v977 = vpop.xlane.xlu0 %976
          %v978 = vsub.f32 %v974, %v977
          %v979 = vmul.f32 %v978, 1.442695
          %v980 = vpow.pop %v979
          %v981 = vsel %vm818, %v980, 0.0
          %982 = vadd.xlane.f32.xlu0 %v981
          %v983 = vpop.xlane.xlu0 %982
          %v984 = vrcp.pop %v983
          %v985 = vpack.c.bf16 %v980, %v980
          %v987 = vsel %vm818, %v985, 0
          %v990 = vsel %vm833, %v955, 0
          %992 = vmatprep.subr.bf16.mxu0 0
          %993 = vmatpush1.bf16.msra.mxu0 0
          %994 = vmatprep.subr.bf16.mxu0 0
          %995 = vmatpush1.bf16.msra.mxu0 0
          %996 = vmatprep.subr.bf16.mxu0 0
          %997 = vmatpush1.bf16.msra.mxu0 0
          %998 = vmatprep.subr.bf16.mxu0 0
          %999 = vmatpush1.bf16.msra.mxu0 0
          %1000 = vmatprep.subr.bf16.mxu0 0
          %1001 = vmatpush1.bf16.msra.mxu0 0
          %1002 = vmatprep.subr.bf16.mxu0 0
          %1003 = vmatpush1.bf16.msra.mxu0 0
          %1004 = vmatprep.subr.bf16.mxu0 0
          %1005 = vmatpush1.bf16.msra.mxu0 0
          %1006 = vmatprep.subr.bf16.mxu0 0
          %1007 = vmatpush1.bf16.msra.mxu0 %v990
          %1008 = vmatprep.subr.bf16.mxu0 0
          %1009 = vmatpush2.bf16.msra.mxu0 0
          %1010 = vmatprep.subr.bf16.mxu0 0
          %1011 = vmatpush2.bf16.msra.mxu0 0
          %1012 = vmatprep.subr.bf16.mxu0 0
          %1013 = vmatpush2.bf16.msra.mxu0 0
          %1014 = vmatprep.subr.bf16.mxu0 0
          %1015 = vmatpush2.bf16.msra.mxu0 0
          %1016 = vmatprep.subr.bf16.mxu0 0
          %1017 = vmatpush2.bf16.msra.mxu0 0
          %1018 = vmatprep.subr.bf16.mxu0 0
          %1019 = vmatpush2.bf16.msra.mxu0 0
          %1020 = vmatprep.subr.bf16.mxu0 0
          %1021 = vmatpush2.bf16.msra.mxu0 0
          %1022 = vmatprep.subr.bf16.mxu0 0
          %1023 = vmatpush2.bf16.msra.mxu0 0
          %1024 = vmatprep.mubr.bf16.mxu0 0
          %1025 = vmatmul.mubr.bf16.gmra.mxu0 %v987
          %v1026 = vpop.f32.mrf.mxu0
          %v1027 = vadd.f32 0.0, %v1026
          %v1028 = vpop.f32.mrf.mxu0
          %v1029 = vpop.f32.mrf.mxu0
          %v1030 = vpop.f32.mrf.mxu0
          %1031 = vdwg.mxu0
          %v1032 = vmul.f32 %v1027, %v984
          %v1033 = vadd.f32 %v878, %v1032
          %1035 = vset.pattern.permute.xlu0 0
          %1036 = vperm.xlu0 %1035, %v959
          %v1037 = vpop.permute.xlu0 %1036
          %v1039 = vadd.f32 %v964, %v1037
          %vm1040 = vcmp.gt.f32.partialorder %v1039, 0.0
          %v1041 = vmul.f32 %v1039, 0.2
          %v1042 = vsel %vm1040, %v1039, %v1041
          %v1043 = vsel %vm888, %v1042, -inf
          %1044 = vmax.xlane.f32.xlu0 %v1043
          %v1045 = vpop.xlane.xlu0 %1044
          %v1046 = vsub.f32 %v1042, %v1045
          %v1047 = vmul.f32 %v1046, 1.442695
          %v1048 = vpow.pop %v1047
          %1050 = vrot.lane.b32.xlu0 %v1048, 120
          %v1051 = vpop.permute.xlu0 %1050
          %v1053 = vsel %vm818, %v1051, 0.0
          %1054 = vadd.xlane.f32.xlu0 %v1053
          %v1055 = vpop.xlane.xlu0 %1054
          %v1056 = vrcp.pop %v1055
          %v1057 = vpack.c.bf16 %v1048, %v1048
          %1059 = vrot.lane.b32.xlu0 %v1057, 120
          %v1060 = vpop.permute.xlu0 %1059
          %v1062 = vsel %vm818, %v1060, 0
          %v1065 = vsel %vm833, %v956, 0
          %1067 = vmatprep.subr.bf16.mxu0 0
          %1068 = vmatpush1.bf16.msra.mxu0 0
          %1069 = vmatprep.subr.bf16.mxu0 0
          %1070 = vmatpush1.bf16.msra.mxu0 0
          %1071 = vmatprep.subr.bf16.mxu0 0
          %1072 = vmatpush1.bf16.msra.mxu0 0
          %1073 = vmatprep.subr.bf16.mxu0 0
          %1074 = vmatpush1.bf16.msra.mxu0 0
          %1075 = vmatprep.subr.bf16.mxu0 0
          %1076 = vmatpush1.bf16.msra.mxu0 0
          %1077 = vmatprep.subr.bf16.mxu0 0
          %1078 = vmatpush1.bf16.msra.mxu0 0
          %1079 = vmatprep.subr.bf16.mxu0 0
          %1080 = vmatpush1.bf16.msra.mxu0 0
          %1081 = vmatprep.subr.bf16.mxu0 0
          %1082 = vmatpush1.bf16.msra.mxu0 %v1065
          %1083 = vmatprep.subr.bf16.mxu0 0
          %1084 = vmatpush2.bf16.msra.mxu0 0
          %1085 = vmatprep.subr.bf16.mxu0 0
          %1086 = vmatpush2.bf16.msra.mxu0 0
          %1087 = vmatprep.subr.bf16.mxu0 0
          %1088 = vmatpush2.bf16.msra.mxu0 0
          %1089 = vmatprep.subr.bf16.mxu0 0
          %1090 = vmatpush2.bf16.msra.mxu0 0
          %1091 = vmatprep.subr.bf16.mxu0 0
          %1092 = vmatpush2.bf16.msra.mxu0 0
          %1093 = vmatprep.subr.bf16.mxu0 0
          %1094 = vmatpush2.bf16.msra.mxu0 0
          %1095 = vmatprep.subr.bf16.mxu0 0
          %1096 = vmatpush2.bf16.msra.mxu0 0
          %1097 = vmatprep.subr.bf16.mxu0 0
          %1098 = vmatpush2.bf16.msra.mxu0 0
          %1099 = vmatprep.mubr.bf16.mxu0 0
          %1100 = vmatmul.mubr.bf16.gmra.mxu0 %v1062
          %v1101 = vpop.f32.mrf.mxu0
          %v1102 = vadd.f32 0.0, %v1101
          %v1103 = vpop.f32.mrf.mxu0
          %v1104 = vpop.f32.mrf.mxu0
          %v1105 = vpop.f32.mrf.mxu0
          %1106 = vdwg.mxu0
          %v1107 = vmul.f32 %v1102, %v1056
          %v1108 = vadd.f32 %v954, %v1107
          %v1109 = vld [vmem:[%s739] sm:$0xf]
          %v1110 = vld [vmem:[%s739 + $0x4] sm:$0xf]
          %v1111 = vld [vmem:[%s742] sm:$0x1]
          %v1112 = vld [vmem:[%s751] sm:$0xff]
          %v1113 = vld [vmem:[%s751 + $0x8] sm:$0xff]
          %v1115 = vlaneseq
          %v1116 = vshrl.u32 %v1115, 7
          %v1117 = vsub.s32 0, %v1116
          %v1118 = vrot.slane %v1111, %v1117
          %1121 = vset.pattern.permute.xlu0 0
          %1122 = vperm.xlu0 %1121, %v1112
          %v1123 = vpop.permute.xlu0 %1122
          %v1125 = vadd.f32 %v1118, %v1123
          %vm1126 = vcmp.gt.f32.partialorder %v1125, 0.0
          %v1127 = vmul.f32 %v1125, 0.2
          %v1128 = vsel %vm1126, %v1125, %v1127
          %v1129 = vsel %vm818, %v1128, -inf
          %1130 = vmax.xlane.f32.xlu0 %v1129
          %v1131 = vpop.xlane.xlu0 %1130
          %v1132 = vsub.f32 %v1128, %v1131
          %v1133 = vmul.f32 %v1132, 1.442695
          %v1134 = vpow.pop %v1133
          %v1135 = vsel %vm818, %v1134, 0.0
          %1136 = vadd.xlane.f32.xlu0 %v1135
          %v1137 = vpop.xlane.xlu0 %1136
          %v1138 = vrcp.pop %v1137
          %v1139 = vpack.c.bf16 %v1134, %v1134
          %v1141 = vsel %vm818, %v1139, 0
          %v1144 = vsel %vm833, %v1109, 0
          %1146 = vmatprep.subr.bf16.mxu0 0
          %1147 = vmatpush1.bf16.msra.mxu0 0
          %1148 = vmatprep.subr.bf16.mxu0 0
          %1149 = vmatpush1.bf16.msra.mxu0 0
          %1150 = vmatprep.subr.bf16.mxu0 0
          %1151 = vmatpush1.bf16.msra.mxu0 0
          %1152 = vmatprep.subr.bf16.mxu0 0
          %1153 = vmatpush1.bf16.msra.mxu0 0
          %1154 = vmatprep.subr.bf16.mxu0 0
          %1155 = vmatpush1.bf16.msra.mxu0 0
          %1156 = vmatprep.subr.bf16.mxu0 0
          %1157 = vmatpush1.bf16.msra.mxu0 0
          %1158 = vmatprep.subr.bf16.mxu0 0
          %1159 = vmatpush1.bf16.msra.mxu0 0
          %1160 = vmatprep.subr.bf16.mxu0 0
          %1161 = vmatpush1.bf16.msra.mxu0 %v1144
          %1162 = vmatprep.subr.bf16.mxu0 0
          %1163 = vmatpush2.bf16.msra.mxu0 0
          %1164 = vmatprep.subr.bf16.mxu0 0
          %1165 = vmatpush2.bf16.msra.mxu0 0
          %1166 = vmatprep.subr.bf16.mxu0 0
          %1167 = vmatpush2.bf16.msra.mxu0 0
          %1168 = vmatprep.subr.bf16.mxu0 0
          %1169 = vmatpush2.bf16.msra.mxu0 0
          %1170 = vmatprep.subr.bf16.mxu0 0
          %1171 = vmatpush2.bf16.msra.mxu0 0
          %1172 = vmatprep.subr.bf16.mxu0 0
          %1173 = vmatpush2.bf16.msra.mxu0 0
          %1174 = vmatprep.subr.bf16.mxu0 0
          %1175 = vmatpush2.bf16.msra.mxu0 0
          %1176 = vmatprep.subr.bf16.mxu0 0
          %1177 = vmatpush2.bf16.msra.mxu0 0
          %1178 = vmatprep.mubr.bf16.mxu0 0
          %1179 = vmatmul.mubr.bf16.gmra.mxu0 %v1141
          %v1180 = vpop.f32.mrf.mxu0
          %v1181 = vadd.f32 0.0, %v1180
          %v1182 = vpop.f32.mrf.mxu0
          %v1183 = vpop.f32.mrf.mxu0
          %v1184 = vpop.f32.mrf.mxu0
          %1185 = vdwg.mxu0
          %v1186 = vmul.f32 %v1181, %v1138
          %v1187 = vadd.f32 %v1033, %v1186
          %1189 = vset.pattern.permute.xlu0 0
          %1190 = vperm.xlu0 %1189, %v1113
          %v1191 = vpop.permute.xlu0 %1190
          %v1193 = vadd.f32 %v1118, %v1191
          %vm1194 = vcmp.gt.f32.partialorder %v1193, 0.0
          %v1195 = vmul.f32 %v1193, 0.2
          %v1196 = vsel %vm1194, %v1193, %v1195
          %v1197 = vsel %vm888, %v1196, -inf
          %1198 = vmax.xlane.f32.xlu0 %v1197
          %v1199 = vpop.xlane.xlu0 %1198
          %v1200 = vsub.f32 %v1196, %v1199
          %v1201 = vmul.f32 %v1200, 1.442695
          %v1202 = vpow.pop %v1201
          %1204 = vrot.lane.b32.xlu0 %v1202, 120
          %v1205 = vpop.permute.xlu0 %1204
          %v1207 = vsel %vm818, %v1205, 0.0
          %1208 = vadd.xlane.f32.xlu0 %v1207
          %v1209 = vpop.xlane.xlu0 %1208
          %v1210 = vrcp.pop %v1209
          %v1211 = vpack.c.bf16 %v1202, %v1202
          %1213 = vrot.lane.b32.xlu0 %v1211, 120
          %v1214 = vpop.permute.xlu0 %1213
          %v1216 = vsel %vm818, %v1214, 0
          %v1219 = vsel %vm833, %v1110, 0
          %1221 = vmatprep.subr.bf16.mxu0 0
          %1222 = vmatpush1.bf16.msra.mxu0 0
          %1223 = vmatprep.subr.bf16.mxu0 0
          %1224 = vmatpush1.bf16.msra.mxu0 0
          %1225 = vmatprep.subr.bf16.mxu0 0
          %1226 = vmatpush1.bf16.msra.mxu0 0
          %1227 = vmatprep.subr.bf16.mxu0 0
          %1228 = vmatpush1.bf16.msra.mxu0 0
          %1229 = vmatprep.subr.bf16.mxu0 0
          %1230 = vmatpush1.bf16.msra.mxu0 0
          %1231 = vmatprep.subr.bf16.mxu0 0
          %1232 = vmatpush1.bf16.msra.mxu0 0
          %1233 = vmatprep.subr.bf16.mxu0 0
          %1234 = vmatpush1.bf16.msra.mxu0 0
          %1235 = vmatprep.subr.bf16.mxu0 0
          %1236 = vmatpush1.bf16.msra.mxu0 %v1219
          %1237 = vmatprep.subr.bf16.mxu0 0
          %1238 = vmatpush2.bf16.msra.mxu0 0
          %1239 = vmatprep.subr.bf16.mxu0 0
          %1240 = vmatpush2.bf16.msra.mxu0 0
          %1241 = vmatprep.subr.bf16.mxu0 0
          %1242 = vmatpush2.bf16.msra.mxu0 0
          %1243 = vmatprep.subr.bf16.mxu0 0
          %1244 = vmatpush2.bf16.msra.mxu0 0
          %1245 = vmatprep.subr.bf16.mxu0 0
          %1246 = vmatpush2.bf16.msra.mxu0 0
          %1247 = vmatprep.subr.bf16.mxu0 0
          %1248 = vmatpush2.bf16.msra.mxu0 0
          %1249 = vmatprep.subr.bf16.mxu0 0
          %1250 = vmatpush2.bf16.msra.mxu0 0
          %1251 = vmatprep.subr.bf16.mxu0 0
          %1252 = vmatpush2.bf16.msra.mxu0 0
          %1253 = vmatprep.mubr.bf16.mxu0 0
          %1254 = vmatmul.mubr.bf16.gmra.mxu0 %v1216
          %v1255 = vpop.f32.mrf.mxu0
          %v1256 = vadd.f32 0.0, %v1255
          %v1257 = vpop.f32.mrf.mxu0
          %v1258 = vpop.f32.mrf.mxu0
          %v1259 = vpop.f32.mrf.mxu0
          %1260 = vdwg.mxu0
          %v1261 = vmul.f32 %v1256, %v1210
          %v1262 = vadd.f32 %v1108, %v1261
          %v1263 = vld [vmem:[%s769] sm:$0xf]
          %v1264 = vld [vmem:[%s769 + $0x4] sm:$0xf]
          %v1265 = vld [vmem:[%s772] sm:$0x1]
          %v1266 = vld [vmem:[%s781] sm:$0xff]
          %v1267 = vld [vmem:[%s781 + $0x8] sm:$0xff]
          %v1269 = vlaneseq
          %v1270 = vshrl.u32 %v1269, 7
          %v1271 = vsub.s32 0, %v1270
          %v1272 = vrot.slane %v1265, %v1271
          %1275 = vset.pattern.permute.xlu0 0
          %1276 = vperm.xlu0 %1275, %v1266
          %v1277 = vpop.permute.xlu0 %1276
          %v1279 = vadd.f32 %v1272, %v1277
          %vm1280 = vcmp.gt.f32.partialorder %v1279, 0.0
          %v1281 = vmul.f32 %v1279, 0.2
          %v1282 = vsel %vm1280, %v1279, %v1281
          %v1283 = vsel %vm818, %v1282, -inf
          %1284 = vmax.xlane.f32.xlu0 %v1283
          %v1285 = vpop.xlane.xlu0 %1284
          %v1286 = vsub.f32 %v1282, %v1285
          %v1287 = vmul.f32 %v1286, 1.442695
          %v1288 = vpow.pop %v1287
          %v1289 = vsel %vm818, %v1288, 0.0
          %1290 = vadd.xlane.f32.xlu0 %v1289
          %v1291 = vpop.xlane.xlu0 %1290
          %v1292 = vrcp.pop %v1291
          %v1293 = vpack.c.bf16 %v1288, %v1288
          %v1295 = vsel %vm818, %v1293, 0
          %v1298 = vsel %vm833, %v1263, 0
          %1300 = vmatprep.subr.bf16.mxu0 0
          %1301 = vmatpush1.bf16.msra.mxu0 0
          %1302 = vmatprep.subr.bf16.mxu0 0
          %1303 = vmatpush1.bf16.msra.mxu0 0
          %1304 = vmatprep.subr.bf16.mxu0 0
          %1305 = vmatpush1.bf16.msra.mxu0 0
          %1306 = vmatprep.subr.bf16.mxu0 0
          %1307 = vmatpush1.bf16.msra.mxu0 0
          %1308 = vmatprep.subr.bf16.mxu0 0
          %1309 = vmatpush1.bf16.msra.mxu0 0
          %1310 = vmatprep.subr.bf16.mxu0 0
          %1311 = vmatpush1.bf16.msra.mxu0 0
          %1312 = vmatprep.subr.bf16.mxu0 0
          %1313 = vmatpush1.bf16.msra.mxu0 0
          %1314 = vmatprep.subr.bf16.mxu0 0
          %1315 = vmatpush1.bf16.msra.mxu0 %v1298
          %1316 = vmatprep.subr.bf16.mxu0 0
          %1317 = vmatpush2.bf16.msra.mxu0 0
          %1318 = vmatprep.subr.bf16.mxu0 0
          %1319 = vmatpush2.bf16.msra.mxu0 0
          %1320 = vmatprep.subr.bf16.mxu0 0
          %1321 = vmatpush2.bf16.msra.mxu0 0
          %1322 = vmatprep.subr.bf16.mxu0 0
          %1323 = vmatpush2.bf16.msra.mxu0 0
          %1324 = vmatprep.subr.bf16.mxu0 0
          %1325 = vmatpush2.bf16.msra.mxu0 0
          %1326 = vmatprep.subr.bf16.mxu0 0
          %1327 = vmatpush2.bf16.msra.mxu0 0
          %1328 = vmatprep.subr.bf16.mxu0 0
          %1329 = vmatpush2.bf16.msra.mxu0 0
          %1330 = vmatprep.subr.bf16.mxu0 0
          %1331 = vmatpush2.bf16.msra.mxu0 0
          %1332 = vmatprep.mubr.bf16.mxu0 0
          %1333 = vmatmul.mubr.bf16.gmra.mxu0 %v1295
          %v1334 = vpop.f32.mrf.mxu0
          %v1335 = vadd.f32 0.0, %v1334
          %v1336 = vpop.f32.mrf.mxu0
          %v1337 = vpop.f32.mrf.mxu0
          %v1338 = vpop.f32.mrf.mxu0
          %1339 = vdwg.mxu0
          %v1340 = vmul.f32 %v1335, %v1292
          %v1341 = vadd.f32 %v1187, %v1340
          %1343 = vset.pattern.permute.xlu0 0
          %1344 = vperm.xlu0 %1343, %v1267
          %v1345 = vpop.permute.xlu0 %1344
          %v1347 = vadd.f32 %v1272, %v1345
          %vm1348 = vcmp.gt.f32.partialorder %v1347, 0.0
          %v1349 = vmul.f32 %v1347, 0.2
          %v1350 = vsel %vm1348, %v1347, %v1349
          %v1351 = vsel %vm888, %v1350, -inf
          %1352 = vmax.xlane.f32.xlu0 %v1351
          %v1353 = vpop.xlane.xlu0 %1352
          %v1354 = vsub.f32 %v1350, %v1353
          %v1355 = vmul.f32 %v1354, 1.442695
          %v1356 = vpow.pop %v1355
          %1358 = vrot.lane.b32.xlu0 %v1356, 120
          %v1359 = vpop.permute.xlu0 %1358
          %v1361 = vsel %vm818, %v1359, 0.0
          %1362 = vadd.xlane.f32.xlu0 %v1361
          %v1363 = vpop.xlane.xlu0 %1362
          %v1364 = vrcp.pop %v1363
          %v1365 = vpack.c.bf16 %v1356, %v1356
          %1367 = vrot.lane.b32.xlu0 %v1365, 120
          %v1368 = vpop.permute.xlu0 %1367
          %v1370 = vsel %vm818, %v1368, 0
          %v1373 = vsel %vm833, %v1264, 0
          %1375 = vmatprep.subr.bf16.mxu0 0
          %1376 = vmatpush1.bf16.msra.mxu0 0
          %1377 = vmatprep.subr.bf16.mxu0 0
          %1378 = vmatpush1.bf16.msra.mxu0 0
          %1379 = vmatprep.subr.bf16.mxu0 0
          %1380 = vmatpush1.bf16.msra.mxu0 0
          %1381 = vmatprep.subr.bf16.mxu0 0
          %1382 = vmatpush1.bf16.msra.mxu0 0
          %1383 = vmatprep.subr.bf16.mxu0 0
          %1384 = vmatpush1.bf16.msra.mxu0 0
          %1385 = vmatprep.subr.bf16.mxu0 0
          %1386 = vmatpush1.bf16.msra.mxu0 0
          %1387 = vmatprep.subr.bf16.mxu0 0
          %1388 = vmatpush1.bf16.msra.mxu0 0
          %1389 = vmatprep.subr.bf16.mxu0 0
          %1390 = vmatpush1.bf16.msra.mxu0 %v1373
          %1391 = vmatprep.subr.bf16.mxu0 0
          %1392 = vmatpush2.bf16.msra.mxu0 0
          %1393 = vmatprep.subr.bf16.mxu0 0
          %1394 = vmatpush2.bf16.msra.mxu0 0
          %1395 = vmatprep.subr.bf16.mxu0 0
          %1396 = vmatpush2.bf16.msra.mxu0 0
          %1397 = vmatprep.subr.bf16.mxu0 0
          %1398 = vmatpush2.bf16.msra.mxu0 0
          %1399 = vmatprep.subr.bf16.mxu0 0
          %1400 = vmatpush2.bf16.msra.mxu0 0
          %1401 = vmatprep.subr.bf16.mxu0 0
          %1402 = vmatpush2.bf16.msra.mxu0 0
          %1403 = vmatprep.subr.bf16.mxu0 0
          %1404 = vmatpush2.bf16.msra.mxu0 0
          %1405 = vmatprep.subr.bf16.mxu0 0
          %1406 = vmatpush2.bf16.msra.mxu0 0
          %1407 = vmatprep.mubr.bf16.mxu0 0
          %1408 = vmatmul.mubr.bf16.gmra.mxu0 %v1370
          %v1409 = vpop.f32.mrf.mxu0
          %v1410 = vadd.f32 0.0, %v1409
          %v1411 = vpop.f32.mrf.mxu0
          %v1412 = vpop.f32.mrf.mxu0
          %v1413 = vpop.f32.mrf.mxu0
          %1414 = vdwg.mxu0
          %v1415 = vmul.f32 %v1410, %v1364
          %v1416 = vadd.f32 %v1262, %v1415
          %1417 = vst.msk [vmem:[#allocation6] sm:$0xff] %vm593, %v1341
          %1418 = vst.msk [vmem:[#allocation6 + $0x8] sm:$0xff] %vm593, %v1416
        $region64: #{tpu_custom_call.1} parent=47 // pred_fallthru
          _
        %p1419 = scmp.ne.s32.totalorder %s793, 0
        // Predicated region
        $region65: #{tpu_custom_call.1} parent=47 // pred_check
          %p1420 = pneg %p1419
        $region66: #{tpu_custom_call.1} parent=47 // pred_check_branch
          %1422 = sbr.rel (%p1420) target = $region68
        $region67: #{tpu_custom_call.1} parent=47 // pred_region
          %v1423 = vld [vmem:[#allocation3] sm:$0xf]
          %v1424 = vld [vmem:[#allocation3 + $0x4] sm:$0xf]
          %v1425 = vld [vmem:[#allocation4] sm:$0x1]
          %v1426 = vld [vmem:[#allocation5] sm:$0xff]
          %v1427 = vld [vmem:[#allocation5 + $0x8] sm:$0xff]
          %v1428 = vld [vmem:[%s698] sm:$0xff]
          %v1429 = vld [vmem:[%s698 + $0x8] sm:$0xff]
          %vm1430 = vcmp.gt.f32.partialorder %v1428, 0.0
          %vm1431 = vcmp.gt.f32.partialorder %v1429, 0.0
          %v1432 = vmul.f32 %v1428, 0.2
          %v1433 = vmul.f32 %v1429, 0.2
          %v1434 = vsel %vm1430, %v1428, %v1432
          %v1435 = vsel %vm1431, %v1429, %v1433
          %v1437 = vlaneseq
          %v1438 = vshrl.u32 %v1437, 7
          %v1439 = vsub.s32 0, %v1438
          %v1440 = vrot.slane %v1425, %v1439
          %1443 = vset.pattern.permute.xlu0 0
          %1444 = vperm.xlu0 %1443, %v1426
          %v1445 = vpop.permute.xlu0 %1444
          %v1447 = vadd.f32 %v1440, %v1445
          %vm1448 = vcmp.gt.f32.partialorder %v1447, 0.0
          %v1449 = vmul.f32 %v1447, 0.2
          %v1450 = vsel %vm1448, %v1447, %v1449
          %vm1451 = vcmask 130112
          %v1452 = vsel %vm1451, %v1450, -inf
          %1453 = vmax.xlane.f32.xlu0 %v1452
          %v1454 = vpop.xlane.xlu0 %1453
          %v1455 = vmax.f32 %v1454, %v1434
          %1457 = vset.pattern.permute.xlu0 0
          %1458 = vperm.xlu0 %1457, %v1455
          %v1459 = vpop.permute.xlu0 %1458
          %v1461 = vsub.f32 %v1450, %v1459
          %v1462 = vmul.f32 %v1461, 1.442695
          %v1463 = vpow.pop %v1462
          %v1464 = vsub.f32 %v1434, %v1455
          %v1465 = vmul.f32 %v1464, 1.442695
          %v1466 = vpow.pop %v1465
          %1468 = vrot.lane.b32.xlu0 %v1463, 120
          %v1469 = vpop.permute.xlu0 %1468
          %vm1471 = vcmask 64512
          %v1472 = vsel %vm1471, %v1469, 0.0
          %1473 = vadd.xlane.f32.xlu0 %v1472
          %v1474 = vpop.xlane.xlu0 %1473
          %v1475 = vadd.f32 %v1474, %v1466
          %v1476 = vrcp.pop %v1475
          %v1477 = vpack.c.bf16 %v1463, %v1463
          %v1478 = vunpack.c.l.bf16 %v1423
          %1480 = vset.pattern.permute.xlu0 0
          %1481 = vperm.xlu0 %1480, %v1466
          %v1482 = vpop.permute.xlu0 %1481
          %v1484 = vmul.f32 %v1482, %v1478
          %1486 = vrot.lane.b32.xlu0 %v1477, 120
          %v1487 = vpop.permute.xlu0 %1486
          %v1489 = vsel %vm1471, %v1487, 0
          %vm1491 = vcmask 1043456
          %v1493 = vsel %vm1491, %v1424, 0
          %1495 = vmatprep.subr.bf16.mxu0 0
          %1496 = vmatpush1.bf16.msra.mxu0 0
          %1497 = vmatprep.subr.bf16.mxu0 0
          %1498 = vmatpush1.bf16.msra.mxu0 0
          %1499 = vmatprep.subr.bf16.mxu0 0
          %1500 = vmatpush1.bf16.msra.mxu0 0
          %1501 = vmatprep.subr.bf16.mxu0 0
          %1502 = vmatpush1.bf16.msra.mxu0 0
          %1503 = vmatprep.subr.bf16.mxu0 0
          %1504 = vmatpush1.bf16.msra.mxu0 0
          %1505 = vmatprep.subr.bf16.mxu0 0
          %1506 = vmatpush1.bf16.msra.mxu0 0
          %1507 = vmatprep.subr.bf16.mxu0 0
          %1508 = vmatpush1.bf16.msra.mxu0 0
          %1509 = vmatprep.subr.bf16.mxu0 0
          %1510 = vmatpush1.bf16.msra.mxu0 %v1493
          %1511 = vmatprep.subr.bf16.mxu0 0
          %1512 = vmatpush2.bf16.msra.mxu0 0
          %1513 = vmatprep.subr.bf16.mxu0 0
          %1514 = vmatpush2.bf16.msra.mxu0 0
          %1515 = vmatprep.subr.bf16.mxu0 0
          %1516 = vmatpush2.bf16.msra.mxu0 0
          %1517 = vmatprep.subr.bf16.mxu0 0
          %1518 = vmatpush2.bf16.msra.mxu0 0
          %1519 = vmatprep.subr.bf16.mxu0 0
          %1520 = vmatpush2.bf16.msra.mxu0 0
          %1521 = vmatprep.subr.bf16.mxu0 0
          %1522 = vmatpush2.bf16.msra.mxu0 0
          %1523 = vmatprep.subr.bf16.mxu0 0
          %1524 = vmatpush2.bf16.msra.mxu0 0
          %1525 = vmatprep.subr.bf16.mxu0 0
          %1526 = vmatpush2.bf16.msra.mxu0 0
          %1527 = vmatprep.mubr.bf16.mxu0 0
          %1528 = vmatmul.mubr.bf16.gmra.mxu0 %v1489
          %v1529 = vpop.f32.mrf.mxu0
          %v1530 = vadd.f32 %v1484, %v1529
          %v1531 = vpop.f32.mrf.mxu0
          %v1532 = vpop.f32.mrf.mxu0
          %v1533 = vpop.f32.mrf.mxu0
          %1534 = vdwg.mxu0
          %1536 = vset.pattern.permute.xlu0 0
          %1537 = vperm.xlu0 %1536, %v1476
          %v1538 = vpop.permute.xlu0 %1537
          %v1540 = vmul.f32 %v1530, %v1538
          %v1541 = vadd.f32 %v1540, 0.0
          %1543 = vset.pattern.permute.xlu0 0
          %1544 = vperm.xlu0 %1543, %v1427
          %v1545 = vpop.permute.xlu0 %1544
          %v1547 = vadd.f32 %v1440, %v1545
          %vm1548 = vcmp.gt.f32.partialorder %v1547, 0.0
          %v1549 = vmul.f32 %v1547, 0.2
          %v1550 = vsel %vm1548, %v1547, %v1549
          %v1551 = vsel %vm1471, %v1550, -inf
          %1552 = vmax.xlane.f32.xlu0 %v1551
          %v1553 = vpop.xlane.xlu0 %1552
          %v1554 = vmax.f32 %v1553, %v1435
          %1556 = vset.pattern.permute.xlu0 0
          %1557 = vperm.xlu0 %1556, %v1554
          %v1558 = vpop.permute.xlu0 %1557
          %v1560 = vsub.f32 %v1550, %v1558
          %v1561 = vmul.f32 %v1560, 1.442695
          %v1562 = vpow.pop %v1561
          %v1563 = vsub.f32 %v1435, %v1554
          %v1564 = vmul.f32 %v1563, 1.442695
          %v1565 = vpow.pop %v1564
          %v1566 = vsel %vm1471, %v1562, 0.0
          %1567 = vadd.xlane.f32.xlu0 %v1566
          %v1568 = vpop.xlane.xlu0 %1567
          %v1569 = vadd.f32 %v1568, %v1565
          %v1570 = vrcp.pop %v1569
          %v1571 = vpack.c.bf16 %v1562, %v1562
          %v1572 = vunpack.c.l.bf16 %v1424
          %1574 = vset.pattern.permute.xlu0 0
          %1575 = vperm.xlu0 %1574, %v1565
          %v1576 = vpop.permute.xlu0 %1575
          %v1578 = vmul.f32 %v1576, %v1572
          %v1580 = vsel %vm1471, %v1571, 0
          %v1583 = vsel %vm1491, %v1423, 0
          %1585 = vmatprep.subr.bf16.mxu0 0
          %1586 = vmatpush1.bf16.msra.mxu0 0
          %1587 = vmatprep.subr.bf16.mxu0 0
          %1588 = vmatpush1.bf16.msra.mxu0 0
          %1589 = vmatprep.subr.bf16.mxu0 0
          %1590 = vmatpush1.bf16.msra.mxu0 0
          %1591 = vmatprep.subr.bf16.mxu0 0
          %1592 = vmatpush1.bf16.msra.mxu0 0
          %1593 = vmatprep.subr.bf16.mxu0 0
          %1594 = vmatpush1.bf16.msra.mxu0 0
          %1595 = vmatprep.subr.bf16.mxu0 0
          %1596 = vmatpush1.bf16.msra.mxu0 0
          %1597 = vmatprep.subr.bf16.mxu0 0
          %1598 = vmatpush1.bf16.msra.mxu0 0
          %1599 = vmatprep.subr.bf16.mxu0 0
          %1600 = vmatpush1.bf16.msra.mxu0 %v1583
          %1601 = vmatprep.subr.bf16.mxu0 0
          %1602 = vmatpush2.bf16.msra.mxu0 0
          %1603 = vmatprep.subr.bf16.mxu0 0
          %1604 = vmatpush2.bf16.msra.mxu0 0
          %1605 = vmatprep.subr.bf16.mxu0 0
          %1606 = vmatpush2.bf16.msra.mxu0 0
          %1607 = vmatprep.subr.bf16.mxu0 0
          %1608 = vmatpush2.bf16.msra.mxu0 0
          %1609 = vmatprep.subr.bf16.mxu0 0
          %1610 = vmatpush2.bf16.msra.mxu0 0
          %1611 = vmatprep.subr.bf16.mxu0 0
          %1612 = vmatpush2.bf16.msra.mxu0 0
          %1613 = vmatprep.subr.bf16.mxu0 0
          %1614 = vmatpush2.bf16.msra.mxu0 0
          %1615 = vmatprep.subr.bf16.mxu0 0
          %1616 = vmatpush2.bf16.msra.mxu0 0
          %1617 = vmatprep.mubr.bf16.mxu0 0
          %1618 = vmatmul.mubr.bf16.gmra.mxu0 %v1580
          %v1619 = vpop.f32.mrf.mxu0
          %v1620 = vadd.f32 %v1578, %v1619
          %v1621 = vpop.f32.mrf.mxu0
          %v1622 = vpop.f32.mrf.mxu0
          %v1623 = vpop.f32.mrf.mxu0
          %1624 = vdwg.mxu0
          %1626 = vset.pattern.permute.xlu0 0
          %1627 = vperm.xlu0 %1626, %v1570
          %v1628 = vpop.permute.xlu0 %1627
          %v1630 = vmul.f32 %v1620, %v1628
          %v1631 = vadd.f32 %v1630, 0.0
          %v1632 = vld [vmem:[%s707] sm:$0xf]
          %v1633 = vld [vmem:[%s707 + $0x4] sm:$0xf]
          %v1634 = vld [vmem:[%s710] sm:$0x1]
          %v1635 = vld [vmem:[%s719] sm:$0xff]
          %v1636 = vld [vmem:[%s719 + $0x8] sm:$0xff]
          %v1637 = vld [vmem:[%s730] sm:$0xff]
          %v1638 = vld [vmem:[%s730 + $0x8] sm:$0xff]
          %vm1639 = vcmp.gt.f32.partialorder %v1637, 0.0
          %vm1640 = vcmp.gt.f32.partialorder %v1638, 0.0
          %v1641 = vmul.f32 %v1637, 0.2
          %v1642 = vmul.f32 %v1638, 0.2
          %v1643 = vsel %vm1639, %v1637, %v1641
          %v1644 = vsel %vm1640, %v1638, %v1642
          %v1646 = vlaneseq
          %v1647 = vshrl.u32 %v1646, 7
          %v1648 = vsub.s32 0, %v1647
          %v1649 = vrot.slane %v1634, %v1648
          %1652 = vset.pattern.permute.xlu0 0
          %1653 = vperm.xlu0 %1652, %v1635
          %v1654 = vpop.permute.xlu0 %1653
          %v1656 = vadd.f32 %v1649, %v1654
          %vm1657 = vcmp.gt.f32.partialorder %v1656, 0.0
          %v1658 = vmul.f32 %v1656, 0.2
          %v1659 = vsel %vm1657, %v1656, %v1658
          %v1660 = vsel %vm1451, %v1659, -inf
          %1661 = vmax.xlane.f32.xlu0 %v1660
          %v1662 = vpop.xlane.xlu0 %1661
          %v1663 = vmax.f32 %v1662, %v1643
          %1665 = vset.pattern.permute.xlu0 0
          %1666 = vperm.xlu0 %1665, %v1663
          %v1667 = vpop.permute.xlu0 %1666
          %v1669 = vsub.f32 %v1659, %v1667
          %v1670 = vmul.f32 %v1669, 1.442695
          %v1671 = vpow.pop %v1670
          %v1672 = vsub.f32 %v1643, %v1663
          %v1673 = vmul.f32 %v1672, 1.442695
          %v1674 = vpow.pop %v1673
          %1676 = vrot.lane.b32.xlu0 %v1671, 120
          %v1677 = vpop.permute.xlu0 %1676
          %v1679 = vsel %vm1471, %v1677, 0.0
          %1680 = vadd.xlane.f32.xlu0 %v1679
          %v1681 = vpop.xlane.xlu0 %1680
          %v1682 = vadd.f32 %v1681, %v1674
          %v1683 = vrcp.pop %v1682
          %v1684 = vpack.c.bf16 %v1671, %v1671
          %v1685 = vunpack.c.l.bf16 %v1632
          %1687 = vset.pattern.permute.xlu0 0
          %1688 = vperm.xlu0 %1687, %v1674
          %v1689 = vpop.permute.xlu0 %1688
          %v1691 = vmul.f32 %v1689, %v1685
          %1693 = vrot.lane.b32.xlu0 %v1684, 120
          %v1694 = vpop.permute.xlu0 %1693
          %v1696 = vsel %vm1471, %v1694, 0
          %v1699 = vsel %vm1491, %v1633, 0
          %1701 = vmatprep.subr.bf16.mxu0 0
          %1702 = vmatpush1.bf16.msra.mxu0 0
          %1703 = vmatprep.subr.bf16.mxu0 0
          %1704 = vmatpush1.bf16.msra.mxu0 0
          %1705 = vmatprep.subr.bf16.mxu0 0
          %1706 = vmatpush1.bf16.msra.mxu0 0
          %1707 = vmatprep.subr.bf16.mxu0 0
          %1708 = vmatpush1.bf16.msra.mxu0 0
          %1709 = vmatprep.subr.bf16.mxu0 0
          %1710 = vmatpush1.bf16.msra.mxu0 0
          %1711 = vmatprep.subr.bf16.mxu0 0
          %1712 = vmatpush1.bf16.msra.mxu0 0
          %1713 = vmatprep.subr.bf16.mxu0 0
          %1714 = vmatpush1.bf16.msra.mxu0 0
          %1715 = vmatprep.subr.bf16.mxu0 0
          %1716 = vmatpush1.bf16.msra.mxu0 %v1699
          %1717 = vmatprep.subr.bf16.mxu0 0
          %1718 = vmatpush2.bf16.msra.mxu0 0
          %1719 = vmatprep.subr.bf16.mxu0 0
          %1720 = vmatpush2.bf16.msra.mxu0 0
          %1721 = vmatprep.subr.bf16.mxu0 0
          %1722 = vmatpush2.bf16.msra.mxu0 0
          %1723 = vmatprep.subr.bf16.mxu0 0
          %1724 = vmatpush2.bf16.msra.mxu0 0
          %1725 = vmatprep.subr.bf16.mxu0 0
          %1726 = vmatpush2.bf16.msra.mxu0 0
          %1727 = vmatprep.subr.bf16.mxu0 0
          %1728 = vmatpush2.bf16.msra.mxu0 0
          %1729 = vmatprep.subr.bf16.mxu0 0
          %1730 = vmatpush2.bf16.msra.mxu0 0
          %1731 = vmatprep.subr.bf16.mxu0 0
          %1732 = vmatpush2.bf16.msra.mxu0 0
          %1733 = vmatprep.mubr.bf16.mxu0 0
          %1734 = vmatmul.mubr.bf16.gmra.mxu0 %v1696
          %v1735 = vpop.f32.mrf.mxu0
          %v1736 = vadd.f32 %v1691, %v1735
          %v1737 = vpop.f32.mrf.mxu0
          %v1738 = vpop.f32.mrf.mxu0
          %v1739 = vpop.f32.mrf.mxu0
          %1740 = vdwg.mxu0
          %1742 = vset.pattern.permute.xlu0 0
          %1743 = vperm.xlu0 %1742, %v1683
          %v1744 = vpop.permute.xlu0 %1743
          %v1746 = vmul.f32 %v1736, %v1744
          %v1747 = vadd.f32 %v1541, %v1746
          %1749 = vset.pattern.permute.xlu0 0
          %1750 = vperm.xlu0 %1749, %v1636
          %v1751 = vpop.permute.xlu0 %1750
          %v1753 = vadd.f32 %v1649, %v1751
          %vm1754 = vcmp.gt.f32.partialorder %v1753, 0.0
          %v1755 = vmul.f32 %v1753, 0.2
          %v1756 = vsel %vm1754, %v1753, %v1755
          %v1757 = vsel %vm1471, %v1756, -inf
          %1758 = vmax.xlane.f32.xlu0 %v1757
          %v1759 = vpop.xlane.xlu0 %1758
          %v1760 = vmax.f32 %v1759, %v1644
          %1762 = vset.pattern.permute.xlu0 0
          %1763 = vperm.xlu0 %1762, %v1760
          %v1764 = vpop.permute.xlu0 %1763
          %v1766 = vsub.f32 %v1756, %v1764
          %v1767 = vmul.f32 %v1766, 1.442695
          %v1768 = vpow.pop %v1767
          %v1769 = vsub.f32 %v1644, %v1760
          %v1770 = vmul.f32 %v1769, 1.442695
          %v1771 = vpow.pop %v1770
          %v1772 = vsel %vm1471, %v1768, 0.0
          %1773 = vadd.xlane.f32.xlu0 %v1772
          %v1774 = vpop.xlane.xlu0 %1773
          %v1775 = vadd.f32 %v1774, %v1771
          %v1776 = vrcp.pop %v1775
          %v1777 = vpack.c.bf16 %v1768, %v1768
          %v1778 = vunpack.c.l.bf16 %v1633
          %1780 = vset.pattern.permute.xlu0 0
          %1781 = vperm.xlu0 %1780, %v1771
          %v1782 = vpop.permute.xlu0 %1781
          %v1784 = vmul.f32 %v1782, %v1778
          %v1786 = vsel %vm1471, %v1777, 0
          %v1789 = vsel %vm1491, %v1632, 0
          %1791 = vmatprep.subr.bf16.mxu0 0
          %1792 = vmatpush1.bf16.msra.mxu0 0
          %1793 = vmatprep.subr.bf16.mxu0 0
          %1794 = vmatpush1.bf16.msra.mxu0 0
          %1795 = vmatprep.subr.bf16.mxu0 0
          %1796 = vmatpush1.bf16.msra.mxu0 0
          %1797 = vmatprep.subr.bf16.mxu0 0
          %1798 = vmatpush1.bf16.msra.mxu0 0
          %1799 = vmatprep.subr.bf16.mxu0 0
          %1800 = vmatpush1.bf16.msra.mxu0 0
          %1801 = vmatprep.subr.bf16.mxu0 0
          %1802 = vmatpush1.bf16.msra.mxu0 0
          %1803 = vmatprep.subr.bf16.mxu0 0
          %1804 = vmatpush1.bf16.msra.mxu0 0
          %1805 = vmatprep.subr.bf16.mxu0 0
          %1806 = vmatpush1.bf16.msra.mxu0 %v1789
          %1807 = vmatprep.subr.bf16.mxu0 0
          %1808 = vmatpush2.bf16.msra.mxu0 0
          %1809 = vmatprep.subr.bf16.mxu0 0
          %1810 = vmatpush2.bf16.msra.mxu0 0
          %1811 = vmatprep.subr.bf16.mxu0 0
          %1812 = vmatpush2.bf16.msra.mxu0 0
          %1813 = vmatprep.subr.bf16.mxu0 0
          %1814 = vmatpush2.bf16.msra.mxu0 0
          %1815 = vmatprep.subr.bf16.mxu0 0
          %1816 = vmatpush2.bf16.msra.mxu0 0
          %1817 = vmatprep.subr.bf16.mxu0 0
          %1818 = vmatpush2.bf16.msra.mxu0 0
          %1819 = vmatprep.subr.bf16.mxu0 0
          %1820 = vmatpush2.bf16.msra.mxu0 0
          %1821 = vmatprep.subr.bf16.mxu0 0
          %1822 = vmatpush2.bf16.msra.mxu0 0
          %1823 = vmatprep.mubr.bf16.mxu0 0
          %1824 = vmatmul.mubr.bf16.gmra.mxu0 %v1786
          %v1825 = vpop.f32.mrf.mxu0
          %v1826 = vadd.f32 %v1784, %v1825
          %v1827 = vpop.f32.mrf.mxu0
          %v1828 = vpop.f32.mrf.mxu0
          %v1829 = vpop.f32.mrf.mxu0
          %1830 = vdwg.mxu0
          %1832 = vset.pattern.permute.xlu0 0
          %1833 = vperm.xlu0 %1832, %v1776
          %v1834 = vpop.permute.xlu0 %1833
          %v1836 = vmul.f32 %v1826, %v1834
          %v1837 = vadd.f32 %v1631, %v1836
          %v1838 = vld [vmem:[%s739] sm:$0xf]
          %v1839 = vld [vmem:[%s739 + $0x4] sm:$0xf]
          %v1840 = vld [vmem:[%s742] sm:$0x1]
          %v1841 = vld [vmem:[%s751] sm:$0xff]
          %v1842 = vld [vmem:[%s751 + $0x8] sm:$0xff]
          %v1843 = vld [vmem:[%s760] sm:$0xff]
          %v1844 = vld [vmem:[%s760 + $0x8] sm:$0xff]
          %vm1845 = vcmp.gt.f32.partialorder %v1843, 0.0
          %vm1846 = vcmp.gt.f32.partialorder %v1844, 0.0
          %v1847 = vmul.f32 %v1843, 0.2
          %v1848 = vmul.f32 %v1844, 0.2
          %v1849 = vsel %vm1845, %v1843, %v1847
          %v1850 = vsel %vm1846, %v1844, %v1848
          %v1852 = vlaneseq
          %v1853 = vshrl.u32 %v1852, 7
          %v1854 = vsub.s32 0, %v1853
          %v1855 = vrot.slane %v1840, %v1854
          %1858 = vset.pattern.permute.xlu0 0
          %1859 = vperm.xlu0 %1858, %v1841
          %v1860 = vpop.permute.xlu0 %1859
          %v1862 = vadd.f32 %v1855, %v1860
          %vm1863 = vcmp.gt.f32.partialorder %v1862, 0.0
          %v1864 = vmul.f32 %v1862, 0.2
          %v1865 = vsel %vm1863, %v1862, %v1864
          %v1866 = vsel %vm1451, %v1865, -inf
          %1867 = vmax.xlane.f32.xlu0 %v1866
          %v1868 = vpop.xlane.xlu0 %1867
          %v1869 = vmax.f32 %v1868, %v1849
          %1871 = vset.pattern.permute.xlu0 0
          %1872 = vperm.xlu0 %1871, %v1869
          %v1873 = vpop.permute.xlu0 %1872
          %v1875 = vsub.f32 %v1865, %v1873
          %v1876 = vmul.f32 %v1875, 1.442695
          %v1877 = vpow.pop %v1876
          %v1878 = vsub.f32 %v1849, %v1869
          %v1879 = vmul.f32 %v1878, 1.442695
          %v1880 = vpow.pop %v1879
          %1882 = vrot.lane.b32.xlu0 %v1877, 120
          %v1883 = vpop.permute.xlu0 %1882
          %v1885 = vsel %vm1471, %v1883, 0.0
          %1886 = vadd.xlane.f32.xlu0 %v1885
          %v1887 = vpop.xlane.xlu0 %1886
          %v1888 = vadd.f32 %v1887, %v1880
          %v1889 = vrcp.pop %v1888
          %v1890 = vpack.c.bf16 %v1877, %v1877
          %v1891 = vunpack.c.l.bf16 %v1838
          %1893 = vset.pattern.permute.xlu0 0
          %1894 = vperm.xlu0 %1893, %v1880
          %v1895 = vpop.permute.xlu0 %1894
          %v1897 = vmul.f32 %v1895, %v1891
          %1899 = vrot.lane.b32.xlu0 %v1890, 120
          %v1900 = vpop.permute.xlu0 %1899
          %v1902 = vsel %vm1471, %v1900, 0
          %v1905 = vsel %vm1491, %v1839, 0
          %1907 = vmatprep.subr.bf16.mxu0 0
          %1908 = vmatpush1.bf16.msra.mxu0 0
          %1909 = vmatprep.subr.bf16.mxu0 0
          %1910 = vmatpush1.bf16.msra.mxu0 0
          %1911 = vmatprep.subr.bf16.mxu0 0
          %1912 = vmatpush1.bf16.msra.mxu0 0
          %1913 = vmatprep.subr.bf16.mxu0 0
          %1914 = vmatpush1.bf16.msra.mxu0 0
          %1915 = vmatprep.subr.bf16.mxu0 0
          %1916 = vmatpush1.bf16.msra.mxu0 0
          %1917 = vmatprep.subr.bf16.mxu0 0
          %1918 = vmatpush1.bf16.msra.mxu0 0
          %1919 = vmatprep.subr.bf16.mxu0 0
          %1920 = vmatpush1.bf16.msra.mxu0 0
          %1921 = vmatprep.subr.bf16.mxu0 0
          %1922 = vmatpush1.bf16.msra.mxu0 %v1905
          %1923 = vmatprep.subr.bf16.mxu0 0
          %1924 = vmatpush2.bf16.msra.mxu0 0
          %1925 = vmatprep.subr.bf16.mxu0 0
          %1926 = vmatpush2.bf16.msra.mxu0 0
          %1927 = vmatprep.subr.bf16.mxu0 0
          %1928 = vmatpush2.bf16.msra.mxu0 0
          %1929 = vmatprep.subr.bf16.mxu0 0
          %1930 = vmatpush2.bf16.msra.mxu0 0
          %1931 = vmatprep.subr.bf16.mxu0 0
          %1932 = vmatpush2.bf16.msra.mxu0 0
          %1933 = vmatprep.subr.bf16.mxu0 0
          %1934 = vmatpush2.bf16.msra.mxu0 0
          %1935 = vmatprep.subr.bf16.mxu0 0
          %1936 = vmatpush2.bf16.msra.mxu0 0
          %1937 = vmatprep.subr.bf16.mxu0 0
          %1938 = vmatpush2.bf16.msra.mxu0 0
          %1939 = vmatprep.mubr.bf16.mxu0 0
          %1940 = vmatmul.mubr.bf16.gmra.mxu0 %v1902
          %v1941 = vpop.f32.mrf.mxu0
          %v1942 = vadd.f32 %v1897, %v1941
          %v1943 = vpop.f32.mrf.mxu0
          %v1944 = vpop.f32.mrf.mxu0
          %v1945 = vpop.f32.mrf.mxu0
          %1946 = vdwg.mxu0
          %1948 = vset.pattern.permute.xlu0 0
          %1949 = vperm.xlu0 %1948, %v1889
          %v1950 = vpop.permute.xlu0 %1949
          %v1952 = vmul.f32 %v1942, %v1950
          %v1953 = vadd.f32 %v1747, %v1952
          %1955 = vset.pattern.permute.xlu0 0
          %1956 = vperm.xlu0 %1955, %v1842
          %v1957 = vpop.permute.xlu0 %1956
          %v1959 = vadd.f32 %v1855, %v1957
          %vm1960 = vcmp.gt.f32.partialorder %v1959, 0.0
          %v1961 = vmul.f32 %v1959, 0.2
          %v1962 = vsel %vm1960, %v1959, %v1961
          %v1963 = vsel %vm1471, %v1962, -inf
          %1964 = vmax.xlane.f32.xlu0 %v1963
          %v1965 = vpop.xlane.xlu0 %1964
          %v1966 = vmax.f32 %v1965, %v1850
          %1968 = vset.pattern.permute.xlu0 0
          %1969 = vperm.xlu0 %1968, %v1966
          %v1970 = vpop.permute.xlu0 %1969
          %v1972 = vsub.f32 %v1962, %v1970
          %v1973 = vmul.f32 %v1972, 1.442695
          %v1974 = vpow.pop %v1973
          %v1975 = vsub.f32 %v1850, %v1966
          %v1976 = vmul.f32 %v1975, 1.442695
          %v1977 = vpow.pop %v1976
          %v1978 = vsel %vm1471, %v1974, 0.0
          %1979 = vadd.xlane.f32.xlu0 %v1978
          %v1980 = vpop.xlane.xlu0 %1979
          %v1981 = vadd.f32 %v1980, %v1977
          %v1982 = vrcp.pop %v1981
          %v1983 = vpack.c.bf16 %v1974, %v1974
          %v1984 = vunpack.c.l.bf16 %v1839
          %1986 = vset.pattern.permute.xlu0 0
          %1987 = vperm.xlu0 %1986, %v1977
          %v1988 = vpop.permute.xlu0 %1987
          %v1990 = vmul.f32 %v1988, %v1984
          %v1992 = vsel %vm1471, %v1983, 0
          %v1995 = vsel %vm1491, %v1838, 0
          %1997 = vmatprep.subr.bf16.mxu0 0
          %1998 = vmatpush1.bf16.msra.mxu0 0
          %1999 = vmatprep.subr.bf16.mxu0 0
          %2000 = vmatpush1.bf16.msra.mxu0 0
          %2001 = vmatprep.subr.bf16.mxu0 0
          %2002 = vmatpush1.bf16.msra.mxu0 0
          %2003 = vmatprep.subr.bf16.mxu0 0
          %2004 = vmatpush1.bf16.msra.mxu0 0
          %2005 = vmatprep.subr.bf16.mxu0 0
          %2006 = vmatpush1.bf16.msra.mxu0 0
          %2007 = vmatprep.subr.bf16.mxu0 0
          %2008 = vmatpush1.bf16.msra.mxu0 0
          %2009 = vmatprep.subr.bf16.mxu0 0
          %2010 = vmatpush1.bf16.msra.mxu0 0
          %2011 = vmatprep.subr.bf16.mxu0 0
          %2012 = vmatpush1.bf16.msra.mxu0 %v1995
          %2013 = vmatprep.subr.bf16.mxu0 0
          %2014 = vmatpush2.bf16.msra.mxu0 0
          %2015 = vmatprep.subr.bf16.mxu0 0
          %2016 = vmatpush2.bf16.msra.mxu0 0
          %2017 = vmatprep.subr.bf16.mxu0 0
          %2018 = vmatpush2.bf16.msra.mxu0 0
          %2019 = vmatprep.subr.bf16.mxu0 0
          %2020 = vmatpush2.bf16.msra.mxu0 0
          %2021 = vmatprep.subr.bf16.mxu0 0
          %2022 = vmatpush2.bf16.msra.mxu0 0
          %2023 = vmatprep.subr.bf16.mxu0 0
          %2024 = vmatpush2.bf16.msra.mxu0 0
          %2025 = vmatprep.subr.bf16.mxu0 0
          %2026 = vmatpush2.bf16.msra.mxu0 0
          %2027 = vmatprep.subr.bf16.mxu0 0
          %2028 = vmatpush2.bf16.msra.mxu0 0
          %2029 = vmatprep.mubr.bf16.mxu0 0
          %2030 = vmatmul.mubr.bf16.gmra.mxu0 %v1992
          %v2031 = vpop.f32.mrf.mxu0
          %v2032 = vadd.f32 %v1990, %v2031
          %v2033 = vpop.f32.mrf.mxu0
          %v2034 = vpop.f32.mrf.mxu0
          %v2035 = vpop.f32.mrf.mxu0
          %2036 = vdwg.mxu0
          %2038 = vset.pattern.permute.xlu0 0
          %2039 = vperm.xlu0 %2038, %v1982
          %v2040 = vpop.permute.xlu0 %2039
          %v2042 = vmul.f32 %v2032, %v2040
          %v2043 = vadd.f32 %v1837, %v2042
          %v2044 = vld [vmem:[%s769] sm:$0xf]
          %v2045 = vld [vmem:[%s769 + $0x4] sm:$0xf]
          %v2046 = vld [vmem:[%s772] sm:$0x1]
          %v2047 = vld [vmem:[%s781] sm:$0xff]
          %v2048 = vld [vmem:[%s781 + $0x8] sm:$0xff]
          %v2049 = vld [vmem:[%s790] sm:$0xff]
          %v2050 = vld [vmem:[%s790 + $0x8] sm:$0xff]
          %vm2051 = vcmp.gt.f32.partialorder %v2049, 0.0
          %vm2052 = vcmp.gt.f32.partialorder %v2050, 0.0
          %v2053 = vmul.f32 %v2049, 0.2
          %v2054 = vmul.f32 %v2050, 0.2
          %v2055 = vsel %vm2051, %v2049, %v2053
          %v2056 = vsel %vm2052, %v2050, %v2054
          %v2058 = vlaneseq
          %v2059 = vshrl.u32 %v2058, 7
          %v2060 = vsub.s32 0, %v2059
          %v2061 = vrot.slane %v2046, %v2060
          %2064 = vset.pattern.permute.xlu0 0
          %2065 = vperm.xlu0 %2064, %v2047
          %v2066 = vpop.permute.xlu0 %2065
          %v2068 = vadd.f32 %v2061, %v2066
          %vm2069 = vcmp.gt.f32.partialorder %v2068, 0.0
          %v2070 = vmul.f32 %v2068, 0.2
          %v2071 = vsel %vm2069, %v2068, %v2070
          %v2072 = vsel %vm1451, %v2071, -inf
          %2073 = vmax.xlane.f32.xlu0 %v2072
          %v2074 = vpop.xlane.xlu0 %2073
          %v2075 = vmax.f32 %v2074, %v2055
          %2077 = vset.pattern.permute.xlu0 0
          %2078 = vperm.xlu0 %2077, %v2075
          %v2079 = vpop.permute.xlu0 %2078
          %v2081 = vsub.f32 %v2071, %v2079
          %v2082 = vmul.f32 %v2081, 1.442695
          %v2083 = vpow.pop %v2082
          %v2084 = vsub.f32 %v2055, %v2075
          %v2085 = vmul.f32 %v2084, 1.442695
          %v2086 = vpow.pop %v2085
          %2088 = vrot.lane.b32.xlu0 %v2083, 120
          %v2089 = vpop.permute.xlu0 %2088
          %v2091 = vsel %vm1471, %v2089, 0.0
          %2092 = vadd.xlane.f32.xlu0 %v2091
          %v2093 = vpop.xlane.xlu0 %2092
          %v2094 = vadd.f32 %v2093, %v2086
          %v2095 = vrcp.pop %v2094
          %v2096 = vpack.c.bf16 %v2083, %v2083
          %v2097 = vunpack.c.l.bf16 %v2044
          %2099 = vset.pattern.permute.xlu0 0
          %2100 = vperm.xlu0 %2099, %v2086
          %v2101 = vpop.permute.xlu0 %2100
          %v2103 = vmul.f32 %v2101, %v2097
          %2105 = vrot.lane.b32.xlu0 %v2096, 120
          %v2106 = vpop.permute.xlu0 %2105
          %v2108 = vsel %vm1471, %v2106, 0
          %v2111 = vsel %vm1491, %v2045, 0
          %2113 = vmatprep.subr.bf16.mxu0 0
          %2114 = vmatpush1.bf16.msra.mxu0 0
          %2115 = vmatprep.subr.bf16.mxu0 0
          %2116 = vmatpush1.bf16.msra.mxu0 0
          %2117 = vmatprep.subr.bf16.mxu0 0
          %2118 = vmatpush1.bf16.msra.mxu0 0
          %2119 = vmatprep.subr.bf16.mxu0 0
          %2120 = vmatpush1.bf16.msra.mxu0 0
          %2121 = vmatprep.subr.bf16.mxu0 0
          %2122 = vmatpush1.bf16.msra.mxu0 0
          %2123 = vmatprep.subr.bf16.mxu0 0
          %2124 = vmatpush1.bf16.msra.mxu0 0
          %2125 = vmatprep.subr.bf16.mxu0 0
          %2126 = vmatpush1.bf16.msra.mxu0 0
          %2127 = vmatprep.subr.bf16.mxu0 0
          %2128 = vmatpush1.bf16.msra.mxu0 %v2111
          %2129 = vmatprep.subr.bf16.mxu0 0
          %2130 = vmatpush2.bf16.msra.mxu0 0
          %2131 = vmatprep.subr.bf16.mxu0 0
          %2132 = vmatpush2.bf16.msra.mxu0 0
          %2133 = vmatprep.subr.bf16.mxu0 0
          %2134 = vmatpush2.bf16.msra.mxu0 0
          %2135 = vmatprep.subr.bf16.mxu0 0
          %2136 = vmatpush2.bf16.msra.mxu0 0
          %2137 = vmatprep.subr.bf16.mxu0 0
          %2138 = vmatpush2.bf16.msra.mxu0 0
          %2139 = vmatprep.subr.bf16.mxu0 0
          %2140 = vmatpush2.bf16.msra.mxu0 0
          %2141 = vmatprep.subr.bf16.mxu0 0
          %2142 = vmatpush2.bf16.msra.mxu0 0
          %2143 = vmatprep.subr.bf16.mxu0 0
          %2144 = vmatpush2.bf16.msra.mxu0 0
          %2145 = vmatprep.mubr.bf16.mxu0 0
          %2146 = vmatmul.mubr.bf16.gmra.mxu0 %v2108
          %v2147 = vpop.f32.mrf.mxu0
          %v2148 = vadd.f32 %v2103, %v2147
          %v2149 = vpop.f32.mrf.mxu0
          %v2150 = vpop.f32.mrf.mxu0
          %v2151 = vpop.f32.mrf.mxu0
          %2152 = vdwg.mxu0
          %2154 = vset.pattern.permute.xlu0 0
          %2155 = vperm.xlu0 %2154, %v2095
          %v2156 = vpop.permute.xlu0 %2155
          %v2158 = vmul.f32 %v2148, %v2156
          %v2159 = vadd.f32 %v1953, %v2158
          %2161 = vset.pattern.permute.xlu0 0
          %2162 = vperm.xlu0 %2161, %v2048
          %v2163 = vpop.permute.xlu0 %2162
          %v2165 = vadd.f32 %v2061, %v2163
          %vm2166 = vcmp.gt.f32.partialorder %v2165, 0.0
          %v2167 = vmul.f32 %v2165, 0.2
          %v2168 = vsel %vm2166, %v2165, %v2167
          %v2169 = vsel %vm1471, %v2168, -inf
          %2170 = vmax.xlane.f32.xlu0 %v2169
          %v2171 = vpop.xlane.xlu0 %2170
          %v2172 = vmax.f32 %v2171, %v2056
          %2174 = vset.pattern.permute.xlu0 0
          %2175 = vperm.xlu0 %2174, %v2172
          %v2176 = vpop.permute.xlu0 %2175
          %v2178 = vsub.f32 %v2168, %v2176
          %v2179 = vmul.f32 %v2178, 1.442695
          %v2180 = vpow.pop %v2179
          %v2181 = vsub.f32 %v2056, %v2172
          %v2182 = vmul.f32 %v2181, 1.442695
          %v2183 = vpow.pop %v2182
          %v2184 = vsel %vm1471, %v2180, 0.0
          %2185 = vadd.xlane.f32.xlu0 %v2184
          %v2186 = vpop.xlane.xlu0 %2185
          %v2187 = vadd.f32 %v2186, %v2183
          %v2188 = vrcp.pop %v2187
          %v2189 = vpack.c.bf16 %v2180, %v2180
          %v2190 = vunpack.c.l.bf16 %v2045
          %2192 = vset.pattern.permute.xlu0 0
          %2193 = vperm.xlu0 %2192, %v2183
          %v2194 = vpop.permute.xlu0 %2193
          %v2196 = vmul.f32 %v2194, %v2190
          %v2198 = vsel %vm1471, %v2189, 0
          %v2201 = vsel %vm1491, %v2044, 0
          %2203 = vmatprep.subr.bf16.mxu0 0
          %2204 = vmatpush1.bf16.msra.mxu0 0
          %2205 = vmatprep.subr.bf16.mxu0 0
          %2206 = vmatpush1.bf16.msra.mxu0 0
          %2207 = vmatprep.subr.bf16.mxu0 0
          %2208 = vmatpush1.bf16.msra.mxu0 0
          %2209 = vmatprep.subr.bf16.mxu0 0
          %2210 = vmatpush1.bf16.msra.mxu0 0
          %2211 = vmatprep.subr.bf16.mxu0 0
          %2212 = vmatpush1.bf16.msra.mxu0 0
          %2213 = vmatprep.subr.bf16.mxu0 0
          %2214 = vmatpush1.bf16.msra.mxu0 0
          %2215 = vmatprep.subr.bf16.mxu0 0
          %2216 = vmatpush1.bf16.msra.mxu0 0
          %2217 = vmatprep.subr.bf16.mxu0 0
          %2218 = vmatpush1.bf16.msra.mxu0 %v2201
          %2219 = vmatprep.subr.bf16.mxu0 0
          %2220 = vmatpush2.bf16.msra.mxu0 0
          %2221 = vmatprep.subr.bf16.mxu0 0
          %2222 = vmatpush2.bf16.msra.mxu0 0
          %2223 = vmatprep.subr.bf16.mxu0 0
          %2224 = vmatpush2.bf16.msra.mxu0 0
          %2225 = vmatprep.subr.bf16.mxu0 0
          %2226 = vmatpush2.bf16.msra.mxu0 0
          %2227 = vmatprep.subr.bf16.mxu0 0
          %2228 = vmatpush2.bf16.msra.mxu0 0
          %2229 = vmatprep.subr.bf16.mxu0 0
          %2230 = vmatpush2.bf16.msra.mxu0 0
          %2231 = vmatprep.subr.bf16.mxu0 0
          %2232 = vmatpush2.bf16.msra.mxu0 0
          %2233 = vmatprep.subr.bf16.mxu0 0
          %2234 = vmatpush2.bf16.msra.mxu0 0
          %2235 = vmatprep.mubr.bf16.mxu0 0
          %2236 = vmatmul.mubr.bf16.gmra.mxu0 %v2198
          %v2237 = vpop.f32.mrf.mxu0
          %v2238 = vadd.f32 %v2196, %v2237
          %v2239 = vpop.f32.mrf.mxu0
          %v2240 = vpop.f32.mrf.mxu0
          %v2241 = vpop.f32.mrf.mxu0
          %2242 = vdwg.mxu0
          %2244 = vset.pattern.permute.xlu0 0
          %2245 = vperm.xlu0 %2244, %v2188
          %v2246 = vpop.permute.xlu0 %2245
          %v2248 = vmul.f32 %v2238, %v2246
          %v2249 = vadd.f32 %v2043, %v2248
          %2250 = vst.msk [vmem:[#allocation6] sm:$0xff] %vm593, %v2159
          %2251 = vst.msk [vmem:[#allocation6 + $0x8] sm:$0xff] %vm593, %v2249
        $region68: #{tpu_custom_call.1} parent=47 // pred_fallthru
          _
        %v2252 = vld [vmem:[#allocation6] sm:$0xff]
        %v2253 = vld [vmem:[#allocation6 + $0x8] sm:$0xff]
        %v2254 = vmul.f32 %v2252, 0.25
        %v2255 = vmul.f32 %v2253, 0.25
        %v2256 = vld [vmem:[%s472] sm:$0x1]
        %v2258 = vlaneseq
        %v2259 = vshrl.u32 %v2258, 7
        %v2260 = vsub.s32 0, %v2259
        %v2261 = vrot.slane %v2256, %v2260
        %v2263 = vadd.f32 %v2254, %v2261
        %v2264 = vadd.f32 %v2255, %v2261
        %v2265 = vmax.f32 %v2263, 0.0
        %v2266 = vmax.f32 %v2264, 0.0
        %v2267 = vld [vmem:[%s382] sm:$0xf]
        %v2268 = vld [vmem:[%s382 + $0x4] sm:$0xf]
        %v2269 = vld [vmem:[%s382 + $0x8] sm:$0xf]
        %v2270 = vld [vmem:[%s382 + $0xc] sm:$0xf]
        %v2271 = vpack.c.bf16 %v2266, %v2265
        %v2272 = vld [vmem:[%s391] sm:$0xf]
        %v2273 = vld [vmem:[%s391 + $0x4] sm:$0xf]
        %v2274 = vld [vmem:[%s391 + $0x8] sm:$0xf]
        %v2275 = vld [vmem:[%s391 + $0xc] sm:$0xf]
        %v2280 = vunpack.c.l.b16 %v2272
        %v2281 = vunpack.c.l.b16 %v2273
        %v2282 = vunpack.c.l.b16 %v2274
        %v2283 = vunpack.c.l.b16 %v2275
        %v2284 = vpack.c.b16 %v2281, %v2280
        %v2285 = vpack.c.b16 %v2283, %v2282
        %v2289 = vsel %vm593, %v2271, 0
        %2291 = vmatprep.subr.bf16.mxu0 0
        %2292 = vmatpush1.bf16.msra.mxu0 0
        %2293 = vmatprep.subr.bf16.mxu0 0
        %2294 = vmatpush1.bf16.msra.mxu0 0
        %2295 = vmatprep.subr.bf16.mxu0 0
        %2296 = vmatpush1.bf16.msra.mxu0 0
        %2297 = vmatprep.subr.bf16.mxu0 0
        %2298 = vmatpush1.bf16.msra.mxu0 0
        %2299 = vmatprep.subr.bf16.mxu0 0
        %2300 = vmatpush1.bf16.msra.mxu0 0
        %2301 = vmatprep.subr.bf16.mxu0 0
        %2302 = vmatpush1.bf16.msra.mxu0 0
        %2303 = vmatprep.subr.bf16.mxu0 0
        %2304 = vmatpush1.bf16.msra.mxu0 %v2285
        %2305 = vmatprep.subr.bf16.mxu0 0
        %2306 = vmatpush1.bf16.msra.mxu0 %v2284
        %2307 = vmatprep.subr.bf16.mxu0 0
        %2308 = vmatpush2.bf16.msra.mxu0 0
        %2309 = vmatprep.subr.bf16.mxu0 0
        %2310 = vmatpush2.bf16.msra.mxu0 0
        %2311 = vmatprep.subr.bf16.mxu0 0
        %2312 = vmatpush2.bf16.msra.mxu0 0
        %2313 = vmatprep.subr.bf16.mxu0 0
        %2314 = vmatpush2.bf16.msra.mxu0 0
        %2315 = vmatprep.subr.bf16.mxu0 0
        %2316 = vmatpush2.bf16.msra.mxu0 0
        %2317 = vmatprep.subr.bf16.mxu0 0
        %2318 = vmatpush2.bf16.msra.mxu0 0
        %2319 = vmatprep.subr.bf16.mxu0 0
        %2320 = vmatpush2.bf16.msra.mxu0 0
        %2321 = vmatprep.subr.bf16.mxu0 0
        %2322 = vmatpush2.bf16.msra.mxu0 0
        %2323 = vmatprep.mubr.bf16.mxu0 0
        %2324 = vmatmul.mubr.bf16.gmra.mxu0 %v2289
        %v2325 = vpop.f32.mrf.mxu0
        %v2326 = vadd.f32 0.0, %v2325
        %v2327 = vpop.f32.mrf.mxu0
        %v2328 = vpop.f32.mrf.mxu0
        %v2329 = vadd.f32 0.0, %v2328
        %v2330 = vpop.f32.mrf.mxu0
        %2331 = vdwg.mxu0
        %v2336 = vunpack.c.l.b16 %v2267
        %v2337 = vunpack.c.l.b16 %v2268
        %v2338 = vunpack.c.l.b16 %v2269
        %v2339 = vunpack.c.l.b16 %v2270
        %v2340 = vpack.c.b16 %v2337, %v2336
        %v2341 = vpack.c.b16 %v2339, %v2338
        %2344 = vmatprep.subr.bf16.mxu0 0
        %2345 = vmatpush1.bf16.msra.mxu0 0
        %2346 = vmatprep.subr.bf16.mxu0 0
        %2347 = vmatpush1.bf16.msra.mxu0 0
        %2348 = vmatprep.subr.bf16.mxu0 0
        %2349 = vmatpush1.bf16.msra.mxu0 0
        %2350 = vmatprep.subr.bf16.mxu0 0
        %2351 = vmatpush1.bf16.msra.mxu0 0
        %2352 = vmatprep.subr.bf16.mxu0 0
        %2353 = vmatpush1.bf16.msra.mxu0 0
        %2354 = vmatprep.subr.bf16.mxu0 0
        %2355 = vmatpush1.bf16.msra.mxu0 0
        %2356 = vmatprep.subr.bf16.mxu0 0
        %2357 = vmatpush1.bf16.msra.mxu0 %v2341
        %2358 = vmatprep.subr.bf16.mxu0 0
        %2359 = vmatpush1.bf16.msra.mxu0 %v2340
        %2360 = vmatprep.subr.bf16.mxu0 0
        %2361 = vmatpush2.bf16.msra.mxu0 0
        %2362 = vmatprep.subr.bf16.mxu0 0
        %2363 = vmatpush2.bf16.msra.mxu0 0
        %2364 = vmatprep.subr.bf16.mxu0 0
        %2365 = vmatpush2.bf16.msra.mxu0 0
        %2366 = vmatprep.subr.bf16.mxu0 0
        %2367 = vmatpush2.bf16.msra.mxu0 0
        %2368 = vmatprep.subr.bf16.mxu0 0
        %2369 = vmatpush2.bf16.msra.mxu0 0
        %2370 = vmatprep.subr.bf16.mxu0 0
        %2371 = vmatpush2.bf16.msra.mxu0 0
        %2372 = vmatprep.subr.bf16.mxu0 0
        %2373 = vmatpush2.bf16.msra.mxu0 0
        %2374 = vmatprep.subr.bf16.mxu0 0
        %2375 = vmatpush2.bf16.msra.mxu0 0
        %2376 = vmatprep.mubr.bf16.mxu0 0
        %2377 = vmatmul.mubr.bf16.gmra.mxu0 %v595
        %v2378 = vpop.f32.mrf.mxu0
        %v2379 = vadd.f32 %v2326, %v2378
        %v2380 = vpop.f32.mrf.mxu0
        %v2381 = vpop.f32.mrf.mxu0
        %v2382 = vadd.f32 %v2329, %v2381
        %v2383 = vpop.f32.mrf.mxu0
        %2384 = vdwg.mxu0
        %v2385 = vld [vmem:[%s475] sm:$0x1]
        %v2387 = vlaneseq
        %v2388 = vshrl.u32 %v2387, 7
        %v2389 = vsub.s32 0, %v2388
        %v2390 = vrot.slane %v2385, %v2389
        %v2392 = vadd.f32 %v2379, %v2390
        %v2393 = vadd.f32 %v2382, %v2390
        %v2394 = vadd.f32 %v566, %v2392
        %v2395 = vadd.f32 %v567, %v2393
        %2396 = vst.msk [vmem:[#allocation2] sm:$0xff] %vm593, %v2394
        %2397 = vst.msk [vmem:[#allocation2 + $0x8] sm:$0xff] %vm593, %v2395
        %p2398 = scmp.eq.s32.totalorder %s38, 3
        // Predicated region
        $region69: #{tpu_custom_call.1} parent=47 // pred_check
          %p2399 = pneg %p2398
        $region70: #{tpu_custom_call.1} parent=47 // pred_check_branch
          %2401 = sbr.rel (%p2399) target = $region72
        $region71: #{tpu_custom_call.1} parent=47 // pred_region
          %2402 = vxpose.xlu0.b32.start [1/16] %v2394, 128
          %2403 = vxpose.xlu0.b32.cont [2/16] 0.0, 128
          %2404 = vxpose.xlu0.b32.cont [3/16] 0.0, 128
          %2405 = vxpose.xlu0.b32.cont [4/16] 0.0, 128
          %2406 = vxpose.xlu0.b32.cont [5/16] 0.0, 128
          %2407 = vxpose.xlu0.b32.cont [6/16] 0.0, 128
          %2408 = vxpose.xlu0.b32.cont [7/16] 0.0, 128
          %2409 = vxpose.xlu0.b32.cont [8/16] 0.0, 128
          %2410 = vxpose.xlu0.b32.cont [9/16] 0.0, 128
          %2411 = vxpose.xlu0.b32.cont [10/16] 0.0, 128
          %2412 = vxpose.xlu0.b32.cont [11/16] 0.0, 128
          %2413 = vxpose.xlu0.b32.cont [12/16] 0.0, 128
          %2414 = vxpose.xlu0.b32.cont [13/16] 0.0, 128
          %2415 = vxpose.xlu0.b32.cont [14/16] 0.0, 128
          %2416 = vxpose.xlu0.b32.cont [15/16] 0.0, 128
          %2417 = vxpose.xlu0.b32.end [16/16] 0.0, 128
          %v2418 = vpop.trf.xlu0
          %v2419 = vpop.trf.xlu0
          %v2420 = vpop.trf.xlu0
          %v2421 = vpop.trf.xlu0
          %v2422 = vpop.trf.xlu0
          %v2423 = vpop.trf.xlu0
          %v2424 = vpop.trf.xlu0
          %v2425 = vpop.trf.xlu0
          %v2426 = vpop.trf.xlu0
          %v2427 = vpop.trf.xlu0
          %v2428 = vpop.trf.xlu0
          %v2429 = vpop.trf.xlu0
          %v2430 = vpop.trf.xlu0
          %v2431 = vpop.trf.xlu0
          %v2432 = vpop.trf.xlu0
          %v2433 = vpop.trf.xlu0
          %vm2434 = vcmask 64512
          %2435 = vst.msk [vmem:[%s480] sm:$0xff] %vm2434, %v2418
          %2436 = vst.msk [vmem:[%s480 + $0x8] sm:$0xff] %vm2434, %v2419
          %2437 = vst.msk [vmem:[%s480 + $0x10] sm:$0xff] %vm2434, %v2420
          %2438 = vst.msk [vmem:[%s480 + $0x18] sm:$0xff] %vm2434, %v2421
          %2439 = vxpose.xlu0.b32.start [1/16] %v2395, 128
          %2440 = vxpose.xlu0.b32.cont [2/16] 0.0, 128
          %2441 = vxpose.xlu0.b32.cont [3/16] 0.0, 128
          %2442 = vxpose.xlu0.b32.cont [4/16] 0.0, 128
          %2443 = vxpose.xlu0.b32.cont [5/16] 0.0, 128
          %2444 = vxpose.xlu0.b32.cont [6/16] 0.0, 128
          %2445 = vxpose.xlu0.b32.cont [7/16] 0.0, 128
          %2446 = vxpose.xlu0.b32.cont [8/16] 0.0, 128
          %2447 = vxpose.xlu0.b32.cont [9/16] 0.0, 128
          %2448 = vxpose.xlu0.b32.cont [10/16] 0.0, 128
          %2449 = vxpose.xlu0.b32.cont [11/16] 0.0, 128
          %2450 = vxpose.xlu0.b32.cont [12/16] 0.0, 128
          %2451 = vxpose.xlu0.b32.cont [13/16] 0.0, 128
          %2452 = vxpose.xlu0.b32.cont [14/16] 0.0, 128
          %2453 = vxpose.xlu0.b32.cont [15/16] 0.0, 128
          %2454 = vxpose.xlu0.b32.end [16/16] 0.0, 128
          %v2455 = vpop.trf.xlu0
          %v2456 = vpop.trf.xlu0
          %v2457 = vpop.trf.xlu0
          %v2458 = vpop.trf.xlu0
          %v2459 = vpop.trf.xlu0
          %v2460 = vpop.trf.xlu0
          %v2461 = vpop.trf.xlu0
          %v2462 = vpop.trf.xlu0
          %v2463 = vpop.trf.xlu0
          %v2464 = vpop.trf.xlu0
          %v2465 = vpop.trf.xlu0
          %v2466 = vpop.trf.xlu0
          %v2467 = vpop.trf.xlu0
          %v2468 = vpop.trf.xlu0
          %v2469 = vpop.trf.xlu0
          %v2470 = vpop.trf.xlu0
          %2471 = vst.msk [vmem:[%s485] sm:$0xff] %vm2434, %v2455
          %2472 = vst.msk [vmem:[%s485 + $0x8] sm:$0xff] %vm2434, %v2456
          %2473 = vst.msk [vmem:[%s485 + $0x10] sm:$0xff] %vm2434, %v2457
          %2474 = vst.msk [vmem:[%s485 + $0x18] sm:$0xff] %vm2434, %v2458
        $region72: #{tpu_custom_call.1} parent=47 // pred_fallthru
          _
        %p2475 = scmp.lt.s32.totalorder %s37, 1
        %s2476 = scalar_select %p2475, %s37, 1
        %s2477 = smul.addr %s2476, 4
        %s2478 = smul.addr %s2477, 8
        %s2479 = scalar_lea.vmem %s8, %s2478
        %p2480 = scmp.lt.s32.totalorder %s37, 1
        %s2481 = scalar_select %p2480, %s37, 1
        %s2482 = smul.addr %s2481, 4
        %s2483 = smul.addr %s2482, 8
        %s2484 = scalar_lea.vmem %s9, %s2483
        // Predicated region
        $region73: #{tpu_custom_call.1} parent=47 // pred_check
          %p2485 = pneg %p245
        $region74: #{tpu_custom_call.1} parent=47 // pred_check_branch
          %2487 = sbr.rel (%p2485) target = $region76
        $region75: #{tpu_custom_call.1} parent=47 // pred_region
          _
        $region76: #{tpu_custom_call.1} parent=47 // pred_fallthru
          _
        // Predicated region
        $region77: #{tpu_custom_call.1} parent=47 // pred_check
          %p2488 = pneg %p271
        $region78: #{tpu_custom_call.1} parent=47 // pred_check_branch
          %2490 = sbr.rel (%p2488) target = $region80
        $region79: #{tpu_custom_call.1} parent=47 // pred_region
          _
        $region80: #{tpu_custom_call.1} parent=47 // pred_fallthru
          _
      $region48: #{tpu_custom_call.1} parent=5 // pred_fallthru
        _
      %p2491 = scmp.le.s32.totalorder 2, %s28
      // Predicated region
      $region81: #{tpu_custom_call.1} parent=5 // pred_check
        %p2492 = pneg %p2491
      $region82: #{tpu_custom_call.1} parent=5 // pred_check_branch
        %2494 = sbr.rel (%p2492) target = $region84
      $region83: #{tpu_custom_call.1} parent=5 // pred_region
        %s2495 = ssub.s32 %s28, 2
        // Predicated region
        $region85: #{tpu_custom_call.1} parent=83 // pred_check
          %p2496 = pneg %p251
        $region86: #{tpu_custom_call.1} parent=83 // pred_check_branch
          %2498 = sbr.rel (%p2496) target = $region88
        $region87: #{tpu_custom_call.1} parent=83 // pred_region
          %p2499 = scmp.lt.s32.totalorder %s39, 1
          %s2500 = scalar_select %p2499, %s39, 1
          %s2501 = smul.addr %s2500, 4
          %s2502 = smul.addr %s2501, 8
          %s2503 = scalar_lea.vmem %s8, %s2502
        $region88: #{tpu_custom_call.1} parent=83 // pred_fallthru
          _
        // Predicated region
        $region89: #{tpu_custom_call.1} parent=83 // pred_check
          %p2504 = pneg %p277
        $region90: #{tpu_custom_call.1} parent=83 // pred_check_branch
          %2506 = sbr.rel (%p2504) target = $region92
        $region91: #{tpu_custom_call.1} parent=83 // pred_region
          %p2507 = scmp.lt.s32.totalorder %s39, 1
          %s2508 = scalar_select %p2507, %s39, 1
          %s2509 = smul.addr %s2508, 4
          %s2510 = smul.addr %s2509, 8
          %s2511 = scalar_lea.vmem %s9, %s2510
        $region92: #{tpu_custom_call.1} parent=83 // pred_fallthru
          _
      $region84: #{tpu_custom_call.1} parent=5 // pred_fallthru
        _
    $region6: #{tpu_custom_call.1} parent=1 // loop_footer
      %s32 = sadd.s32 1, %s28
    $region7: #{tpu_custom_call.1} parent=1 // loop_footer_branch
      %27 = sbr.rel target = $region3
    $region8: #{tpu_custom_call.1} parent=1 // loop_exit
      _
    %2512 = vsyncpa [#allocation10], 1
    %s2513 = scalar_lea.sflag [#allocation10], 1
    %2514 = vsyncpa %s2513, 1
    %2515 = vsyncpa [#allocation12], 1
    %s2516 = scalar_lea.sflag [#allocation12], 1
    %2517 = vsyncpa %s2516, 1

</llo_original>
